<compile_context>
chip_gen: v6e
topology: v6e:2x2x1
jax: 0.10.0
libtpu: 0.0.40
codegen_flags: <defaults>
</compile_context>

<pallas_src>
import math
from functools import partial

import jax
import jax.numpy as jnp
from jax.experimental import pallas as pl
from jax.experimental.pallas import tpu as pltpu


# ----------------------------- kernel helpers --------------------------------

def _layer_norm(x, g, b, eps=1e-5):
    mu = jnp.mean(x, axis=-1, keepdims=True)
    var = jnp.mean((x - mu) ** 2, axis=-1, keepdims=True)
    return (x - mu) * jax.lax.rsqrt(var + eps) * g + b


def _encoder_layer(x, wqkv, bqkv, wo, bo, g1, be1, w1, b1, w2, b2, g2, be2, *, nhead):
    # Post-norm TransformerEncoderLayer (PyTorch default, activation=relu):
    #   x = LN1(x + MHA(x)); x = LN2(x + FFN(x))
    S, D = x.shape
    dh = D // nhead
    scale = 1.0 / math.sqrt(dh)

    # fused QKV projection (weights pre-transposed to (D, 3D) in the wrapper)
    qkv = jnp.dot(x, wqkv, preferred_element_type=jnp.float32) + bqkv
    q = qkv[:, :D]
    k = qkv[:, D:2 * D]
    v = qkv[:, 2 * D:]

    # multi-head attention; output projection folded into the head loop so no
    # lane-axis concatenate is needed (attn accumulates full (S, D) tiles).
    attn = jnp.zeros((S, D), jnp.float32)
    for h in range(nhead):
        sl = slice(h * dh, (h + 1) * dh)
        qh, kh, vh = q[:, sl], k[:, sl], v[:, sl]
        s = jax.lax.dot_general(qh, kh, (((1,), (1,)), ((), ())),
                                preferred_element_type=jnp.float32) * scale
        s = s - jnp.max(s, axis=-1, keepdims=True)
        p = jnp.exp(s)
        p = p * pl.reciprocal(jnp.sum(p, axis=-1, keepdims=True), approx=True)
        ctx = jnp.dot(p, vh, preferred_element_type=jnp.float32)       # (S, dh)
        attn = attn + jnp.dot(ctx, wo[sl, :],                          # (S, D)
                              preferred_element_type=jnp.float32)
    attn = attn + bo

    h1 = _layer_norm(x + attn, g1, be1)

    ff = jnp.dot(h1, w1, preferred_element_type=jnp.float32) + b1
    ff = jnp.maximum(ff, 0.0)                                          # relu
    ff = jnp.dot(ff, w2, preferred_element_type=jnp.float32) + b2
    return _layer_norm(h1 + ff, g2, be2)


# ----------------------------- fused kernel ----------------------------------

def fused_forward_kernel(emb_ref, pe_ref,
                         wqkv_ref, bqkv_ref, wo_ref, bo_ref,
                         ln1g_ref, ln1b_ref, w1_ref, b1_ref,
                         w2_ref, b2_ref, ln2g_ref, ln2b_ref,
                         fcw_ref, fcb_ref,
                         o_ref, *, num_layers, nhead, d_model):
    # emb_ref: (1, S, D) embedded tokens for this batch element
    x = emb_ref[0] * jnp.float32(math.sqrt(d_model)) + pe_ref[...]     # (S, D)

    # static loop over encoder layers; weights are stacked on a leading axis
    # and indexed with a static Python int (stay VMEM-resident across layers).
    for l in range(num_layers):
        x = _encoder_layer(
            x,
            wqkv_ref[l], bqkv_ref[l], wo_ref[l], bo_ref[l],
            ln1g_ref[l], ln1b_ref[l],
            w1_ref[l], b1_ref[l], w2_ref[l], b2_ref[l],
            ln2g_ref[l], ln2b_ref[l],
            nhead=nhead)

    o_ref[0] = (jnp.dot(x, fcw_ref[...], preferred_element_type=jnp.float32)
                + fcb_ref[...])


# ----------------------------- wrapper ----------------------------------------

def _full_block_map(ndim):
    return lambda b: (0,) * ndim


def walk_transformer_forward(src, params, d_model, nhead, num_layers):
    # src: (B, S) int32 token ids
    B, S = src.shape
    D = d_model
    V = params["fc_w_t"].shape[1]

    emb = jnp.take(params["embedding"], src, axis=0)    # (B, S, D) gather = glue
    pe = params["pe"][:S]                               # (S, D)

    weights = [params["wqkv"], params["bqkv"], params["wo"], params["bo"],
               params["ln1_g"], params["ln1_b"], params["w1"], params["b1"],
               params["w2"], params["b2"], params["ln2_g"], params["ln2_b"],
               params["fc_w_t"], params["fc_b"]]

    in_specs = [pl.BlockSpec((1, S, D), lambda b: (b, 0, 0)),           # emb
                pl.BlockSpec((S, D), lambda b: (0, 0))]                 # pe
    in_specs += [pl.BlockSpec(w.shape, _full_block_map(w.ndim)) for w in weights]

    return pl.pallas_call(
        partial(fused_forward_kernel,
                num_layers=num_layers, nhead=nhead, d_model=d_model),
        out_shape=jax.ShapeDtypeStruct((B, S, V), jnp.float32),
        grid=(B,),
        in_specs=in_specs,
        out_specs=pl.BlockSpec((1, S, V), lambda b: (b, 0, 0)),
        compiler_params=pltpu.CompilerParams(
            dimension_semantics=("parallel",),          # shard batch over TCs (v7x)
            vmem_limit_bytes=64 * 1024 * 1024),
    )(emb, pe, *weights)


# ----------------------------- parameters ------------------------------------

def make_positional_encoding(max_len, d_model):
    position = jnp.arange(max_len, dtype=jnp.float32)[:, None]
    div_term = jnp.exp(jnp.arange(0, d_model, 2, dtype=jnp.float32)
                       * (-math.log(10000.0) / d_model))
    pe = jnp.zeros((max_len, d_model), dtype=jnp.float32)
    pe = pe.at[:, 0::2].set(jnp.sin(position * div_term))
    pe = pe.at[:, 1::2].set(jnp.cos(position * div_term))
    return pe


def init_params(key, vocab_size, d_model, nhead, num_layers, dim_feedforward,
                max_len=64):
    keys = iter(jax.random.split(key, 4 * num_layers + 2))

    def w(shape, scale=0.02):
        return (scale * jax.random.normal(next(keys), shape)).astype(jnp.float32)

    params = {
        "embedding": w((vocab_size, d_model)),
        "pe": make_positional_encoding(max_len, d_model),
    }

    layers = []
    for _ in range(num_layers):
        layers.append(dict(
            # weights stored pre-transposed so kernels compute x @ W directly
            wqkv=w((d_model, 3 * d_model)),
            bqkv=jnp.zeros((1, 3 * d_model), jnp.float32),
            wo=w((d_model, d_model)),
            bo=jnp.zeros((1, d_model), jnp.float32),
            ln1_g=jnp.ones((1, d_model), jnp.float32),
            ln1_b=jnp.zeros((1, d_model), jnp.float32),
            w1=w((d_model, dim_feedforward)),
            b1=jnp.zeros((1, dim_feedforward), jnp.float32),
            w2=w((dim_feedforward, d_model)),
            b2=jnp.zeros((1, d_model), jnp.float32),
            ln2_g=jnp.ones((1, d_model), jnp.float32),
            ln2_b=jnp.zeros((1, d_model), jnp.float32),
        ))
    for name in ["wqkv", "bqkv", "wo", "bo", "ln1_g", "ln1_b",
                 "w1", "b1", "w2", "b2", "ln2_g", "ln2_b"]:
        params[name] = jnp.stack([l[name] for l in layers], axis=0)

    params["fc_w_t"] = w((d_model, vocab_size))
    params["fc_b"] = jnp.zeros((1, vocab_size), jnp.float32)
    return params


# ----------------------------- main --------------------------------------------

if __name__ == "__main__":
    # lane-dense small config: d_model / vocab multiples of 128, ff = 256
    VOCAB = 128
    D_MODEL = 128
    NHEAD = 4
    NUM_LAYERS = 2
    DIM_FF = 256
    B, S = 2, 8

    key = jax.random.PRNGKey(0)
    k_param, k_tok = jax.random.split(key)
    params = init_params(k_param, VOCAB, D_MODEL, NHEAD, NUM_LAYERS, DIM_FF)
    src = jax.random.randint(k_tok, (B, S), 0, VOCAB, dtype=jnp.int32)

    logits = walk_transformer_forward(src, params, D_MODEL, NHEAD, NUM_LAYERS)
    jax.block_until_ready(logits)
    assert logits.shape == (B, S, VOCAB), logits.shape
    assert bool(jnp.all(jnp.isfinite(logits)))
    print("KERNEL_OK")
</pallas_src>

<mosaic_0001>
module attributes {stable_mosaic.version = 11 : i64} {
  func.func @fused_forward_kernel(%arg0: i32, %arg1: memref<1x8x128xf32, #tpu.memory_space<vmem>>, %arg2: memref<8x128xf32, #tpu.memory_space<vmem>>, %arg3: memref<2x128x384xf32, #tpu.memory_space<vmem>>, %arg4: memref<2x1x384xf32, #tpu.memory_space<vmem>>, %arg5: memref<2x128x128xf32, #tpu.memory_space<vmem>>, %arg6: memref<2x1x128xf32, #tpu.memory_space<vmem>>, %arg7: memref<2x1x128xf32, #tpu.memory_space<vmem>>, %arg8: memref<2x1x128xf32, #tpu.memory_space<vmem>>, %arg9: memref<2x128x256xf32, #tpu.memory_space<vmem>>, %arg10: memref<2x1x256xf32, #tpu.memory_space<vmem>>, %arg11: memref<2x256x128xf32, #tpu.memory_space<vmem>>, %arg12: memref<2x1x128xf32, #tpu.memory_space<vmem>>, %arg13: memref<2x1x128xf32, #tpu.memory_space<vmem>>, %arg14: memref<2x1x128xf32, #tpu.memory_space<vmem>>, %arg15: memref<128x128xf32, #tpu.memory_space<vmem>>, %arg16: memref<1x128xf32, #tpu.memory_space<vmem>>, %arg17: memref<1x8x128xf32, #tpu.memory_space<vmem>>) attributes {dimension_semantics = [#tpu.dimension_semantics<parallel>], iteration_bounds = array<i64: 2>, scalar_prefetch = 0 : i64, scratch_operands = 0 : i64, tpu.core_type = #tpu.core_type<tc>, window_params = [{transform_indices = @transform_0, window_bounds = array<i64: 1, 8, 128>}, {pipeline_mode = #tpu.pipeline_mode<synchronous>, transform_indices = @transform_1, window_bounds = array<i64: 8, 128>}, {pipeline_mode = #tpu.pipeline_mode<synchronous>, transform_indices = @transform_2, window_bounds = array<i64: 2, 128, 384>}, {pipeline_mode = #tpu.pipeline_mode<synchronous>, transform_indices = @transform_3, window_bounds = array<i64: 2, 1, 384>}, {pipeline_mode = #tpu.pipeline_mode<synchronous>, transform_indices = @transform_4, window_bounds = array<i64: 2, 128, 128>}, {pipeline_mode = #tpu.pipeline_mode<synchronous>, transform_indices = @transform_5, window_bounds = array<i64: 2, 1, 128>}, {pipeline_mode = #tpu.pipeline_mode<synchronous>, transform_indices = @transform_6, window_bounds = array<i64: 2, 1, 128>}, {pipeline_mode = #tpu.pipeline_mode<synchronous>, transform_indices = @transform_7, window_bounds = array<i64: 2, 1, 128>}, {pipeline_mode = #tpu.pipeline_mode<synchronous>, transform_indices = @transform_8, window_bounds = array<i64: 2, 128, 256>}, {pipeline_mode = #tpu.pipeline_mode<synchronous>, transform_indices = @transform_9, window_bounds = array<i64: 2, 1, 256>}, {pipeline_mode = #tpu.pipeline_mode<synchronous>, transform_indices = @transform_10, window_bounds = array<i64: 2, 256, 128>}, {pipeline_mode = #tpu.pipeline_mode<synchronous>, transform_indices = @transform_11, window_bounds = array<i64: 2, 1, 128>}, {pipeline_mode = #tpu.pipeline_mode<synchronous>, transform_indices = @transform_12, window_bounds = array<i64: 2, 1, 128>}, {pipeline_mode = #tpu.pipeline_mode<synchronous>, transform_indices = @transform_13, window_bounds = array<i64: 2, 1, 128>}, {pipeline_mode = #tpu.pipeline_mode<synchronous>, transform_indices = @transform_14, window_bounds = array<i64: 128, 128>}, {pipeline_mode = #tpu.pipeline_mode<synchronous>, transform_indices = @transform_15, window_bounds = array<i64: 1, 128>}, {transform_indices = @transform_16, window_bounds = array<i64: 1, 8, 128>}]} {
    %c0 = arith.constant 0 : index
    %c0_0 = arith.constant 0 : index
    %c0_1 = arith.constant 0 : index
    %0 = vector.load %arg1[%c0, %c0_0, %c0_1] : memref<1x8x128xf32, #tpu.memory_space<vmem>>, vector<1x8x128xf32>
    %1 = vector.shape_cast %0 : vector<1x8x128xf32> to vector<8x128xf32>
    %cst = arith.constant 11.3137083 : f32
    %2 = vector.broadcast %cst : f32 to vector<8x128xf32>
    %3 = arith.mulf %1, %2 : vector<8x128xf32>
    %c0_2 = arith.constant 0 : index
    %c0_3 = arith.constant 0 : index
    %4 = vector.load %arg2[%c0_2, %c0_3] : memref<8x128xf32, #tpu.memory_space<vmem>>, vector<8x128xf32>
    %5 = arith.addf %3, %4 : vector<8x128xf32>
    %c0_4 = arith.constant 0 : index
    %c0_5 = arith.constant 0 : index
    %c0_6 = arith.constant 0 : index
    %6 = vector.load %arg3[%c0_4, %c0_5, %c0_6] : memref<2x128x384xf32, #tpu.memory_space<vmem>>, vector<1x128x384xf32>
    %7 = vector.shape_cast %6 : vector<1x128x384xf32> to vector<128x384xf32>
    %c0_7 = arith.constant 0 : index
    %c0_8 = arith.constant 0 : index
    %c0_9 = arith.constant 0 : index
    %8 = vector.load %arg4[%c0_7, %c0_8, %c0_9] : memref<2x1x384xf32, #tpu.memory_space<vmem>>, vector<1x1x384xf32>
    %9 = vector.shape_cast %8 : vector<1x1x384xf32> to vector<1x384xf32>
    %c0_10 = arith.constant 0 : index
    %c0_11 = arith.constant 0 : index
    %c0_12 = arith.constant 0 : index
    %10 = vector.load %arg5[%c0_10, %c0_11, %c0_12] : memref<2x128x128xf32, #tpu.memory_space<vmem>>, vector<1x128x128xf32>
    %11 = vector.shape_cast %10 : vector<1x128x128xf32> to vector<128x128xf32>
    %c0_13 = arith.constant 0 : index
    %c0_14 = arith.constant 0 : index
    %c0_15 = arith.constant 0 : index
    %12 = vector.load %arg6[%c0_13, %c0_14, %c0_15] : memref<2x1x128xf32, #tpu.memory_space<vmem>>, vector<1x1x128xf32>
    %13 = vector.shape_cast %12 : vector<1x1x128xf32> to vector<1x128xf32>
    %c0_16 = arith.constant 0 : index
    %c0_17 = arith.constant 0 : index
    %c0_18 = arith.constant 0 : index
    %14 = vector.load %arg7[%c0_16, %c0_17, %c0_18] : memref<2x1x128xf32, #tpu.memory_space<vmem>>, vector<1x1x128xf32>
    %15 = vector.shape_cast %14 : vector<1x1x128xf32> to vector<1x128xf32>
    %c0_19 = arith.constant 0 : index
    %c0_20 = arith.constant 0 : index
    %c0_21 = arith.constant 0 : index
    %16 = vector.load %arg8[%c0_19, %c0_20, %c0_21] : memref<2x1x128xf32, #tpu.memory_space<vmem>>, vector<1x1x128xf32>
    %17 = vector.shape_cast %16 : vector<1x1x128xf32> to vector<1x128xf32>
    %c0_22 = arith.constant 0 : index
    %c0_23 = arith.constant 0 : index
    %c0_24 = arith.constant 0 : index
    %18 = vector.load %arg9[%c0_22, %c0_23, %c0_24] : memref<2x128x256xf32, #tpu.memory_space<vmem>>, vector<1x128x256xf32>
    %19 = vector.shape_cast %18 : vector<1x128x256xf32> to vector<128x256xf32>
    %c0_25 = arith.constant 0 : index
    %c0_26 = arith.constant 0 : index
    %c0_27 = arith.constant 0 : index
    %20 = vector.load %arg10[%c0_25, %c0_26, %c0_27] : memref<2x1x256xf32, #tpu.memory_space<vmem>>, vector<1x1x256xf32>
    %21 = vector.shape_cast %20 : vector<1x1x256xf32> to vector<1x256xf32>
    %c0_28 = arith.constant 0 : index
    %c0_29 = arith.constant 0 : index
    %c0_30 = arith.constant 0 : index
    %22 = vector.load %arg11[%c0_28, %c0_29, %c0_30] : memref<2x256x128xf32, #tpu.memory_space<vmem>>, vector<1x256x128xf32>
    %23 = vector.shape_cast %22 : vector<1x256x128xf32> to vector<256x128xf32>
    %c0_31 = arith.constant 0 : index
    %c0_32 = arith.constant 0 : index
    %c0_33 = arith.constant 0 : index
    %24 = vector.load %arg12[%c0_31, %c0_32, %c0_33] : memref<2x1x128xf32, #tpu.memory_space<vmem>>, vector<1x1x128xf32>
    %25 = vector.shape_cast %24 : vector<1x1x128xf32> to vector<1x128xf32>
    %c0_34 = arith.constant 0 : index
    %c0_35 = arith.constant 0 : index
    %c0_36 = arith.constant 0 : index
    %26 = vector.load %arg13[%c0_34, %c0_35, %c0_36] : memref<2x1x128xf32, #tpu.memory_space<vmem>>, vector<1x1x128xf32>
    %27 = vector.shape_cast %26 : vector<1x1x128xf32> to vector<1x128xf32>
    %c0_37 = arith.constant 0 : index
    %c0_38 = arith.constant 0 : index
    %c0_39 = arith.constant 0 : index
    %28 = vector.load %arg14[%c0_37, %c0_38, %c0_39] : memref<2x1x128xf32, #tpu.memory_space<vmem>>, vector<1x1x128xf32>
    %29 = vector.shape_cast %28 : vector<1x1x128xf32> to vector<1x128xf32>
    %cst_40 = arith.constant dense<0.000000e+00> : vector<8x384xf32>
    %30 = tpu.matmul %5, %7, %cst_40 {dimension_numbers = #tpu.dot_dimension_numbers<[1], [0], [0], [1], [0, 0, 1, 1], [], []>} : vector<8x128xf32>, vector<128x384xf32>, vector<8x384xf32> -> vector<8x384xf32>
    %31 = vector.broadcast %9 : vector<1x384xf32> to vector<8x384xf32>
    %32 = arith.addf %30, %31 : vector<8x384xf32>
    %33 = vector.extract_strided_slice %32 {offsets = [0, 0], sizes = [8, 128], strides = [1, 1]} : vector<8x384xf32> to vector<8x128xf32>
    %34 = vector.extract_strided_slice %32 {offsets = [0, 128], sizes = [8, 128], strides = [1, 1]} : vector<8x384xf32> to vector<8x128xf32>
    %35 = vector.extract_strided_slice %32 {offsets = [0, 256], sizes = [8, 128], strides = [1, 1]} : vector<8x384xf32> to vector<8x128xf32>
    %cst_41 = arith.constant 0.000000e+00 : f32
    %36 = vector.broadcast %cst_41 : f32 to vector<8x128xf32>
    %37 = vector.extract_strided_slice %33 {offsets = [0, 0], sizes = [8, 32], strides = [1, 1]} : vector<8x128xf32> to vector<8x32xf32>
    %38 = vector.extract_strided_slice %34 {offsets = [0, 0], sizes = [8, 32], strides = [1, 1]} : vector<8x128xf32> to vector<8x32xf32>
    %39 = vector.extract_strided_slice %35 {offsets = [0, 0], sizes = [8, 32], strides = [1, 1]} : vector<8x128xf32> to vector<8x32xf32>
    %cst_42 = arith.constant dense<0.000000e+00> : vector<8x8xf32>
    %40 = tpu.matmul %37, %38, %cst_42 {dimension_numbers = #tpu.dot_dimension_numbers<[1], [1], [0], [0], [0, 0, 1, 0], [], []>} : vector<8x32xf32>, vector<8x32xf32>, vector<8x8xf32> -> vector<8x8xf32>
    %cst_43 = arith.constant 0.176776692 : f32
    %41 = vector.broadcast %cst_43 : f32 to vector<8x8xf32>
    %42 = arith.mulf %40, %41 : vector<8x8xf32>
    %cst_44 = arith.constant dense<0xFF800000> : vector<8xf32>
    %43 = vector.multi_reduction <maximumf>, %42, %cst_44 [1] : vector<8x8xf32> to vector<8xf32>
    %44 = vector.shape_cast %43 : vector<8xf32> to vector<8x1xf32>
    %45 = vector.broadcast %44 : vector<8x1xf32> to vector<8x8xf32>
    %46 = arith.subf %42, %45 : vector<8x8xf32>
    %47 = math.exp %46 : vector<8x8xf32>
    %cst_45 = arith.constant dense<0.000000e+00> : vector<8xf32>
    %48 = vector.multi_reduction <add>, %47, %cst_45 [1] : vector<8x8xf32> to vector<8xf32>
    %49 = vector.shape_cast %48 : vector<8xf32> to vector<8x1xf32>
    %50 = tpu.reciprocal %49 {approx = true} : vector<8x1xf32> -> vector<8x1xf32>
    %51 = vector.broadcast %50 : vector<8x1xf32> to vector<8x8xf32>
    %52 = arith.mulf %47, %51 : vector<8x8xf32>
    %cst_46 = arith.constant dense<0.000000e+00> : vector<8x32xf32>
    %53 = tpu.matmul %52, %39, %cst_46 {dimension_numbers = #tpu.dot_dimension_numbers<[1], [0], [0], [1], [0, 0, 1, 1], [], []>} : vector<8x8xf32>, vector<8x32xf32>, vector<8x32xf32> -> vector<8x32xf32>
    %54 = vector.extract_strided_slice %11 {offsets = [0, 0], sizes = [32, 128], strides = [1, 1]} : vector<128x128xf32> to vector<32x128xf32>
    %cst_47 = arith.constant dense<0.000000e+00> : vector<8x128xf32>
    %55 = tpu.matmul %53, %54, %cst_47 {dimension_numbers = #tpu.dot_dimension_numbers<[1], [0], [0], [1], [0, 0, 1, 1], [], []>} : vector<8x32xf32>, vector<32x128xf32>, vector<8x128xf32> -> vector<8x128xf32>
    %56 = arith.addf %36, %55 : vector<8x128xf32>
    %57 = vector.extract_strided_slice %33 {offsets = [0, 32], sizes = [8, 32], strides = [1, 1]} : vector<8x128xf32> to vector<8x32xf32>
    %58 = vector.extract_strided_slice %34 {offsets = [0, 32], sizes = [8, 32], strides = [1, 1]} : vector<8x128xf32> to vector<8x32xf32>
    %59 = vector.extract_strided_slice %35 {offsets = [0, 32], sizes = [8, 32], strides = [1, 1]} : vector<8x128xf32> to vector<8x32xf32>
    %cst_48 = arith.constant dense<0.000000e+00> : vector<8x8xf32>
    %60 = tpu.matmul %57, %58, %cst_48 {dimension_numbers = #tpu.dot_dimension_numbers<[1], [1], [0], [0], [0, 0, 1, 0], [], []>} : vector<8x32xf32>, vector<8x32xf32>, vector<8x8xf32> -> vector<8x8xf32>
    %cst_49 = arith.constant 0.176776692 : f32
    %61 = vector.broadcast %cst_49 : f32 to vector<8x8xf32>
    %62 = arith.mulf %60, %61 : vector<8x8xf32>
    %cst_50 = arith.constant dense<0xFF800000> : vector<8xf32>
    %63 = vector.multi_reduction <maximumf>, %62, %cst_50 [1] : vector<8x8xf32> to vector<8xf32>
    %64 = vector.shape_cast %63 : vector<8xf32> to vector<8x1xf32>
    %65 = vector.broadcast %64 : vector<8x1xf32> to vector<8x8xf32>
    %66 = arith.subf %62, %65 : vector<8x8xf32>
    %67 = math.exp %66 : vector<8x8xf32>
    %cst_51 = arith.constant dense<0.000000e+00> : vector<8xf32>
    %68 = vector.multi_reduction <add>, %67, %cst_51 [1] : vector<8x8xf32> to vector<8xf32>
    %69 = vector.shape_cast %68 : vector<8xf32> to vector<8x1xf32>
    %70 = tpu.reciprocal %69 {approx = true} : vector<8x1xf32> -> vector<8x1xf32>
    %71 = vector.broadcast %70 : vector<8x1xf32> to vector<8x8xf32>
    %72 = arith.mulf %67, %71 : vector<8x8xf32>
    %cst_52 = arith.constant dense<0.000000e+00> : vector<8x32xf32>
    %73 = tpu.matmul %72, %59, %cst_52 {dimension_numbers = #tpu.dot_dimension_numbers<[1], [0], [0], [1], [0, 0, 1, 1], [], []>} : vector<8x8xf32>, vector<8x32xf32>, vector<8x32xf32> -> vector<8x32xf32>
    %74 = vector.extract_strided_slice %11 {offsets = [32, 0], sizes = [32, 128], strides = [1, 1]} : vector<128x128xf32> to vector<32x128xf32>
    %cst_53 = arith.constant dense<0.000000e+00> : vector<8x128xf32>
    %75 = tpu.matmul %73, %74, %cst_53 {dimension_numbers = #tpu.dot_dimension_numbers<[1], [0], [0], [1], [0, 0, 1, 1], [], []>} : vector<8x32xf32>, vector<32x128xf32>, vector<8x128xf32> -> vector<8x128xf32>
    %76 = arith.addf %56, %75 : vector<8x128xf32>
    %77 = vector.extract_strided_slice %33 {offsets = [0, 64], sizes = [8, 32], strides = [1, 1]} : vector<8x128xf32> to vector<8x32xf32>
    %78 = vector.extract_strided_slice %34 {offsets = [0, 64], sizes = [8, 32], strides = [1, 1]} : vector<8x128xf32> to vector<8x32xf32>
    %79 = vector.extract_strided_slice %35 {offsets = [0, 64], sizes = [8, 32], strides = [1, 1]} : vector<8x128xf32> to vector<8x32xf32>
    %cst_54 = arith.constant dense<0.000000e+00> : vector<8x8xf32>
    %80 = tpu.matmul %77, %78, %cst_54 {dimension_numbers = #tpu.dot_dimension_numbers<[1], [1], [0], [0], [0, 0, 1, 0], [], []>} : vector<8x32xf32>, vector<8x32xf32>, vector<8x8xf32> -> vector<8x8xf32>
    %cst_55 = arith.constant 0.176776692 : f32
    %81 = vector.broadcast %cst_55 : f32 to vector<8x8xf32>
    %82 = arith.mulf %80, %81 : vector<8x8xf32>
    %cst_56 = arith.constant dense<0xFF800000> : vector<8xf32>
    %83 = vector.multi_reduction <maximumf>, %82, %cst_56 [1] : vector<8x8xf32> to vector<8xf32>
    %84 = vector.shape_cast %83 : vector<8xf32> to vector<8x1xf32>
    %85 = vector.broadcast %84 : vector<8x1xf32> to vector<8x8xf32>
    %86 = arith.subf %82, %85 : vector<8x8xf32>
    %87 = math.exp %86 : vector<8x8xf32>
    %cst_57 = arith.constant dense<0.000000e+00> : vector<8xf32>
    %88 = vector.multi_reduction <add>, %87, %cst_57 [1] : vector<8x8xf32> to vector<8xf32>
    %89 = vector.shape_cast %88 : vector<8xf32> to vector<8x1xf32>
    %90 = tpu.reciprocal %89 {approx = true} : vector<8x1xf32> -> vector<8x1xf32>
    %91 = vector.broadcast %90 : vector<8x1xf32> to vector<8x8xf32>
    %92 = arith.mulf %87, %91 : vector<8x8xf32>
    %cst_58 = arith.constant dense<0.000000e+00> : vector<8x32xf32>
    %93 = tpu.matmul %92, %79, %cst_58 {dimension_numbers = #tpu.dot_dimension_numbers<[1], [0], [0], [1], [0, 0, 1, 1], [], []>} : vector<8x8xf32>, vector<8x32xf32>, vector<8x32xf32> -> vector<8x32xf32>
    %94 = vector.extract_strided_slice %11 {offsets = [64, 0], sizes = [32, 128], strides = [1, 1]} : vector<128x128xf32> to vector<32x128xf32>
    %cst_59 = arith.constant dense<0.000000e+00> : vector<8x128xf32>
    %95 = tpu.matmul %93, %94, %cst_59 {dimension_numbers = #tpu.dot_dimension_numbers<[1], [0], [0], [1], [0, 0, 1, 1], [], []>} : vector<8x32xf32>, vector<32x128xf32>, vector<8x128xf32> -> vector<8x128xf32>
    %96 = arith.addf %76, %95 : vector<8x128xf32>
    %97 = vector.extract_strided_slice %33 {offsets = [0, 96], sizes = [8, 32], strides = [1, 1]} : vector<8x128xf32> to vector<8x32xf32>
    %98 = vector.extract_strided_slice %34 {offsets = [0, 96], sizes = [8, 32], strides = [1, 1]} : vector<8x128xf32> to vector<8x32xf32>
    %99 = vector.extract_strided_slice %35 {offsets = [0, 96], sizes = [8, 32], strides = [1, 1]} : vector<8x128xf32> to vector<8x32xf32>
    %cst_60 = arith.constant dense<0.000000e+00> : vector<8x8xf32>
    %100 = tpu.matmul %97, %98, %cst_60 {dimension_numbers = #tpu.dot_dimension_numbers<[1], [1], [0], [0], [0, 0, 1, 0], [], []>} : vector<8x32xf32>, vector<8x32xf32>, vector<8x8xf32> -> vector<8x8xf32>
    %cst_61 = arith.constant 0.176776692 : f32
    %101 = vector.broadcast %cst_61 : f32 to vector<8x8xf32>
    %102 = arith.mulf %100, %101 : vector<8x8xf32>
    %cst_62 = arith.constant dense<0xFF800000> : vector<8xf32>
    %103 = vector.multi_reduction <maximumf>, %102, %cst_62 [1] : vector<8x8xf32> to vector<8xf32>
    %104 = vector.shape_cast %103 : vector<8xf32> to vector<8x1xf32>
    %105 = vector.broadcast %104 : vector<8x1xf32> to vector<8x8xf32>
    %106 = arith.subf %102, %105 : vector<8x8xf32>
    %107 = math.exp %106 : vector<8x8xf32>
    %cst_63 = arith.constant dense<0.000000e+00> : vector<8xf32>
    %108 = vector.multi_reduction <add>, %107, %cst_63 [1] : vector<8x8xf32> to vector<8xf32>
    %109 = vector.shape_cast %108 : vector<8xf32> to vector<8x1xf32>
    %110 = tpu.reciprocal %109 {approx = true} : vector<8x1xf32> -> vector<8x1xf32>
    %111 = vector.broadcast %110 : vector<8x1xf32> to vector<8x8xf32>
    %112 = arith.mulf %107, %111 : vector<8x8xf32>
    %cst_64 = arith.constant dense<0.000000e+00> : vector<8x32xf32>
    %113 = tpu.matmul %112, %99, %cst_64 {dimension_numbers = #tpu.dot_dimension_numbers<[1], [0], [0], [1], [0, 0, 1, 1], [], []>} : vector<8x8xf32>, vector<8x32xf32>, vector<8x32xf32> -> vector<8x32xf32>
    %114 = vector.extract_strided_slice %11 {offsets = [96, 0], sizes = [32, 128], strides = [1, 1]} : vector<128x128xf32> to vector<32x128xf32>
    %cst_65 = arith.constant dense<0.000000e+00> : vector<8x128xf32>
    %115 = tpu.matmul %113, %114, %cst_65 {dimension_numbers = #tpu.dot_dimension_numbers<[1], [0], [0], [1], [0, 0, 1, 1], [], []>} : vector<8x32xf32>, vector<32x128xf32>, vector<8x128xf32> -> vector<8x128xf32>
    %116 = arith.addf %96, %115 : vector<8x128xf32>
    %117 = vector.broadcast %13 : vector<1x128xf32> to vector<8x128xf32>
    %118 = arith.addf %116, %117 : vector<8x128xf32>
    %119 = arith.addf %5, %118 : vector<8x128xf32>
    %cst_66 = arith.constant dense<0.000000e+00> : vector<8xf32>
    %120 = vector.multi_reduction <add>, %119, %cst_66 [1] : vector<8x128xf32> to vector<8xf32>
    %121 = vector.shape_cast %120 : vector<8xf32> to vector<8x1xf32>
    %cst_67 = arith.constant 1.280000e+02 : f32
    %122 = vector.broadcast %cst_67 : f32 to vector<8x1xf32>
    %123 = arith.divf %121, %122 : vector<8x1xf32>
    %124 = vector.broadcast %123 : vector<8x1xf32> to vector<8x128xf32>
    %125 = arith.subf %119, %124 : vector<8x128xf32>
    %126 = arith.mulf %125, %125 : vector<8x128xf32>
    %cst_68 = arith.constant dense<0.000000e+00> : vector<8xf32>
    %127 = vector.multi_reduction <add>, %126, %cst_68 [1] : vector<8x128xf32> to vector<8xf32>
    %128 = vector.shape_cast %127 : vector<8xf32> to vector<8x1xf32>
    %cst_69 = arith.constant 1.280000e+02 : f32
    %129 = vector.broadcast %cst_69 : f32 to vector<8x1xf32>
    %130 = arith.divf %128, %129 : vector<8x1xf32>
    %131 = vector.broadcast %123 : vector<8x1xf32> to vector<8x128xf32>
    %132 = arith.subf %119, %131 : vector<8x128xf32>
    %cst_70 = arith.constant 9.99999974E-6 : f32
    %133 = vector.broadcast %cst_70 : f32 to vector<8x1xf32>
    %134 = arith.addf %130, %133 : vector<8x1xf32>
    %135 = math.rsqrt %134 : vector<8x1xf32>
    %136 = vector.broadcast %135 : vector<8x1xf32> to vector<8x128xf32>
    %137 = arith.mulf %132, %136 : vector<8x128xf32>
    %138 = vector.broadcast %15 : vector<1x128xf32> to vector<8x128xf32>
    %139 = arith.mulf %137, %138 : vector<8x128xf32>
    %140 = vector.broadcast %17 : vector<1x128xf32> to vector<8x128xf32>
    %141 = arith.addf %139, %140 : vector<8x128xf32>
    %cst_71 = arith.constant dense<0.000000e+00> : vector<8x256xf32>
    %142 = tpu.matmul %141, %19, %cst_71 {dimension_numbers = #tpu.dot_dimension_numbers<[1], [0], [0], [1], [0, 0, 1, 1], [], []>} : vector<8x128xf32>, vector<128x256xf32>, vector<8x256xf32> -> vector<8x256xf32>
    %143 = vector.broadcast %21 : vector<1x256xf32> to vector<8x256xf32>
    %144 = arith.addf %142, %143 : vector<8x256xf32>
    %cst_72 = arith.constant 0.000000e+00 : f32
    %145 = vector.broadcast %cst_72 : f32 to vector<8x256xf32>
    %146 = arith.maximumf %144, %145 : vector<8x256xf32>
    %cst_73 = arith.constant dense<0.000000e+00> : vector<8x128xf32>
    %147 = tpu.matmul %146, %23, %cst_73 {dimension_numbers = #tpu.dot_dimension_numbers<[1], [0], [0], [1], [0, 0, 1, 1], [], []>} : vector<8x256xf32>, vector<256x128xf32>, vector<8x128xf32> -> vector<8x128xf32>
    %148 = vector.broadcast %25 : vector<1x128xf32> to vector<8x128xf32>
    %149 = arith.addf %147, %148 : vector<8x128xf32>
    %150 = arith.addf %141, %149 : vector<8x128xf32>
    %cst_74 = arith.constant dense<0.000000e+00> : vector<8xf32>
    %151 = vector.multi_reduction <add>, %150, %cst_74 [1] : vector<8x128xf32> to vector<8xf32>
    %152 = vector.shape_cast %151 : vector<8xf32> to vector<8x1xf32>
    %cst_75 = arith.constant 1.280000e+02 : f32
    %153 = vector.broadcast %cst_75 : f32 to vector<8x1xf32>
    %154 = arith.divf %152, %153 : vector<8x1xf32>
    %155 = vector.broadcast %154 : vector<8x1xf32> to vector<8x128xf32>
    %156 = arith.subf %150, %155 : vector<8x128xf32>
    %157 = arith.mulf %156, %156 : vector<8x128xf32>
    %cst_76 = arith.constant dense<0.000000e+00> : vector<8xf32>
    %158 = vector.multi_reduction <add>, %157, %cst_76 [1] : vector<8x128xf32> to vector<8xf32>
    %159 = vector.shape_cast %158 : vector<8xf32> to vector<8x1xf32>
    %cst_77 = arith.constant 1.280000e+02 : f32
    %160 = vector.broadcast %cst_77 : f32 to vector<8x1xf32>
    %161 = arith.divf %159, %160 : vector<8x1xf32>
    %162 = vector.broadcast %154 : vector<8x1xf32> to vector<8x128xf32>
    %163 = arith.subf %150, %162 : vector<8x128xf32>
    %cst_78 = arith.constant 9.99999974E-6 : f32
    %164 = vector.broadcast %cst_78 : f32 to vector<8x1xf32>
    %165 = arith.addf %161, %164 : vector<8x1xf32>
    %166 = math.rsqrt %165 : vector<8x1xf32>
    %167 = vector.broadcast %166 : vector<8x1xf32> to vector<8x128xf32>
    %168 = arith.mulf %163, %167 : vector<8x128xf32>
    %169 = vector.broadcast %27 : vector<1x128xf32> to vector<8x128xf32>
    %170 = arith.mulf %168, %169 : vector<8x128xf32>
    %171 = vector.broadcast %29 : vector<1x128xf32> to vector<8x128xf32>
    %172 = arith.addf %170, %171 : vector<8x128xf32>
    %c1 = arith.constant 1 : index
    %c0_79 = arith.constant 0 : index
    %c0_80 = arith.constant 0 : index
    %173 = vector.load %arg3[%c1, %c0_79, %c0_80] : memref<2x128x384xf32, #tpu.memory_space<vmem>>, vector<1x128x384xf32>
    %174 = vector.shape_cast %173 : vector<1x128x384xf32> to vector<128x384xf32>
    %c1_81 = arith.constant 1 : index
    %c0_82 = arith.constant 0 : index
    %c0_83 = arith.constant 0 : index
    %175 = vector.load %arg4[%c1_81, %c0_82, %c0_83] : memref<2x1x384xf32, #tpu.memory_space<vmem>>, vector<1x1x384xf32>
    %176 = vector.shape_cast %175 : vector<1x1x384xf32> to vector<1x384xf32>
    %c1_84 = arith.constant 1 : index
    %c0_85 = arith.constant 0 : index
    %c0_86 = arith.constant 0 : index
    %177 = vector.load %arg5[%c1_84, %c0_85, %c0_86] : memref<2x128x128xf32, #tpu.memory_space<vmem>>, vector<1x128x128xf32>
    %178 = vector.shape_cast %177 : vector<1x128x128xf32> to vector<128x128xf32>
    %c1_87 = arith.constant 1 : index
    %c0_88 = arith.constant 0 : index
    %c0_89 = arith.constant 0 : index
    %179 = vector.load %arg6[%c1_87, %c0_88, %c0_89] : memref<2x1x128xf32, #tpu.memory_space<vmem>>, vector<1x1x128xf32>
    %180 = vector.shape_cast %179 : vector<1x1x128xf32> to vector<1x128xf32>
    %c1_90 = arith.constant 1 : index
    %c0_91 = arith.constant 0 : index
    %c0_92 = arith.constant 0 : index
    %181 = vector.load %arg7[%c1_90, %c0_91, %c0_92] : memref<2x1x128xf32, #tpu.memory_space<vmem>>, vector<1x1x128xf32>
    %182 = vector.shape_cast %181 : vector<1x1x128xf32> to vector<1x128xf32>
    %c1_93 = arith.constant 1 : index
    %c0_94 = arith.constant 0 : index
    %c0_95 = arith.constant 0 : index
    %183 = vector.load %arg8[%c1_93, %c0_94, %c0_95] : memref<2x1x128xf32, #tpu.memory_space<vmem>>, vector<1x1x128xf32>
    %184 = vector.shape_cast %183 : vector<1x1x128xf32> to vector<1x128xf32>
    %c1_96 = arith.constant 1 : index
    %c0_97 = arith.constant 0 : index
    %c0_98 = arith.constant 0 : index
    %185 = vector.load %arg9[%c1_96, %c0_97, %c0_98] : memref<2x128x256xf32, #tpu.memory_space<vmem>>, vector<1x128x256xf32>
    %186 = vector.shape_cast %185 : vector<1x128x256xf32> to vector<128x256xf32>
    %c1_99 = arith.constant 1 : index
    %c0_100 = arith.constant 0 : index
    %c0_101 = arith.constant 0 : index
    %187 = vector.load %arg10[%c1_99, %c0_100, %c0_101] : memref<2x1x256xf32, #tpu.memory_space<vmem>>, vector<1x1x256xf32>
    %188 = vector.shape_cast %187 : vector<1x1x256xf32> to vector<1x256xf32>
    %c1_102 = arith.constant 1 : index
    %c0_103 = arith.constant 0 : index
    %c0_104 = arith.constant 0 : index
    %189 = vector.load %arg11[%c1_102, %c0_103, %c0_104] : memref<2x256x128xf32, #tpu.memory_space<vmem>>, vector<1x256x128xf32>
    %190 = vector.shape_cast %189 : vector<1x256x128xf32> to vector<256x128xf32>
    %c1_105 = arith.constant 1 : index
    %c0_106 = arith.constant 0 : index
    %c0_107 = arith.constant 0 : index
    %191 = vector.load %arg12[%c1_105, %c0_106, %c0_107] : memref<2x1x128xf32, #tpu.memory_space<vmem>>, vector<1x1x128xf32>
    %192 = vector.shape_cast %191 : vector<1x1x128xf32> to vector<1x128xf32>
    %c1_108 = arith.constant 1 : index
    %c0_109 = arith.constant 0 : index
    %c0_110 = arith.constant 0 : index
    %193 = vector.load %arg13[%c1_108, %c0_109, %c0_110] : memref<2x1x128xf32, #tpu.memory_space<vmem>>, vector<1x1x128xf32>
    %194 = vector.shape_cast %193 : vector<1x1x128xf32> to vector<1x128xf32>
    %c1_111 = arith.constant 1 : index
    %c0_112 = arith.constant 0 : index
    %c0_113 = arith.constant 0 : index
    %195 = vector.load %arg14[%c1_111, %c0_112, %c0_113] : memref<2x1x128xf32, #tpu.memory_space<vmem>>, vector<1x1x128xf32>
    %196 = vector.shape_cast %195 : vector<1x1x128xf32> to vector<1x128xf32>
    %cst_114 = arith.constant dense<0.000000e+00> : vector<8x384xf32>
    %197 = tpu.matmul %172, %174, %cst_114 {dimension_numbers = #tpu.dot_dimension_numbers<[1], [0], [0], [1], [0, 0, 1, 1], [], []>} : vector<8x128xf32>, vector<128x384xf32>, vector<8x384xf32> -> vector<8x384xf32>
    %198 = vector.broadcast %176 : vector<1x384xf32> to vector<8x384xf32>
    %199 = arith.addf %197, %198 : vector<8x384xf32>
    %200 = vector.extract_strided_slice %199 {offsets = [0, 0], sizes = [8, 128], strides = [1, 1]} : vector<8x384xf32> to vector<8x128xf32>
    %201 = vector.extract_strided_slice %199 {offsets = [0, 128], sizes = [8, 128], strides = [1, 1]} : vector<8x384xf32> to vector<8x128xf32>
    %202 = vector.extract_strided_slice %199 {offsets = [0, 256], sizes = [8, 128], strides = [1, 1]} : vector<8x384xf32> to vector<8x128xf32>
    %cst_115 = arith.constant 0.000000e+00 : f32
    %203 = vector.broadcast %cst_115 : f32 to vector<8x128xf32>
    %204 = vector.extract_strided_slice %200 {offsets = [0, 0], sizes = [8, 32], strides = [1, 1]} : vector<8x128xf32> to vector<8x32xf32>
    %205 = vector.extract_strided_slice %201 {offsets = [0, 0], sizes = [8, 32], strides = [1, 1]} : vector<8x128xf32> to vector<8x32xf32>
    %206 = vector.extract_strided_slice %202 {offsets = [0, 0], sizes = [8, 32], strides = [1, 1]} : vector<8x128xf32> to vector<8x32xf32>
    %cst_116 = arith.constant dense<0.000000e+00> : vector<8x8xf32>
    %207 = tpu.matmul %204, %205, %cst_116 {dimension_numbers = #tpu.dot_dimension_numbers<[1], [1], [0], [0], [0, 0, 1, 0], [], []>} : vector<8x32xf32>, vector<8x32xf32>, vector<8x8xf32> -> vector<8x8xf32>
    %cst_117 = arith.constant 0.176776692 : f32
    %208 = vector.broadcast %cst_117 : f32 to vector<8x8xf32>
    %209 = arith.mulf %207, %208 : vector<8x8xf32>
    %cst_118 = arith.constant dense<0xFF800000> : vector<8xf32>
    %210 = vector.multi_reduction <maximumf>, %209, %cst_118 [1] : vector<8x8xf32> to vector<8xf32>
    %211 = vector.shape_cast %210 : vector<8xf32> to vector<8x1xf32>
    %212 = vector.broadcast %211 : vector<8x1xf32> to vector<8x8xf32>
    %213 = arith.subf %209, %212 : vector<8x8xf32>
    %214 = math.exp %213 : vector<8x8xf32>
    %cst_119 = arith.constant dense<0.000000e+00> : vector<8xf32>
    %215 = vector.multi_reduction <add>, %214, %cst_119 [1] : vector<8x8xf32> to vector<8xf32>
    %216 = vector.shape_cast %215 : vector<8xf32> to vector<8x1xf32>
    %217 = tpu.reciprocal %216 {approx = true} : vector<8x1xf32> -> vector<8x1xf32>
    %218 = vector.broadcast %217 : vector<8x1xf32> to vector<8x8xf32>
    %219 = arith.mulf %214, %218 : vector<8x8xf32>
    %cst_120 = arith.constant dense<0.000000e+00> : vector<8x32xf32>
    %220 = tpu.matmul %219, %206, %cst_120 {dimension_numbers = #tpu.dot_dimension_numbers<[1], [0], [0], [1], [0, 0, 1, 1], [], []>} : vector<8x8xf32>, vector<8x32xf32>, vector<8x32xf32> -> vector<8x32xf32>
    %221 = vector.extract_strided_slice %178 {offsets = [0, 0], sizes = [32, 128], strides = [1, 1]} : vector<128x128xf32> to vector<32x128xf32>
    %cst_121 = arith.constant dense<0.000000e+00> : vector<8x128xf32>
    %222 = tpu.matmul %220, %221, %cst_121 {dimension_numbers = #tpu.dot_dimension_numbers<[1], [0], [0], [1], [0, 0, 1, 1], [], []>} : vector<8x32xf32>, vector<32x128xf32>, vector<8x128xf32> -> vector<8x128xf32>
    %223 = arith.addf %203, %222 : vector<8x128xf32>
    %224 = vector.extract_strided_slice %200 {offsets = [0, 32], sizes = [8, 32], strides = [1, 1]} : vector<8x128xf32> to vector<8x32xf32>
    %225 = vector.extract_strided_slice %201 {offsets = [0, 32], sizes = [8, 32], strides = [1, 1]} : vector<8x128xf32> to vector<8x32xf32>
    %226 = vector.extract_strided_slice %202 {offsets = [0, 32], sizes = [8, 32], strides = [1, 1]} : vector<8x128xf32> to vector<8x32xf32>
    %cst_122 = arith.constant dense<0.000000e+00> : vector<8x8xf32>
    %227 = tpu.matmul %224, %225, %cst_122 {dimension_numbers = #tpu.dot_dimension_numbers<[1], [1], [0], [0], [0, 0, 1, 0], [], []>} : vector<8x32xf32>, vector<8x32xf32>, vector<8x8xf32> -> vector<8x8xf32>
    %cst_123 = arith.constant 0.176776692 : f32
    %228 = vector.broadcast %cst_123 : f32 to vector<8x8xf32>
    %229 = arith.mulf %227, %228 : vector<8x8xf32>
    %cst_124 = arith.constant dense<0xFF800000> : vector<8xf32>
    %230 = vector.multi_reduction <maximumf>, %229, %cst_124 [1] : vector<8x8xf32> to vector<8xf32>
    %231 = vector.shape_cast %230 : vector<8xf32> to vector<8x1xf32>
    %232 = vector.broadcast %231 : vector<8x1xf32> to vector<8x8xf32>
    %233 = arith.subf %229, %232 : vector<8x8xf32>
    %234 = math.exp %233 : vector<8x8xf32>
    %cst_125 = arith.constant dense<0.000000e+00> : vector<8xf32>
    %235 = vector.multi_reduction <add>, %234, %cst_125 [1] : vector<8x8xf32> to vector<8xf32>
    %236 = vector.shape_cast %235 : vector<8xf32> to vector<8x1xf32>
    %237 = tpu.reciprocal %236 {approx = true} : vector<8x1xf32> -> vector<8x1xf32>
    %238 = vector.broadcast %237 : vector<8x1xf32> to vector<8x8xf32>
    %239 = arith.mulf %234, %238 : vector<8x8xf32>
    %cst_126 = arith.constant dense<0.000000e+00> : vector<8x32xf32>
    %240 = tpu.matmul %239, %226, %cst_126 {dimension_numbers = #tpu.dot_dimension_numbers<[1], [0], [0], [1], [0, 0, 1, 1], [], []>} : vector<8x8xf32>, vector<8x32xf32>, vector<8x32xf32> -> vector<8x32xf32>
    %241 = vector.extract_strided_slice %178 {offsets = [32, 0], sizes = [32, 128], strides = [1, 1]} : vector<128x128xf32> to vector<32x128xf32>
    %cst_127 = arith.constant dense<0.000000e+00> : vector<8x128xf32>
    %242 = tpu.matmul %240, %241, %cst_127 {dimension_numbers = #tpu.dot_dimension_numbers<[1], [0], [0], [1], [0, 0, 1, 1], [], []>} : vector<8x32xf32>, vector<32x128xf32>, vector<8x128xf32> -> vector<8x128xf32>
    %243 = arith.addf %223, %242 : vector<8x128xf32>
    %244 = vector.extract_strided_slice %200 {offsets = [0, 64], sizes = [8, 32], strides = [1, 1]} : vector<8x128xf32> to vector<8x32xf32>
    %245 = vector.extract_strided_slice %201 {offsets = [0, 64], sizes = [8, 32], strides = [1, 1]} : vector<8x128xf32> to vector<8x32xf32>
    %246 = vector.extract_strided_slice %202 {offsets = [0, 64], sizes = [8, 32], strides = [1, 1]} : vector<8x128xf32> to vector<8x32xf32>
    %cst_128 = arith.constant dense<0.000000e+00> : vector<8x8xf32>
    %247 = tpu.matmul %244, %245, %cst_128 {dimension_numbers = #tpu.dot_dimension_numbers<[1], [1], [0], [0], [0, 0, 1, 0], [], []>} : vector<8x32xf32>, vector<8x32xf32>, vector<8x8xf32> -> vector<8x8xf32>
    %cst_129 = arith.constant 0.176776692 : f32
    %248 = vector.broadcast %cst_129 : f32 to vector<8x8xf32>
    %249 = arith.mulf %247, %248 : vector<8x8xf32>
    %cst_130 = arith.constant dense<0xFF800000> : vector<8xf32>
    %250 = vector.multi_reduction <maximumf>, %249, %cst_130 [1] : vector<8x8xf32> to vector<8xf32>
    %251 = vector.shape_cast %250 : vector<8xf32> to vector<8x1xf32>
    %252 = vector.broadcast %251 : vector<8x1xf32> to vector<8x8xf32>
    %253 = arith.subf %249, %252 : vector<8x8xf32>
    %254 = math.exp %253 : vector<8x8xf32>
    %cst_131 = arith.constant dense<0.000000e+00> : vector<8xf32>
    %255 = vector.multi_reduction <add>, %254, %cst_131 [1] : vector<8x8xf32> to vector<8xf32>
    %256 = vector.shape_cast %255 : vector<8xf32> to vector<8x1xf32>
    %257 = tpu.reciprocal %256 {approx = true} : vector<8x1xf32> -> vector<8x1xf32>
    %258 = vector.broadcast %257 : vector<8x1xf32> to vector<8x8xf32>
    %259 = arith.mulf %254, %258 : vector<8x8xf32>
    %cst_132 = arith.constant dense<0.000000e+00> : vector<8x32xf32>
    %260 = tpu.matmul %259, %246, %cst_132 {dimension_numbers = #tpu.dot_dimension_numbers<[1], [0], [0], [1], [0, 0, 1, 1], [], []>} : vector<8x8xf32>, vector<8x32xf32>, vector<8x32xf32> -> vector<8x32xf32>
    %261 = vector.extract_strided_slice %178 {offsets = [64, 0], sizes = [32, 128], strides = [1, 1]} : vector<128x128xf32> to vector<32x128xf32>
    %cst_133 = arith.constant dense<0.000000e+00> : vector<8x128xf32>
    %262 = tpu.matmul %260, %261, %cst_133 {dimension_numbers = #tpu.dot_dimension_numbers<[1], [0], [0], [1], [0, 0, 1, 1], [], []>} : vector<8x32xf32>, vector<32x128xf32>, vector<8x128xf32> -> vector<8x128xf32>
    %263 = arith.addf %243, %262 : vector<8x128xf32>
    %264 = vector.extract_strided_slice %200 {offsets = [0, 96], sizes = [8, 32], strides = [1, 1]} : vector<8x128xf32> to vector<8x32xf32>
    %265 = vector.extract_strided_slice %201 {offsets = [0, 96], sizes = [8, 32], strides = [1, 1]} : vector<8x128xf32> to vector<8x32xf32>
    %266 = vector.extract_strided_slice %202 {offsets = [0, 96], sizes = [8, 32], strides = [1, 1]} : vector<8x128xf32> to vector<8x32xf32>
    %cst_134 = arith.constant dense<0.000000e+00> : vector<8x8xf32>
    %267 = tpu.matmul %264, %265, %cst_134 {dimension_numbers = #tpu.dot_dimension_numbers<[1], [1], [0], [0], [0, 0, 1, 0], [], []>} : vector<8x32xf32>, vector<8x32xf32>, vector<8x8xf32> -> vector<8x8xf32>
    %cst_135 = arith.constant 0.176776692 : f32
    %268 = vector.broadcast %cst_135 : f32 to vector<8x8xf32>
    %269 = arith.mulf %267, %268 : vector<8x8xf32>
    %cst_136 = arith.constant dense<0xFF800000> : vector<8xf32>
    %270 = vector.multi_reduction <maximumf>, %269, %cst_136 [1] : vector<8x8xf32> to vector<8xf32>
    %271 = vector.shape_cast %270 : vector<8xf32> to vector<8x1xf32>
    %272 = vector.broadcast %271 : vector<8x1xf32> to vector<8x8xf32>
    %273 = arith.subf %269, %272 : vector<8x8xf32>
    %274 = math.exp %273 : vector<8x8xf32>
    %cst_137 = arith.constant dense<0.000000e+00> : vector<8xf32>
    %275 = vector.multi_reduction <add>, %274, %cst_137 [1] : vector<8x8xf32> to vector<8xf32>
    %276 = vector.shape_cast %275 : vector<8xf32> to vector<8x1xf32>
    %277 = tpu.reciprocal %276 {approx = true} : vector<8x1xf32> -> vector<8x1xf32>
    %278 = vector.broadcast %277 : vector<8x1xf32> to vector<8x8xf32>
    %279 = arith.mulf %274, %278 : vector<8x8xf32>
    %cst_138 = arith.constant dense<0.000000e+00> : vector<8x32xf32>
    %280 = tpu.matmul %279, %266, %cst_138 {dimension_numbers = #tpu.dot_dimension_numbers<[1], [0], [0], [1], [0, 0, 1, 1], [], []>} : vector<8x8xf32>, vector<8x32xf32>, vector<8x32xf32> -> vector<8x32xf32>
    %281 = vector.extract_strided_slice %178 {offsets = [96, 0], sizes = [32, 128], strides = [1, 1]} : vector<128x128xf32> to vector<32x128xf32>
    %cst_139 = arith.constant dense<0.000000e+00> : vector<8x128xf32>
    %282 = tpu.matmul %280, %281, %cst_139 {dimension_numbers = #tpu.dot_dimension_numbers<[1], [0], [0], [1], [0, 0, 1, 1], [], []>} : vector<8x32xf32>, vector<32x128xf32>, vector<8x128xf32> -> vector<8x128xf32>
    %283 = arith.addf %263, %282 : vector<8x128xf32>
    %284 = vector.broadcast %180 : vector<1x128xf32> to vector<8x128xf32>
    %285 = arith.addf %283, %284 : vector<8x128xf32>
    %286 = arith.addf %172, %285 : vector<8x128xf32>
    %cst_140 = arith.constant dense<0.000000e+00> : vector<8xf32>
    %287 = vector.multi_reduction <add>, %286, %cst_140 [1] : vector<8x128xf32> to vector<8xf32>
    %288 = vector.shape_cast %287 : vector<8xf32> to vector<8x1xf32>
    %cst_141 = arith.constant 1.280000e+02 : f32
    %289 = vector.broadcast %cst_141 : f32 to vector<8x1xf32>
    %290 = arith.divf %288, %289 : vector<8x1xf32>
    %291 = vector.broadcast %290 : vector<8x1xf32> to vector<8x128xf32>
    %292 = arith.subf %286, %291 : vector<8x128xf32>
    %293 = arith.mulf %292, %292 : vector<8x128xf32>
    %cst_142 = arith.constant dense<0.000000e+00> : vector<8xf32>
    %294 = vector.multi_reduction <add>, %293, %cst_142 [1] : vector<8x128xf32> to vector<8xf32>
    %295 = vector.shape_cast %294 : vector<8xf32> to vector<8x1xf32>
    %cst_143 = arith.constant 1.280000e+02 : f32
    %296 = vector.broadcast %cst_143 : f32 to vector<8x1xf32>
    %297 = arith.divf %295, %296 : vector<8x1xf32>
    %298 = vector.broadcast %290 : vector<8x1xf32> to vector<8x128xf32>
    %299 = arith.subf %286, %298 : vector<8x128xf32>
    %cst_144 = arith.constant 9.99999974E-6 : f32
    %300 = vector.broadcast %cst_144 : f32 to vector<8x1xf32>
    %301 = arith.addf %297, %300 : vector<8x1xf32>
    %302 = math.rsqrt %301 : vector<8x1xf32>
    %303 = vector.broadcast %302 : vector<8x1xf32> to vector<8x128xf32>
    %304 = arith.mulf %299, %303 : vector<8x128xf32>
    %305 = vector.broadcast %182 : vector<1x128xf32> to vector<8x128xf32>
    %306 = arith.mulf %304, %305 : vector<8x128xf32>
    %307 = vector.broadcast %184 : vector<1x128xf32> to vector<8x128xf32>
    %308 = arith.addf %306, %307 : vector<8x128xf32>
    %cst_145 = arith.constant dense<0.000000e+00> : vector<8x256xf32>
    %309 = tpu.matmul %308, %186, %cst_145 {dimension_numbers = #tpu.dot_dimension_numbers<[1], [0], [0], [1], [0, 0, 1, 1], [], []>} : vector<8x128xf32>, vector<128x256xf32>, vector<8x256xf32> -> vector<8x256xf32>
    %310 = vector.broadcast %188 : vector<1x256xf32> to vector<8x256xf32>
    %311 = arith.addf %309, %310 : vector<8x256xf32>
    %cst_146 = arith.constant 0.000000e+00 : f32
    %312 = vector.broadcast %cst_146 : f32 to vector<8x256xf32>
    %313 = arith.maximumf %311, %312 : vector<8x256xf32>
    %cst_147 = arith.constant dense<0.000000e+00> : vector<8x128xf32>
    %314 = tpu.matmul %313, %190, %cst_147 {dimension_numbers = #tpu.dot_dimension_numbers<[1], [0], [0], [1], [0, 0, 1, 1], [], []>} : vector<8x256xf32>, vector<256x128xf32>, vector<8x128xf32> -> vector<8x128xf32>
    %315 = vector.broadcast %192 : vector<1x128xf32> to vector<8x128xf32>
    %316 = arith.addf %314, %315 : vector<8x128xf32>
    %317 = arith.addf %308, %316 : vector<8x128xf32>
    %cst_148 = arith.constant dense<0.000000e+00> : vector<8xf32>
    %318 = vector.multi_reduction <add>, %317, %cst_148 [1] : vector<8x128xf32> to vector<8xf32>
    %319 = vector.shape_cast %318 : vector<8xf32> to vector<8x1xf32>
    %cst_149 = arith.constant 1.280000e+02 : f32
    %320 = vector.broadcast %cst_149 : f32 to vector<8x1xf32>
    %321 = arith.divf %319, %320 : vector<8x1xf32>
    %322 = vector.broadcast %321 : vector<8x1xf32> to vector<8x128xf32>
    %323 = arith.subf %317, %322 : vector<8x128xf32>
    %324 = arith.mulf %323, %323 : vector<8x128xf32>
    %cst_150 = arith.constant dense<0.000000e+00> : vector<8xf32>
    %325 = vector.multi_reduction <add>, %324, %cst_150 [1] : vector<8x128xf32> to vector<8xf32>
    %326 = vector.shape_cast %325 : vector<8xf32> to vector<8x1xf32>
    %cst_151 = arith.constant 1.280000e+02 : f32
    %327 = vector.broadcast %cst_151 : f32 to vector<8x1xf32>
    %328 = arith.divf %326, %327 : vector<8x1xf32>
    %329 = vector.broadcast %321 : vector<8x1xf32> to vector<8x128xf32>
    %330 = arith.subf %317, %329 : vector<8x128xf32>
    %cst_152 = arith.constant 9.99999974E-6 : f32
    %331 = vector.broadcast %cst_152 : f32 to vector<8x1xf32>
    %332 = arith.addf %328, %331 : vector<8x1xf32>
    %333 = math.rsqrt %332 : vector<8x1xf32>
    %334 = vector.broadcast %333 : vector<8x1xf32> to vector<8x128xf32>
    %335 = arith.mulf %330, %334 : vector<8x128xf32>
    %336 = vector.broadcast %194 : vector<1x128xf32> to vector<8x128xf32>
    %337 = arith.mulf %335, %336 : vector<8x128xf32>
    %338 = vector.broadcast %196 : vector<1x128xf32> to vector<8x128xf32>
    %339 = arith.addf %337, %338 : vector<8x128xf32>
    %c0_153 = arith.constant 0 : index
    %c0_154 = arith.constant 0 : index
    %340 = vector.load %arg15[%c0_153, %c0_154] : memref<128x128xf32, #tpu.memory_space<vmem>>, vector<128x128xf32>
    %cst_155 = arith.constant dense<0.000000e+00> : vector<8x128xf32>
    %341 = tpu.matmul %339, %340, %cst_155 {dimension_numbers = #tpu.dot_dimension_numbers<[1], [0], [0], [1], [0, 0, 1, 1], [], []>} : vector<8x128xf32>, vector<128x128xf32>, vector<8x128xf32> -> vector<8x128xf32>
    %c0_156 = arith.constant 0 : index
    %c0_157 = arith.constant 0 : index
    %342 = vector.load %arg16[%c0_156, %c0_157] : memref<1x128xf32, #tpu.memory_space<vmem>>, vector<1x128xf32>
    %343 = vector.broadcast %342 : vector<1x128xf32> to vector<8x128xf32>
    %344 = arith.addf %341, %343 : vector<8x128xf32>
    %c0_158 = arith.constant 0 : index
    %c0_159 = arith.constant 0 : index
    %c0_160 = arith.constant 0 : index
    %345 = vector.load %arg17[%c0_158, %c0_159, %c0_160] : memref<1x8x128xf32, #tpu.memory_space<vmem>>, vector<1x8x128xf32>
    %346 = vector.shape_cast %345 : vector<1x8x128xf32> to vector<8x128xf32>
    %347 = vector.shape_cast %344 : vector<8x128xf32> to vector<1x8x128xf32>
    tpu.vector_store %arg17[%c0_158, %c0_159, %c0_160], %347 {strides = array<i32>} : memref<1x8x128xf32, #tpu.memory_space<vmem>>, vector<1x8x128xf32>,
    return
  }
  func.func @transform_0(%arg0: i32) -> (i32, i32, i32) {
    %c0_i32 = arith.constant 0 : i32
    %c0_i32_0 = arith.constant 0 : i32
    %c0_i32_1 = arith.constant 0 : i32
    return %arg0, %c0_i32, %c0_i32_0 : i32, i32, i32
  }
  func.func @transform_1(%arg0: i32) -> (i32, i32) {
    %c0_i32 = arith.constant 0 : i32
    %c0_i32_0 = arith.constant 0 : i32
    %c0_i32_1 = arith.constant 0 : i32
    return %c0_i32, %c0_i32_0 : i32, i32
  }
  func.func @transform_2(%arg0: i32) -> (i32, i32, i32) {
    %c0_i32 = arith.constant 0 : i32
    %c0_i32_0 = arith.constant 0 : i32
    %c0_i32_1 = arith.constant 0 : i32
    %c0_i32_2 = arith.constant 0 : i32
    return %c0_i32, %c0_i32_0, %c0_i32_1 : i32, i32, i32
  }
  func.func @transform_3(%arg0: i32) -> (i32, i32, i32) {
    %c0_i32 = arith.constant 0 : i32
    %c0_i32_0 = arith.constant 0 : i32
    %c0_i32_1 = arith.constant 0 : i32
    %c0_i32_2 = arith.constant 0 : i32
    return %c0_i32, %c0_i32_0, %c0_i32_1 : i32, i32, i32
  }
  func.func @transform_4(%arg0: i32) -> (i32, i32, i32) {
    %c0_i32 = arith.constant 0 : i32
    %c0_i32_0 = arith.constant 0 : i32
    %c0_i32_1 = arith.constant 0 : i32
    %c0_i32_2 = arith.constant 0 : i32
    return %c0_i32, %c0_i32_0, %c0_i32_1 : i32, i32, i32
  }
  func.func @transform_5(%arg0: i32) -> (i32, i32, i32) {
    %c0_i32 = arith.constant 0 : i32
    %c0_i32_0 = arith.constant 0 : i32
    %c0_i32_1 = arith.constant 0 : i32
    %c0_i32_2 = arith.constant 0 : i32
    return %c0_i32, %c0_i32_0, %c0_i32_1 : i32, i32, i32
  }
  func.func @transform_6(%arg0: i32) -> (i32, i32, i32) {
    %c0_i32 = arith.constant 0 : i32
    %c0_i32_0 = arith.constant 0 : i32
    %c0_i32_1 = arith.constant 0 : i32
    %c0_i32_2 = arith.constant 0 : i32
    return %c0_i32, %c0_i32_0, %c0_i32_1 : i32, i32, i32
  }
  func.func @transform_7(%arg0: i32) -> (i32, i32, i32) {
    %c0_i32 = arith.constant 0 : i32
    %c0_i32_0 = arith.constant 0 : i32
    %c0_i32_1 = arith.constant 0 : i32
    %c0_i32_2 = arith.constant 0 : i32
    return %c0_i32, %c0_i32_0, %c0_i32_1 : i32, i32, i32
  }
  func.func @transform_8(%arg0: i32) -> (i32, i32, i32) {
    %c0_i32 = arith.constant 0 : i32
    %c0_i32_0 = arith.constant 0 : i32
    %c0_i32_1 = arith.constant 0 : i32
    %c0_i32_2 = arith.constant 0 : i32
    return %c0_i32, %c0_i32_0, %c0_i32_1 : i32, i32, i32
  }
  func.func @transform_9(%arg0: i32) -> (i32, i32, i32) {
    %c0_i32 = arith.constant 0 : i32
    %c0_i32_0 = arith.constant 0 : i32
    %c0_i32_1 = arith.constant 0 : i32
    %c0_i32_2 = arith.constant 0 : i32
    return %c0_i32, %c0_i32_0, %c0_i32_1 : i32, i32, i32
  }
  func.func @transform_10(%arg0: i32) -> (i32, i32, i32) {
    %c0_i32 = arith.constant 0 : i32
    %c0_i32_0 = arith.constant 0 : i32
    %c0_i32_1 = arith.constant 0 : i32
    %c0_i32_2 = arith.constant 0 : i32
    return %c0_i32, %c0_i32_0, %c0_i32_1 : i32, i32, i32
  }
  func.func @transform_11(%arg0: i32) -> (i32, i32, i32) {
    %c0_i32 = arith.constant 0 : i32
    %c0_i32_0 = arith.constant 0 : i32
    %c0_i32_1 = arith.constant 0 : i32
    %c0_i32_2 = arith.constant 0 : i32
    return %c0_i32, %c0_i32_0, %c0_i32_1 : i32, i32, i32
  }
  func.func @transform_12(%arg0: i32) -> (i32, i32, i32) {
    %c0_i32 = arith.constant 0 : i32
    %c0_i32_0 = arith.constant 0 : i32
    %c0_i32_1 = arith.constant 0 : i32
    %c0_i32_2 = arith.constant 0 : i32
    return %c0_i32, %c0_i32_0, %c0_i32_1 : i32, i32, i32
  }
  func.func @transform_13(%arg0: i32) -> (i32, i32, i32) {
    %c0_i32 = arith.constant 0 : i32
    %c0_i32_0 = arith.constant 0 : i32
    %c0_i32_1 = arith.constant 0 : i32
    %c0_i32_2 = arith.constant 0 : i32
    return %c0_i32, %c0_i32_0, %c0_i32_1 : i32, i32, i32
  }
  func.func @transform_14(%arg0: i32) -> (i32, i32) {
    %c0_i32 = arith.constant 0 : i32
    %c0_i32_0 = arith.constant 0 : i32
    %c0_i32_1 = arith.constant 0 : i32
    return %c0_i32, %c0_i32_0 : i32, i32
  }
  func.func @transform_15(%arg0: i32) -> (i32, i32) {
    %c0_i32 = arith.constant 0 : i32
    %c0_i32_0 = arith.constant 0 : i32
    %c0_i32_1 = arith.constant 0 : i32
    return %c0_i32, %c0_i32_0 : i32, i32
  }
  func.func @transform_16(%arg0: i32) -> (i32, i32, i32) {
    %c0_i32 = arith.constant 0 : i32
    %c0_i32_0 = arith.constant 0 : i32
    %c0_i32_1 = arith.constant 0 : i32
    return %arg0, %c0_i32, %c0_i32_0 : i32, i32, i32
  }
}

</mosaic_0001>

<llo_original>
// kernel: tpu_custom_call.1
$region0: #{tpu_custom_call.1}
  #allocation0 [shape = 'u32[]', space=smem, size = 0x4, offset = 0x4, fixed_abs, tag = 'smem constant byte address 0x4 - core index']
  #allocation1 [shape = 'u32[144,128]{1,0:T(1,128)}', space=vmem, size = 0x12000, scoped, tag = 'internal scratch']
  %s0 = inlined_call_operand.hbm [shape: f32[2,8,128], index: 0, kind: input, shape index: {}]
  %s1 = inlined_call_operand.hbm [shape: f32[8,128], index: 1, kind: input, shape index: {}]
  %s2 = inlined_call_operand.hbm [shape: f32[2,128,384], index: 2, kind: input, shape index: {}]
  %s3 = inlined_call_operand.hbm [shape: f32[2,1,384], index: 3, kind: input, shape index: {}]
  %s4 = inlined_call_operand.hbm [shape: f32[2,128,128], index: 4, kind: input, shape index: {}]
  %s5 = inlined_call_operand.vmem [shape: f32[2,1,128], index: 5, kind: input, shape index: {}]
  %s6 = inlined_call_operand.vmem [shape: f32[2,1,128], index: 6, kind: input, shape index: {}]
  %s7 = inlined_call_operand.vmem [shape: f32[2,1,128], index: 7, kind: input, shape index: {}]
  %s8 = inlined_call_operand.hbm [shape: f32[2,128,256], index: 8, kind: input, shape index: {}]
  %s9 = inlined_call_operand.vmem [shape: f32[2,1,256], index: 9, kind: input, shape index: {}]
  %s10 = inlined_call_operand.hbm [shape: f32[2,256,128], index: 10, kind: input, shape index: {}]
  %s11 = inlined_call_operand.vmem [shape: f32[2,1,128], index: 11, kind: input, shape index: {}]
  %s12 = inlined_call_operand.vmem [shape: f32[2,1,128], index: 12, kind: input, shape index: {}]
  %s13 = inlined_call_operand.vmem [shape: f32[2,1,128], index: 13, kind: input, shape index: {}]
  %s14 = inlined_call_operand.hbm [shape: f32[128,128], index: 14, kind: input, shape index: {}]
  %s15 = inlined_call_operand.vmem [shape: f32[1,128], index: 15, kind: input, shape index: {}]
  %s16 = inlined_call_operand.hbm [shape: f32[2,8,128], index: 16, kind: output, shape index: {}]
  %s17 = sld [smem:[#allocation0]]
  $region129: #{tpu_custom_call.1} parent=0
    _
  %s19 = ssub.s32 1, %s17
  %s20 = scalar_select 0, %s19, %s17
  $region1: #{tpu_custom_call.1} parent=0
    #allocation2 [shape = 'u8[8192]{0}', space=vmem, size = 0x2000, scoped, tag = 'input window, operand 0']
    #allocation3 [shape = 's32[2]{0}', space=sflag, size = 0x8, scoped, tag = 'scoped memory for tpu_custom_call.1']
    #allocation4 [shape = 's32[2]{0}', space=sflag, size = 0x8, scoped, tag = 'scoped memory for tpu_custom_call.1']
    #allocation5 [shape = 'u8[4096]{0}', space=vmem, size = 0x1000, scoped, tag = 'input window, operand 1, single buffered']
    #allocation6 [shape = 's32[1]{0}', space=sflag, size = 0x4, scoped, tag = 'scoped memory for tpu_custom_call.1']
    #allocation7 [shape = 'u8[393216]{0}', space=vmem, size = 0x60000, scoped, tag = 'input window, operand 2, single buffered']
    #allocation8 [shape = 'u8[3072]{0}', space=vmem, size = 0xc00, scoped, tag = 'input window, operand 3, single buffered']
    #allocation9 [shape = 's32[1]{0}', space=sflag, size = 0x4, scoped, tag = 'scoped memory for tpu_custom_call.1']
    #allocation10 [shape = 'u8[131072]{0}', space=vmem, size = 0x20000, scoped, tag = 'input window, operand 4, single buffered']
    #allocation11 [shape = 'u8[262144]{0}', space=vmem, size = 0x40000, scoped, tag = 'input window, operand 8, single buffered']
    #allocation12 [shape = 's32[1]{0}', space=sflag, size = 0x4, scoped, tag = 'scoped memory for tpu_custom_call.1']
    #allocation13 [shape = 'u8[262144]{0}', space=vmem, size = 0x40000, scoped, tag = 'input window, operand 10, single buffered']
    #allocation14 [shape = 'u8[65536]{0}', space=vmem, size = 0x10000, scoped, tag = 'input window, operand 14, single buffered']
    #allocation15 [shape = 's32[1]{0}', space=sflag, size = 0x4, scoped, tag = 'scoped memory for tpu_custom_call.1']
    #allocation16 [shape = 'u8[8192]{0}', space=vmem, size = 0x2000, scoped, tag = 'output window, operand 0']
    %21 = vsyncpa [#allocation3], 0
    %s22 = scalar_lea.sflag [#allocation3], 1
    %23 = vsyncpa %s22, 0
    %24 = vsyncpa [#allocation6], 0
    %25 = vsyncpa [#allocation9], 0
    %26 = vsyncpa [#allocation12], 0
    %27 = vsyncpa [#allocation15], 0
    %28 = vsyncpa [#allocation4], 0
    %s29 = scalar_lea.sflag [#allocation4], 1
    %30 = vsyncpa %s29, 0
    loop: start=0, step=1, limit=4
    $region2: #{tpu_custom_call.1} parent=1 // loop_pre_header
      _
    $region3: #{tpu_custom_call.1} parent=1 // loop_header
      %s32 = sphi 0, %s36
      %p33 = scmp.ge.s32.totalorder %s32, 4
      %s42 = sphi 0, %s44
      %s45 = sphi 0, %s42
      %s46 = sphi 0, %s45
      %s62 = sphi 0, %s46
      %s66 = sphi 0, %s66
      %s68 = sphi 0, %s66
      %s69 = sphi 0, %s68
      %s83 = sphi 0, %s69
      %s87 = sphi 0, %s87
      %s89 = sphi 0, %s87
      %s90 = sphi 0, %s89
      %s104 = sphi 0, %s90
      %s108 = sphi 0, %s108
      %s110 = sphi 0, %s108
      %s111 = sphi 0, %s110
      %s125 = sphi 0, %s111
      %s129 = sphi 0, %s129
      %s131 = sphi 0, %s129
      %s132 = sphi 0, %s131
      %s146 = sphi 0, %s132
      %s150 = sphi 0, %s150
      %s152 = sphi 0, %s150
      %s153 = sphi 0, %s152
      %s167 = sphi 0, %s153
      %s171 = sphi 0, %s171
      %s173 = sphi 0, %s171
      %s174 = sphi 0, %s173
      %s188 = sphi 0, %s174
      %s192 = sphi 0, %s192
      %s194 = sphi 0, %s192
      %s195 = sphi 0, %s194
      %s209 = sphi 0, %s195
      %s213 = sphi 0, %s213
      %s215 = sphi 0, %s213
      %s216 = sphi 0, %s215
      %s230 = sphi 0, %s216
      %s234 = sphi 0, %s234
      %s236 = sphi 0, %s234
      %s237 = sphi 0, %s236
      %s251 = sphi 0, %s237
      %s255 = sphi 0, %s255
      %s257 = sphi 0, %s255
      %s258 = sphi 0, %s257
      %s272 = sphi 0, %s258
      %s276 = sphi 0, %s276
      %s278 = sphi 0, %s276
      %s279 = sphi 0, %s278
      %s293 = sphi 0, %s279
      %s297 = sphi 0, %s297
      %s299 = sphi 0, %s297
      %s300 = sphi 0, %s299
      %s314 = sphi 0, %s300
      %s318 = sphi 0, %s318
      %s320 = sphi 0, %s318
      %s321 = sphi 0, %s320
      %s335 = sphi 0, %s321
      %s339 = sphi 0, %s339
      %s341 = sphi 0, %s339
      %s342 = sphi 0, %s341
      %s356 = sphi 0, %s342
      %s360 = sphi 0, %s360
      %s362 = sphi 0, %s360
      %s363 = sphi 0, %s362
      %s377 = sphi 0, %s363
      %s383 = sphi 0, %s385
      %s386 = sphi 0, %s383
      %s387 = sphi 0, %s386
      %s403 = sphi 0, %s387
    $region4: #{tpu_custom_call.1} parent=1 // loop_header_branch
      %35 = sbr.rel (%p33) target = $region8
    $region5: #{tpu_custom_call.1} parent=1 // loop_body
      %s37 = ssub.s32 %s32, 1
      %s38 = ssub.s32 %s32, 2
      %s39 = sadd.s32 %s32, 1
      %s40 = ssub.s32 %s32, %s39
      %p41 = scmp.eq.s32.totalorder %s40, 0
      %s43 = sadd.s32 %s42, 1
      %s44 = scalar_select %p41, %s42, %s43
      %p47 = pneg %p41
      %p48 = scmp.eq.s32.totalorder %s32, 1
      %p49 = por %p47, %p48
      %p50 = scmp.ne.s32.totalorder %s42, %s45
      %p51 = scmp.eq.s32.totalorder %s32, 0
      %p52 = por %p50, %p51
      %p53 = scmp.ne.s32.totalorder %s42, %s45
      %p54 = scmp.eq.s32.totalorder %s37, 1
      %p55 = por %p53, %p54
      %p56 = scmp.ne.s32.totalorder %s45, %s46
      %p57 = scmp.eq.s32.totalorder %s37, 0
      %p58 = por %p56, %p57
      %p59 = scmp.ne.s32.totalorder %s45, %s46
      %p60 = scmp.eq.s32.totalorder %s38, 1
      %p61 = por %p59, %p60
      %p63 = scmp.ne.s32.totalorder %s46, %s62
      %p64 = scmp.eq.s32.totalorder %s38, 0
      %p65 = por %p63, %p64
      %s67 = sadd.s32 %s66, 1
      %p70 = scmp.eq.s32.totalorder %s32, 1
      %p71 = scmp.ne.s32.totalorder %s66, %s68
      %p72 = scmp.eq.s32.totalorder %s32, 0
      %p73 = por %p71, %p72
      %p74 = scmp.ne.s32.totalorder %s66, %s68
      %p75 = scmp.eq.s32.totalorder %s37, 1
      %p76 = por %p74, %p75
      %p77 = scmp.ne.s32.totalorder %s68, %s69
      %p78 = scmp.eq.s32.totalorder %s37, 0
      %p79 = por %p77, %p78
      %p80 = scmp.ne.s32.totalorder %s68, %s69
      %p81 = scmp.eq.s32.totalorder %s38, 1
      %p82 = por %p80, %p81
      %p84 = scmp.ne.s32.totalorder %s69, %s83
      %p85 = scmp.eq.s32.totalorder %s38, 0
      %p86 = por %p84, %p85
      %s88 = sadd.s32 %s87, 1
      %p91 = scmp.eq.s32.totalorder %s32, 1
      %p92 = scmp.ne.s32.totalorder %s87, %s89
      %p93 = scmp.eq.s32.totalorder %s32, 0
      %p94 = por %p92, %p93
      %p95 = scmp.ne.s32.totalorder %s87, %s89
      %p96 = scmp.eq.s32.totalorder %s37, 1
      %p97 = por %p95, %p96
      %p98 = scmp.ne.s32.totalorder %s89, %s90
      %p99 = scmp.eq.s32.totalorder %s37, 0
      %p100 = por %p98, %p99
      %p101 = scmp.ne.s32.totalorder %s89, %s90
      %p102 = scmp.eq.s32.totalorder %s38, 1
      %p103 = por %p101, %p102
      %p105 = scmp.ne.s32.totalorder %s90, %s104
      %p106 = scmp.eq.s32.totalorder %s38, 0
      %p107 = por %p105, %p106
      %s109 = sadd.s32 %s108, 1
      %p112 = scmp.eq.s32.totalorder %s32, 1
      %p113 = scmp.ne.s32.totalorder %s108, %s110
      %p114 = scmp.eq.s32.totalorder %s32, 0
      %p115 = por %p113, %p114
      %p116 = scmp.ne.s32.totalorder %s108, %s110
      %p117 = scmp.eq.s32.totalorder %s37, 1
      %p118 = por %p116, %p117
      %p119 = scmp.ne.s32.totalorder %s110, %s111
      %p120 = scmp.eq.s32.totalorder %s37, 0
      %p121 = por %p119, %p120
      %p122 = scmp.ne.s32.totalorder %s110, %s111
      %p123 = scmp.eq.s32.totalorder %s38, 1
      %p124 = por %p122, %p123
      %p126 = scmp.ne.s32.totalorder %s111, %s125
      %p127 = scmp.eq.s32.totalorder %s38, 0
      %p128 = por %p126, %p127
      %s130 = sadd.s32 %s129, 1
      %p133 = scmp.eq.s32.totalorder %s32, 1
      %p134 = scmp.ne.s32.totalorder %s129, %s131
      %p135 = scmp.eq.s32.totalorder %s32, 0
      %p136 = por %p134, %p135
      %p137 = scmp.ne.s32.totalorder %s129, %s131
      %p138 = scmp.eq.s32.totalorder %s37, 1
      %p139 = por %p137, %p138
      %p140 = scmp.ne.s32.totalorder %s131, %s132
      %p141 = scmp.eq.s32.totalorder %s37, 0
      %p142 = por %p140, %p141
      %p143 = scmp.ne.s32.totalorder %s131, %s132
      %p144 = scmp.eq.s32.totalorder %s38, 1
      %p145 = por %p143, %p144
      %p147 = scmp.ne.s32.totalorder %s132, %s146
      %p148 = scmp.eq.s32.totalorder %s38, 0
      %p149 = por %p147, %p148
      %s151 = sadd.s32 %s150, 1
      %p154 = scmp.eq.s32.totalorder %s32, 1
      %p155 = scmp.ne.s32.totalorder %s150, %s152
      %p156 = scmp.eq.s32.totalorder %s32, 0
      %p157 = por %p155, %p156
      %p158 = scmp.ne.s32.totalorder %s150, %s152
      %p159 = scmp.eq.s32.totalorder %s37, 1
      %p160 = por %p158, %p159
      %p161 = scmp.ne.s32.totalorder %s152, %s153
      %p162 = scmp.eq.s32.totalorder %s37, 0
      %p163 = por %p161, %p162
      %p164 = scmp.ne.s32.totalorder %s152, %s153
      %p165 = scmp.eq.s32.totalorder %s38, 1
      %p166 = por %p164, %p165
      %p168 = scmp.ne.s32.totalorder %s153, %s167
      %p169 = scmp.eq.s32.totalorder %s38, 0
      %p170 = por %p168, %p169
      %s172 = sadd.s32 %s171, 1
      %p175 = scmp.eq.s32.totalorder %s32, 1
      %p176 = scmp.ne.s32.totalorder %s171, %s173
      %p177 = scmp.eq.s32.totalorder %s32, 0
      %p178 = por %p176, %p177
      %p179 = scmp.ne.s32.totalorder %s171, %s173
      %p180 = scmp.eq.s32.totalorder %s37, 1
      %p181 = por %p179, %p180
      %p182 = scmp.ne.s32.totalorder %s173, %s174
      %p183 = scmp.eq.s32.totalorder %s37, 0
      %p184 = por %p182, %p183
      %p185 = scmp.ne.s32.totalorder %s173, %s174
      %p186 = scmp.eq.s32.totalorder %s38, 1
      %p187 = por %p185, %p186
      %p189 = scmp.ne.s32.totalorder %s174, %s188
      %p190 = scmp.eq.s32.totalorder %s38, 0
      %p191 = por %p189, %p190
      %s193 = sadd.s32 %s192, 1
      %p196 = scmp.eq.s32.totalorder %s32, 1
      %p197 = scmp.ne.s32.totalorder %s192, %s194
      %p198 = scmp.eq.s32.totalorder %s32, 0
      %p199 = por %p197, %p198
      %p200 = scmp.ne.s32.totalorder %s192, %s194
      %p201 = scmp.eq.s32.totalorder %s37, 1
      %p202 = por %p200, %p201
      %p203 = scmp.ne.s32.totalorder %s194, %s195
      %p204 = scmp.eq.s32.totalorder %s37, 0
      %p205 = por %p203, %p204
      %p206 = scmp.ne.s32.totalorder %s194, %s195
      %p207 = scmp.eq.s32.totalorder %s38, 1
      %p208 = por %p206, %p207
      %p210 = scmp.ne.s32.totalorder %s195, %s209
      %p211 = scmp.eq.s32.totalorder %s38, 0
      %p212 = por %p210, %p211
      %s214 = sadd.s32 %s213, 1
      %p217 = scmp.eq.s32.totalorder %s32, 1
      %p218 = scmp.ne.s32.totalorder %s213, %s215
      %p219 = scmp.eq.s32.totalorder %s32, 0
      %p220 = por %p218, %p219
      %p221 = scmp.ne.s32.totalorder %s213, %s215
      %p222 = scmp.eq.s32.totalorder %s37, 1
      %p223 = por %p221, %p222
      %p224 = scmp.ne.s32.totalorder %s215, %s216
      %p225 = scmp.eq.s32.totalorder %s37, 0
      %p226 = por %p224, %p225
      %p227 = scmp.ne.s32.totalorder %s215, %s216
      %p228 = scmp.eq.s32.totalorder %s38, 1
      %p229 = por %p227, %p228
      %p231 = scmp.ne.s32.totalorder %s216, %s230
      %p232 = scmp.eq.s32.totalorder %s38, 0
      %p233 = por %p231, %p232
      %s235 = sadd.s32 %s234, 1
      %p238 = scmp.eq.s32.totalorder %s32, 1
      %p239 = scmp.ne.s32.totalorder %s234, %s236
      %p240 = scmp.eq.s32.totalorder %s32, 0
      %p241 = por %p239, %p240
      %p242 = scmp.ne.s32.totalorder %s234, %s236
      %p243 = scmp.eq.s32.totalorder %s37, 1
      %p244 = por %p242, %p243
      %p245 = scmp.ne.s32.totalorder %s236, %s237
      %p246 = scmp.eq.s32.totalorder %s37, 0
      %p247 = por %p245, %p246
      %p248 = scmp.ne.s32.totalorder %s236, %s237
      %p249 = scmp.eq.s32.totalorder %s38, 1
      %p250 = por %p248, %p249
      %p252 = scmp.ne.s32.totalorder %s237, %s251
      %p253 = scmp.eq.s32.totalorder %s38, 0
      %p254 = por %p252, %p253
      %s256 = sadd.s32 %s255, 1
      %p259 = scmp.eq.s32.totalorder %s32, 1
      %p260 = scmp.ne.s32.totalorder %s255, %s257
      %p261 = scmp.eq.s32.totalorder %s32, 0
      %p262 = por %p260, %p261
      %p263 = scmp.ne.s32.totalorder %s255, %s257
      %p264 = scmp.eq.s32.totalorder %s37, 1
      %p265 = por %p263, %p264
      %p266 = scmp.ne.s32.totalorder %s257, %s258
      %p267 = scmp.eq.s32.totalorder %s37, 0
      %p268 = por %p266, %p267
      %p269 = scmp.ne.s32.totalorder %s257, %s258
      %p270 = scmp.eq.s32.totalorder %s38, 1
      %p271 = por %p269, %p270
      %p273 = scmp.ne.s32.totalorder %s258, %s272
      %p274 = scmp.eq.s32.totalorder %s38, 0
      %p275 = por %p273, %p274
      %s277 = sadd.s32 %s276, 1
      %p280 = scmp.eq.s32.totalorder %s32, 1
      %p281 = scmp.ne.s32.totalorder %s276, %s278
      %p282 = scmp.eq.s32.totalorder %s32, 0
      %p283 = por %p281, %p282
      %p284 = scmp.ne.s32.totalorder %s276, %s278
      %p285 = scmp.eq.s32.totalorder %s37, 1
      %p286 = por %p284, %p285
      %p287 = scmp.ne.s32.totalorder %s278, %s279
      %p288 = scmp.eq.s32.totalorder %s37, 0
      %p289 = por %p287, %p288
      %p290 = scmp.ne.s32.totalorder %s278, %s279
      %p291 = scmp.eq.s32.totalorder %s38, 1
      %p292 = por %p290, %p291
      %p294 = scmp.ne.s32.totalorder %s279, %s293
      %p295 = scmp.eq.s32.totalorder %s38, 0
      %p296 = por %p294, %p295
      %s298 = sadd.s32 %s297, 1
      %p301 = scmp.eq.s32.totalorder %s32, 1
      %p302 = scmp.ne.s32.totalorder %s297, %s299
      %p303 = scmp.eq.s32.totalorder %s32, 0
      %p304 = por %p302, %p303
      %p305 = scmp.ne.s32.totalorder %s297, %s299
      %p306 = scmp.eq.s32.totalorder %s37, 1
      %p307 = por %p305, %p306
      %p308 = scmp.ne.s32.totalorder %s299, %s300
      %p309 = scmp.eq.s32.totalorder %s37, 0
      %p310 = por %p308, %p309
      %p311 = scmp.ne.s32.totalorder %s299, %s300
      %p312 = scmp.eq.s32.totalorder %s38, 1
      %p313 = por %p311, %p312
      %p315 = scmp.ne.s32.totalorder %s300, %s314
      %p316 = scmp.eq.s32.totalorder %s38, 0
      %p317 = por %p315, %p316
      %s319 = sadd.s32 %s318, 1
      %p322 = scmp.eq.s32.totalorder %s32, 1
      %p323 = scmp.ne.s32.totalorder %s318, %s320
      %p324 = scmp.eq.s32.totalorder %s32, 0
      %p325 = por %p323, %p324
      %p326 = scmp.ne.s32.totalorder %s318, %s320
      %p327 = scmp.eq.s32.totalorder %s37, 1
      %p328 = por %p326, %p327
      %p329 = scmp.ne.s32.totalorder %s320, %s321
      %p330 = scmp.eq.s32.totalorder %s37, 0
      %p331 = por %p329, %p330
      %p332 = scmp.ne.s32.totalorder %s320, %s321
      %p333 = scmp.eq.s32.totalorder %s38, 1
      %p334 = por %p332, %p333
      %p336 = scmp.ne.s32.totalorder %s321, %s335
      %p337 = scmp.eq.s32.totalorder %s38, 0
      %p338 = por %p336, %p337
      %s340 = sadd.s32 %s339, 1
      %p343 = scmp.eq.s32.totalorder %s32, 1
      %p344 = scmp.ne.s32.totalorder %s339, %s341
      %p345 = scmp.eq.s32.totalorder %s32, 0
      %p346 = por %p344, %p345
      %p347 = scmp.ne.s32.totalorder %s339, %s341
      %p348 = scmp.eq.s32.totalorder %s37, 1
      %p349 = por %p347, %p348
      %p350 = scmp.ne.s32.totalorder %s341, %s342
      %p351 = scmp.eq.s32.totalorder %s37, 0
      %p352 = por %p350, %p351
      %p353 = scmp.ne.s32.totalorder %s341, %s342
      %p354 = scmp.eq.s32.totalorder %s38, 1
      %p355 = por %p353, %p354
      %p357 = scmp.ne.s32.totalorder %s342, %s356
      %p358 = scmp.eq.s32.totalorder %s38, 0
      %p359 = por %p357, %p358
      %s361 = sadd.s32 %s360, 1
      %p364 = scmp.eq.s32.totalorder %s32, 1
      %p365 = scmp.ne.s32.totalorder %s360, %s362
      %p366 = scmp.eq.s32.totalorder %s32, 0
      %p367 = por %p365, %p366
      %p368 = scmp.ne.s32.totalorder %s360, %s362
      %p369 = scmp.eq.s32.totalorder %s37, 1
      %p370 = por %p368, %p369
      %p371 = scmp.ne.s32.totalorder %s362, %s363
      %p372 = scmp.eq.s32.totalorder %s37, 0
      %p373 = por %p371, %p372
      %p374 = scmp.ne.s32.totalorder %s362, %s363
      %p375 = scmp.eq.s32.totalorder %s38, 1
      %p376 = por %p374, %p375
      %p378 = scmp.ne.s32.totalorder %s363, %s377
      %p379 = scmp.eq.s32.totalorder %s38, 0
      %p380 = por %p378, %p379
      %s381 = ssub.s32 %s32, %s39
      %p382 = scmp.eq.s32.totalorder %s381, 0
      %s384 = sadd.s32 %s383, 1
      %s385 = scalar_select %p382, %s383, %s384
      %p388 = pneg %p382
      %p389 = scmp.eq.s32.totalorder %s32, 1
      %p390 = por %p388, %p389
      %p391 = scmp.ne.s32.totalorder %s383, %s386
      %p392 = scmp.eq.s32.totalorder %s32, 0
      %p393 = por %p391, %p392
      %p394 = scmp.ne.s32.totalorder %s383, %s386
      %p395 = scmp.eq.s32.totalorder %s37, 1
      %p396 = por %p394, %p395
      %p397 = scmp.ne.s32.totalorder %s386, %s387
      %p398 = scmp.eq.s32.totalorder %s37, 0
      %p399 = por %p397, %p398
      %p400 = scmp.ne.s32.totalorder %s386, %s387
      %p401 = scmp.eq.s32.totalorder %s38, 1
      %p402 = por %p400, %p401
      %p404 = scmp.ne.s32.totalorder %s387, %s403
      %p405 = scmp.eq.s32.totalorder %s38, 0
      %p406 = por %p404, %p405
      %p407 = scmp.le.s32.totalorder 1, %s32
      %p408 = scmp.lt.s32.totalorder %s32, 3
      %p409 = pnand %p407, %p408
      %p410 = pneg %p409
      // Predicated region
      $region9: #{tpu_custom_call.1} parent=5 // pred_check
        _
      $region10: #{tpu_custom_call.1} parent=5 // pred_check_branch
        %412 = sbr.rel (%p409) target = $region12
      $region11: #{tpu_custom_call.1} parent=5 // pred_region
        %s413 = ssub.s32 %s32, 1
        // Predicated region
        $region13: #{tpu_custom_call.1} parent=11 // pred_check
          %p414 = pneg %p79
        $region14: #{tpu_custom_call.1} parent=11 // pred_check_branch
          %416 = sbr.rel (%p414) target = $region16
        $region15: #{tpu_custom_call.1} parent=11 // pred_region
          %s418 = ssub.s32 128, 128
          %419 = vsyncadd [#allocation6], %s418
          %s421 = sshll.u32 [#allocation5], 4
          %s422 = int_to_ptr.vmem [resolvable:$true] %s421
          %424 = dma.hbm_to_vmem [thread:$0]  %s1, 128, %s422, [#allocation6]
        $region16: #{tpu_custom_call.1} parent=11 // pred_fallthru
          _
        // Predicated region
        $region17: #{tpu_custom_call.1} parent=11 // pred_check
          %p425 = pneg %p100
        $region18: #{tpu_custom_call.1} parent=11 // pred_check_branch
          %427 = sbr.rel (%p425) target = $region20
        $region19: #{tpu_custom_call.1} parent=11 // pred_region
          %s429 = ssub.s32 12288, 12288
          %430 = vsyncadd [#allocation6], %s429
          %s431 = sshll.u32 [#allocation7], 4
          %s432 = int_to_ptr.vmem [resolvable:$true] %s431
          %437 = dma.hbm_to_vmem [thread:$0]  %s2, 12288, %s432, [#allocation6], 384, 384, 24
        $region20: #{tpu_custom_call.1} parent=11 // pred_fallthru
          _
        // Predicated region
        $region21: #{tpu_custom_call.1} parent=11 // pred_check
          %p438 = pneg %p121
        $region22: #{tpu_custom_call.1} parent=11 // pred_check_branch
          %440 = sbr.rel (%p438) target = $region24
        $region23: #{tpu_custom_call.1} parent=11 // pred_region
          %s442 = ssub.s32 96, 96
          %443 = vsyncadd [#allocation9], %s442
          %s444 = sshll.u32 [#allocation8], 4
          %s445 = int_to_ptr.vmem [resolvable:$true] %s444
          %450 = dma.hbm_to_vmem [thread:$0]  %s3, 96, %s445, [#allocation9], 48, 48, 3
        $region24: #{tpu_custom_call.1} parent=11 // pred_fallthru
          _
        // Predicated region
        $region25: #{tpu_custom_call.1} parent=11 // pred_check
          %p451 = pneg %p142
        $region26: #{tpu_custom_call.1} parent=11 // pred_check_branch
          %453 = sbr.rel (%p451) target = $region28
        $region27: #{tpu_custom_call.1} parent=11 // pred_region
          %s455 = ssub.s32 4096, 4096
          %456 = vsyncadd [#allocation9], %s455
          %s457 = sshll.u32 [#allocation10], 4
          %s458 = int_to_ptr.vmem [resolvable:$true] %s457
          %463 = dma.hbm_to_vmem [thread:$0]  %s4, 4096, %s458, [#allocation9], 128, 128, 8
        $region28: #{tpu_custom_call.1} parent=11 // pred_fallthru
          _
        // Predicated region
        $region29: #{tpu_custom_call.1} parent=11 // pred_check
          %p464 = pneg %p163
        $region30: #{tpu_custom_call.1} parent=11 // pred_check_branch
          %466 = sbr.rel (%p464) target = $region32
        $region31: #{tpu_custom_call.1} parent=11 // pred_region
          _
        $region32: #{tpu_custom_call.1} parent=11 // pred_fallthru
          _
        // Predicated region
        $region33: #{tpu_custom_call.1} parent=11 // pred_check
          %p467 = pneg %p184
        $region34: #{tpu_custom_call.1} parent=11 // pred_check_branch
          %469 = sbr.rel (%p467) target = $region36
        $region35: #{tpu_custom_call.1} parent=11 // pred_region
          _
        $region36: #{tpu_custom_call.1} parent=11 // pred_fallthru
          _
        // Predicated region
        $region37: #{tpu_custom_call.1} parent=11 // pred_check
          %p470 = pneg %p205
        $region38: #{tpu_custom_call.1} parent=11 // pred_check_branch
          %472 = sbr.rel (%p470) target = $region40
        $region39: #{tpu_custom_call.1} parent=11 // pred_region
          _
        $region40: #{tpu_custom_call.1} parent=11 // pred_fallthru
          _
        // Predicated region
        $region41: #{tpu_custom_call.1} parent=11 // pred_check
          %p473 = pneg %p226
        $region42: #{tpu_custom_call.1} parent=11 // pred_check_branch
          %475 = sbr.rel (%p473) target = $region44
        $region43: #{tpu_custom_call.1} parent=11 // pred_region
          %s477 = ssub.s32 8192, 8192
          %478 = vsyncadd [#allocation12], %s477
          %s479 = sshll.u32 [#allocation11], 4
          %s480 = int_to_ptr.vmem [resolvable:$true] %s479
          %485 = dma.hbm_to_vmem [thread:$0]  %s8, 8192, %s480, [#allocation12], 256, 256, 16
        $region44: #{tpu_custom_call.1} parent=11 // pred_fallthru
          _
        // Predicated region
        $region45: #{tpu_custom_call.1} parent=11 // pred_check
          %p486 = pneg %p247
        $region46: #{tpu_custom_call.1} parent=11 // pred_check_branch
          %488 = sbr.rel (%p486) target = $region48
        $region47: #{tpu_custom_call.1} parent=11 // pred_region
          _
        $region48: #{tpu_custom_call.1} parent=11 // pred_fallthru
          _
        // Predicated region
        $region49: #{tpu_custom_call.1} parent=11 // pred_check
          %p489 = pneg %p268
        $region50: #{tpu_custom_call.1} parent=11 // pred_check_branch
          %491 = sbr.rel (%p489) target = $region52
        $region51: #{tpu_custom_call.1} parent=11 // pred_region
          %s493 = ssub.s32 8192, 8192
          %494 = vsyncadd [#allocation12], %s493
          %s495 = sshll.u32 [#allocation13], 4
          %s496 = int_to_ptr.vmem [resolvable:$true] %s495
          %501 = dma.hbm_to_vmem [thread:$0]  %s10, 8192, %s496, [#allocation12], 128, 128, 8
        $region52: #{tpu_custom_call.1} parent=11 // pred_fallthru
          _
        // Predicated region
        $region53: #{tpu_custom_call.1} parent=11 // pred_check
          %p502 = pneg %p289
        $region54: #{tpu_custom_call.1} parent=11 // pred_check_branch
          %504 = sbr.rel (%p502) target = $region56
        $region55: #{tpu_custom_call.1} parent=11 // pred_region
          _
        $region56: #{tpu_custom_call.1} parent=11 // pred_fallthru
          _
        // Predicated region
        $region57: #{tpu_custom_call.1} parent=11 // pred_check
          %p505 = pneg %p310
        $region58: #{tpu_custom_call.1} parent=11 // pred_check_branch
          %507 = sbr.rel (%p505) target = $region60
        $region59: #{tpu_custom_call.1} parent=11 // pred_region
          _
        $region60: #{tpu_custom_call.1} parent=11 // pred_fallthru
          _
        // Predicated region
        $region61: #{tpu_custom_call.1} parent=11 // pred_check
          %p508 = pneg %p331
        $region62: #{tpu_custom_call.1} parent=11 // pred_check_branch
          %510 = sbr.rel (%p508) target = $region64
        $region63: #{tpu_custom_call.1} parent=11 // pred_region
          _
        $region64: #{tpu_custom_call.1} parent=11 // pred_fallthru
          _
        // Predicated region
        $region65: #{tpu_custom_call.1} parent=11 // pred_check
          %p511 = pneg %p352
        $region66: #{tpu_custom_call.1} parent=11 // pred_check_branch
          %513 = sbr.rel (%p511) target = $region68
        $region67: #{tpu_custom_call.1} parent=11 // pred_region
          %s515 = ssub.s32 2048, 2048
          %516 = vsyncadd [#allocation15], %s515
          %s517 = sshll.u32 [#allocation14], 4
          %s518 = int_to_ptr.vmem [resolvable:$true] %s517
          %523 = dma.hbm_to_vmem [thread:$0]  %s14, 2048, %s518, [#allocation15], 128, 128, 8
        $region68: #{tpu_custom_call.1} parent=11 // pred_fallthru
          _
        // Predicated region
        $region69: #{tpu_custom_call.1} parent=11 // pred_check
          %p524 = pneg %p373
        $region70: #{tpu_custom_call.1} parent=11 // pred_check_branch
          %526 = sbr.rel (%p524) target = $region72
        $region71: #{tpu_custom_call.1} parent=11 // pred_region
          _
        $region72: #{tpu_custom_call.1} parent=11 // pred_fallthru
          _
      $region12: #{tpu_custom_call.1} parent=5 // pred_fallthru
        _
      %p527 = scmp.lt.s32.totalorder %s32, 2
      // Predicated region
      $region73: #{tpu_custom_call.1} parent=5 // pred_check
        %p528 = pneg %p527
      $region74: #{tpu_custom_call.1} parent=5 // pred_check_branch
        %530 = sbr.rel (%p528) target = $region76
      $region75: #{tpu_custom_call.1} parent=5 // pred_region
        // Predicated region
        $region77: #{tpu_custom_call.1} parent=75 // pred_check
          %p531 = pneg %p52
        $region78: #{tpu_custom_call.1} parent=75 // pred_check_branch
          %533 = sbr.rel (%p531) target = $region80
        $region79: #{tpu_custom_call.1} parent=75 // pred_region
          %s534 = sand.u32 %s42, 1
          %s535 = scalar_lea.sflag [#allocation3], %s534
          %s536 = sand.u32 %s42, 1
          %s537 = smul.addr %s536, 8
          %s538 = scalar_lea.vmem [#allocation2], %s537
          %s540 = ssub.s32 128, 128
          %541 = vsyncadd %s535, %s540
          %s542 = smul.addr %s32, 128
          %s543 = scalar_lea.hbm %s0, %s542
          %s545 = sshll.u32 %s538, 4
          %s546 = int_to_ptr.vmem [resolvable:$true] %s545
          %548 = dma.hbm_to_vmem [thread:$0]  %s543, 128, %s546, %s535
        $region80: #{tpu_custom_call.1} parent=75 // pred_fallthru
          _
      $region76: #{tpu_custom_call.1} parent=5 // pred_fallthru
        _
      %p549 = scmp.le.s32.totalorder 1, %s32
      %p550 = scmp.lt.s32.totalorder %s32, 3
      %p551 = pnand %p549, %p550
      %p552 = pneg %p551
      // Predicated region
      $region81: #{tpu_custom_call.1} parent=5 // pred_check
        _
      $region82: #{tpu_custom_call.1} parent=5 // pred_check_branch
        %554 = sbr.rel (%p551) target = $region84
      $region83: #{tpu_custom_call.1} parent=5 // pred_region
        %s555 = ssub.s32 %s32, 1
        %s556 = sand.u32 %s45, 1
        %s557 = scalar_lea.sflag [#allocation3], %s556
        %s558 = sand.u32 %s45, 1
        %s559 = smul.addr %s558, 8
        %s560 = scalar_lea.vmem [#allocation2], %s559
        // Predicated region
        $region85: #{tpu_custom_call.1} parent=83 // pred_check
          %p561 = pneg %p58
        $region86: #{tpu_custom_call.1} parent=83 // pred_check_branch
          %563 = sbr.rel (%p561) target = $region88
        $region87: #{tpu_custom_call.1} parent=83 // pred_region
          %564 = dma.done %s557, 128
        $region88: #{tpu_custom_call.1} parent=83 // pred_fallthru
          _
        // Predicated region
        $region89: #{tpu_custom_call.1} parent=83 // pred_check
          %p565 = pneg %p79
        $region90: #{tpu_custom_call.1} parent=83 // pred_check_branch
          %567 = sbr.rel (%p565) target = $region92
        $region91: #{tpu_custom_call.1} parent=83 // pred_region
          %568 = dma.done [#allocation6], 128
        $region92: #{tpu_custom_call.1} parent=83 // pred_fallthru
          _
        // Predicated region
        $region93: #{tpu_custom_call.1} parent=83 // pred_check
          %p569 = pneg %p100
        $region94: #{tpu_custom_call.1} parent=83 // pred_check_branch
          %571 = sbr.rel (%p569) target = $region96
        $region95: #{tpu_custom_call.1} parent=83 // pred_region
          %572 = dma.done [#allocation6], 12288
        $region96: #{tpu_custom_call.1} parent=83 // pred_fallthru
          _
        // Predicated region
        $region97: #{tpu_custom_call.1} parent=83 // pred_check
          %p573 = pneg %p121
        $region98: #{tpu_custom_call.1} parent=83 // pred_check_branch
          %575 = sbr.rel (%p573) target = $region100
        $region99: #{tpu_custom_call.1} parent=83 // pred_region
          %576 = dma.done [#allocation9], 96
        $region100: #{tpu_custom_call.1} parent=83 // pred_fallthru
          _
        // Predicated region
        $region101: #{tpu_custom_call.1} parent=83 // pred_check
          %p577 = pneg %p142
        $region102: #{tpu_custom_call.1} parent=83 // pred_check_branch
          %579 = sbr.rel (%p577) target = $region104
        $region103: #{tpu_custom_call.1} parent=83 // pred_region
          %580 = dma.done [#allocation9], 4096
        $region104: #{tpu_custom_call.1} parent=83 // pred_fallthru
          _
        // Predicated region
        $region105: #{tpu_custom_call.1} parent=83 // pred_check
          %p581 = pneg %p226
        $region106: #{tpu_custom_call.1} parent=83 // pred_check_branch
          %583 = sbr.rel (%p581) target = $region108
        $region107: #{tpu_custom_call.1} parent=83 // pred_region
          %584 = dma.done [#allocation12], 8192
        $region108: #{tpu_custom_call.1} parent=83 // pred_fallthru
          _
        // Predicated region
        $region109: #{tpu_custom_call.1} parent=83 // pred_check
          %p585 = pneg %p268
        $region110: #{tpu_custom_call.1} parent=83 // pred_check_branch
          %587 = sbr.rel (%p585) target = $region112
        $region111: #{tpu_custom_call.1} parent=83 // pred_region
          %588 = dma.done [#allocation12], 8192
        $region112: #{tpu_custom_call.1} parent=83 // pred_fallthru
          _
        // Predicated region
        $region113: #{tpu_custom_call.1} parent=83 // pred_check
          %p589 = pneg %p352
        $region114: #{tpu_custom_call.1} parent=83 // pred_check_branch
          %591 = sbr.rel (%p589) target = $region116
        $region115: #{tpu_custom_call.1} parent=83 // pred_region
          %592 = dma.done [#allocation15], 2048
        $region116: #{tpu_custom_call.1} parent=83 // pred_fallthru
          _
        %s593 = sand.u32 %s45, 1
        %s594 = scalar_lea.sflag [#allocation3], %s593
        %s595 = sand.u32 %s45, 1
        %s596 = smul.addr %s595, 8
        %s597 = scalar_lea.vmem [#allocation2], %s596
        %p598 = pneg %p58
        %p599 = pneg %p55
        %p600 = pneg %p79
        %p601 = pneg %p76
        %p602 = pneg %p100
        %p603 = pneg %p97
        %p604 = pneg %p121
        %p605 = pneg %p118
        %p606 = pneg %p142
        %p607 = pneg %p139
        %p608 = pneg %p163
        %p609 = pneg %p160
        %p610 = pneg %p184
        %p611 = pneg %p181
        %p612 = pneg %p205
        %p613 = pneg %p202
        %p614 = pneg %p226
        %p615 = pneg %p223
        %p616 = pneg %p247
        %p617 = pneg %p244
        %p618 = pneg %p268
        %p619 = pneg %p265
        %p620 = pneg %p289
        %p621 = pneg %p286
        %p622 = pneg %p310
        %p623 = pneg %p307
        %p624 = pneg %p331
        %p625 = pneg %p328
        %p626 = pneg %p352
        %p627 = pneg %p349
        %p628 = pneg %p373
        %p629 = pneg %p370
        %p630 = pneg %p399
        %p631 = pneg %p396
        %s632 = sand.u32 %s386, 1
        %s633 = scalar_lea.sflag [#allocation4], %s632
        %s634 = sand.u32 %s386, 1
        %s635 = smul.addr %s634, 8
        %s636 = scalar_lea.vmem [#allocation16], %s635
        %v637 = vld [vmem:[%s560] sm:$0xff]
        %v638 = vmul.f32 %v637, 11.313708
        %v639 = vld [vmem:[#allocation5] sm:$0xff]
        %v640 = vadd.f32 %v638, %v639
        %v641 = vld [vmem:[#allocation7] sm:$0xff]
        %v642 = vld [vmem:[#allocation7 + $0x8] sm:$0xff]
        %v643 = vld [vmem:[#allocation7 + $0x10] sm:$0xff]
        %v644 = vld [vmem:[#allocation7 + $0x18] sm:$0xff]
        %v645 = vld [vmem:[#allocation7 + $0x20] sm:$0xff]
        %v646 = vld [vmem:[#allocation7 + $0x28] sm:$0xff]
        %v647 = vld [vmem:[#allocation7 + $0x30] sm:$0xff]
        %v648 = vld [vmem:[#allocation7 + $0x38] sm:$0xff]
        %v649 = vld [vmem:[#allocation7 + $0x40] sm:$0xff]
        %v650 = vld [vmem:[#allocation7 + $0x48] sm:$0xff]
        %v651 = vld [vmem:[#allocation7 + $0x50] sm:$0xff]
        %v652 = vld [vmem:[#allocation7 + $0x58] sm:$0xff]
        %v653 = vld [vmem:[#allocation7 + $0x60] sm:$0xff]
        %v654 = vld [vmem:[#allocation7 + $0x68] sm:$0xff]
        %v655 = vld [vmem:[#allocation7 + $0x70] sm:$0xff]
        %v656 = vld [vmem:[#allocation7 + $0x78] sm:$0xff]
        %v657 = vld [vmem:[#allocation7 + $0x80] sm:$0xff]
        %v658 = vld [vmem:[#allocation7 + $0x88] sm:$0xff]
        %v659 = vld [vmem:[#allocation7 + $0x90] sm:$0xff]
        %v660 = vld [vmem:[#allocation7 + $0x98] sm:$0xff]
        %v661 = vld [vmem:[#allocation7 + $0xa0] sm:$0xff]
        %v662 = vld [vmem:[#allocation7 + $0xa8] sm:$0xff]
        %v663 = vld [vmem:[#allocation7 + $0xb0] sm:$0xff]
        %v664 = vld [vmem:[#allocation7 + $0xb8] sm:$0xff]
        %v665 = vld [vmem:[#allocation7 + $0xc0] sm:$0xff]
        %v666 = vld [vmem:[#allocation7 + $0xc8] sm:$0xff]
        %v667 = vld [vmem:[#allocation7 + $0xd0] sm:$0xff]
        %v668 = vld [vmem:[#allocation7 + $0xd8] sm:$0xff]
        %v669 = vld [vmem:[#allocation7 + $0xe0] sm:$0xff]
        %v670 = vld [vmem:[#allocation7 + $0xe8] sm:$0xff]
        %v671 = vld [vmem:[#allocation7 + $0xf0] sm:$0xff]
        %v672 = vld [vmem:[#allocation7 + $0xf8] sm:$0xff]
        %v673 = vld [vmem:[#allocation7 + $0x100] sm:$0xff]
        %v674 = vld [vmem:[#allocation7 + $0x108] sm:$0xff]
        %v675 = vld [vmem:[#allocation7 + $0x110] sm:$0xff]
        %v676 = vld [vmem:[#allocation7 + $0x118] sm:$0xff]
        %v677 = vld [vmem:[#allocation7 + $0x120] sm:$0xff]
        %v678 = vld [vmem:[#allocation7 + $0x128] sm:$0xff]
        %v679 = vld [vmem:[#allocation7 + $0x130] sm:$0xff]
        %v680 = vld [vmem:[#allocation7 + $0x138] sm:$0xff]
        %v681 = vld [vmem:[#allocation7 + $0x140] sm:$0xff]
        %v682 = vld [vmem:[#allocation7 + $0x148] sm:$0xff]
        %v683 = vld [vmem:[#allocation7 + $0x150] sm:$0xff]
        %v684 = vld [vmem:[#allocation7 + $0x158] sm:$0xff]
        %v685 = vld [vmem:[#allocation7 + $0x160] sm:$0xff]
        %v686 = vld [vmem:[#allocation7 + $0x168] sm:$0xff]
        %v687 = vld [vmem:[#allocation7 + $0x170] sm:$0xff]
        %v688 = vld [vmem:[#allocation7 + $0x178] sm:$0xff]
        %v689 = vld [vmem:[#allocation8] sm:$0x7]
        %v690 = vld [vmem:[#allocation10] sm:$0xff]
        %v691 = vld [vmem:[#allocation10 + $0x8] sm:$0xff]
        %v692 = vld [vmem:[#allocation10 + $0x10] sm:$0xff]
        %v693 = vld [vmem:[#allocation10 + $0x18] sm:$0xff]
        %v694 = vld [vmem:[#allocation10 + $0x20] sm:$0xff]
        %v695 = vld [vmem:[#allocation10 + $0x28] sm:$0xff]
        %v696 = vld [vmem:[#allocation10 + $0x30] sm:$0xff]
        %v697 = vld [vmem:[#allocation10 + $0x38] sm:$0xff]
        %v698 = vld [vmem:[#allocation10 + $0x40] sm:$0xff]
        %v699 = vld [vmem:[#allocation10 + $0x48] sm:$0xff]
        %v700 = vld [vmem:[#allocation10 + $0x50] sm:$0xff]
        %v701 = vld [vmem:[#allocation10 + $0x58] sm:$0xff]
        %v702 = vld [vmem:[#allocation10 + $0x60] sm:$0xff]
        %v703 = vld [vmem:[#allocation10 + $0x68] sm:$0xff]
        %v704 = vld [vmem:[#allocation10 + $0x70] sm:$0xff]
        %v705 = vld [vmem:[#allocation10 + $0x78] sm:$0xff]
        %v706 = vld [vmem:[%s5] sm:$0x1]
        %v707 = vld [vmem:[%s6] sm:$0x1]
        %v708 = vld [vmem:[%s7] sm:$0x1]
        %v709 = vld [vmem:[#allocation11] sm:$0xff]
        %v710 = vld [vmem:[#allocation11 + $0x8] sm:$0xff]
        %v711 = vld [vmem:[#allocation11 + $0x10] sm:$0xff]
        %v712 = vld [vmem:[#allocation11 + $0x18] sm:$0xff]
        %v713 = vld [vmem:[#allocation11 + $0x20] sm:$0xff]
        %v714 = vld [vmem:[#allocation11 + $0x28] sm:$0xff]
        %v715 = vld [vmem:[#allocation11 + $0x30] sm:$0xff]
        %v716 = vld [vmem:[#allocation11 + $0x38] sm:$0xff]
        %v717 = vld [vmem:[#allocation11 + $0x40] sm:$0xff]
        %v718 = vld [vmem:[#allocation11 + $0x48] sm:$0xff]
        %v719 = vld [vmem:[#allocation11 + $0x50] sm:$0xff]
        %v720 = vld [vmem:[#allocation11 + $0x58] sm:$0xff]
        %v721 = vld [vmem:[#allocation11 + $0x60] sm:$0xff]
        %v722 = vld [vmem:[#allocation11 + $0x68] sm:$0xff]
        %v723 = vld [vmem:[#allocation11 + $0x70] sm:$0xff]
        %v724 = vld [vmem:[#allocation11 + $0x78] sm:$0xff]
        %v725 = vld [vmem:[#allocation11 + $0x80] sm:$0xff]
        %v726 = vld [vmem:[#allocation11 + $0x88] sm:$0xff]
        %v727 = vld [vmem:[#allocation11 + $0x90] sm:$0xff]
        %v728 = vld [vmem:[#allocation11 + $0x98] sm:$0xff]
        %v729 = vld [vmem:[#allocation11 + $0xa0] sm:$0xff]
        %v730 = vld [vmem:[#allocation11 + $0xa8] sm:$0xff]
        %v731 = vld [vmem:[#allocation11 + $0xb0] sm:$0xff]
        %v732 = vld [vmem:[#allocation11 + $0xb8] sm:$0xff]
        %v733 = vld [vmem:[#allocation11 + $0xc0] sm:$0xff]
        %v734 = vld [vmem:[#allocation11 + $0xc8] sm:$0xff]
        %v735 = vld [vmem:[#allocation11 + $0xd0] sm:$0xff]
        %v736 = vld [vmem:[#allocation11 + $0xd8] sm:$0xff]
        %v737 = vld [vmem:[#allocation11 + $0xe0] sm:$0xff]
        %v738 = vld [vmem:[#allocation11 + $0xe8] sm:$0xff]
        %v739 = vld [vmem:[#allocation11 + $0xf0] sm:$0xff]
        %v740 = vld [vmem:[#allocation11 + $0xf8] sm:$0xff]
        %v741 = vld [vmem:[%s9] sm:$0x3]
        %v742 = vld [vmem:[#allocation13] sm:$0xff]
        %v743 = vld [vmem:[#allocation13 + $0x8] sm:$0xff]
        %v744 = vld [vmem:[#allocation13 + $0x10] sm:$0xff]
        %v745 = vld [vmem:[#allocation13 + $0x18] sm:$0xff]
        %v746 = vld [vmem:[#allocation13 + $0x20] sm:$0xff]
        %v747 = vld [vmem:[#allocation13 + $0x28] sm:$0xff]
        %v748 = vld [vmem:[#allocation13 + $0x30] sm:$0xff]
        %v749 = vld [vmem:[#allocation13 + $0x38] sm:$0xff]
        %v750 = vld [vmem:[#allocation13 + $0x40] sm:$0xff]
        %v751 = vld [vmem:[#allocation13 + $0x48] sm:$0xff]
        %v752 = vld [vmem:[#allocation13 + $0x50] sm:$0xff]
        %v753 = vld [vmem:[#allocation13 + $0x58] sm:$0xff]
        %v754 = vld [vmem:[#allocation13 + $0x60] sm:$0xff]
        %v755 = vld [vmem:[#allocation13 + $0x68] sm:$0xff]
        %v756 = vld [vmem:[#allocation13 + $0x70] sm:$0xff]
        %v757 = vld [vmem:[#allocation13 + $0x78] sm:$0xff]
        %v758 = vld [vmem:[#allocation13 + $0x80] sm:$0xff]
        %v759 = vld [vmem:[#allocation13 + $0x88] sm:$0xff]
        %v760 = vld [vmem:[#allocation13 + $0x90] sm:$0xff]
        %v761 = vld [vmem:[#allocation13 + $0x98] sm:$0xff]
        %v762 = vld [vmem:[#allocation13 + $0xa0] sm:$0xff]
        %v763 = vld [vmem:[#allocation13 + $0xa8] sm:$0xff]
        %v764 = vld [vmem:[#allocation13 + $0xb0] sm:$0xff]
        %v765 = vld [vmem:[#allocation13 + $0xb8] sm:$0xff]
        %v766 = vld [vmem:[#allocation13 + $0xc0] sm:$0xff]
        %v767 = vld [vmem:[#allocation13 + $0xc8] sm:$0xff]
        %v768 = vld [vmem:[#allocation13 + $0xd0] sm:$0xff]
        %v769 = vld [vmem:[#allocation13 + $0xd8] sm:$0xff]
        %v770 = vld [vmem:[#allocation13 + $0xe0] sm:$0xff]
        %v771 = vld [vmem:[#allocation13 + $0xe8] sm:$0xff]
        %v772 = vld [vmem:[#allocation13 + $0xf0] sm:$0xff]
        %v773 = vld [vmem:[#allocation13 + $0xf8] sm:$0xff]
        %v774 = vld [vmem:[%s11] sm:$0x1]
        %v775 = vld [vmem:[%s12] sm:$0x1]
        %v776 = vld [vmem:[%s13] sm:$0x1]
        %v778 = vlaneseq
        %v779 = vshrl.u32 %v778, 7
        %v780 = vsub.s32 0, %v779
        %v781 = vrot.slane %v689, %v780
        %v782 = vlaneseq
        %v783 = vshrl.u32 %v782, 7
        %v784 = vsub.s32 1, %v783
        %v785 = vrot.slane %v689, %v784
        %v786 = vlaneseq
        %v787 = vshrl.u32 %v786, 7
        %v788 = vsub.s32 2, %v787
        %v789 = vrot.slane %v689, %v788
        %793 = vmatprep.subr.mxu0 %v687
        %794 = vmatpush1.msra.mxu0 %v686
        %795 = vmatprep.subr.mxu0 %v684
        %796 = vmatpush1.msra.mxu0 %v683
        %797 = vmatprep.subr.mxu0 %v681
        %798 = vmatpush1.msra.mxu0 %v680
        %799 = vmatprep.subr.mxu0 %v678
        %800 = vmatpush1.msra.mxu0 %v677
        %801 = vmatprep.subr.mxu0 %v675
        %802 = vmatpush1.msra.mxu0 %v674
        %803 = vmatprep.subr.mxu0 %v672
        %804 = vmatpush1.msra.mxu0 %v671
        %805 = vmatprep.subr.mxu0 %v669
        %806 = vmatpush1.msra.mxu0 %v668
        %807 = vmatprep.subr.mxu0 %v666
        %808 = vmatpush1.msra.mxu0 %v665
        %809 = vmatprep.subr.mxu0 %v663
        %810 = vmatpush1.msra.mxu0 %v662
        %811 = vmatprep.subr.mxu0 %v660
        %812 = vmatpush1.msra.mxu0 %v659
        %813 = vmatprep.subr.mxu0 %v657
        %814 = vmatpush1.msra.mxu0 %v656
        %815 = vmatprep.subr.mxu0 %v654
        %816 = vmatpush1.msra.mxu0 %v653
        %817 = vmatprep.subr.mxu0 %v651
        %818 = vmatpush1.msra.mxu0 %v650
        %819 = vmatprep.subr.mxu0 %v648
        %820 = vmatpush1.msra.mxu0 %v647
        %821 = vmatprep.subr.mxu0 %v645
        %822 = vmatpush1.msra.mxu0 %v644
        %823 = vmatprep.subr.mxu0 %v642
        %824 = vmatpush1.msra.mxu0 %v641
        %825 = vmatprep.subr.mxu0 0.0
        %826 = vmatpush2.msra.mxu0 0.0
        %827 = vmatprep.subr.mxu0 0.0
        %828 = vmatpush2.msra.mxu0 0.0
        %829 = vmatprep.subr.mxu0 0.0
        %830 = vmatpush2.msra.mxu0 0.0
        %831 = vmatprep.subr.mxu0 0.0
        %832 = vmatpush2.msra.mxu0 0.0
        %833 = vmatprep.subr.mxu0 0.0
        %834 = vmatpush2.msra.mxu0 0.0
        %835 = vmatprep.subr.mxu0 0.0
        %836 = vmatpush2.msra.mxu0 0.0
        %837 = vmatprep.subr.mxu0 0.0
        %838 = vmatpush2.msra.mxu0 0.0
        %839 = vmatprep.subr.mxu0 0.0
        %840 = vmatpush2.msra.mxu0 0.0
        %841 = vmatprep.subr.mxu0 0.0
        %842 = vmatpush2.msra.mxu0 0.0
        %843 = vmatprep.subr.mxu0 0.0
        %844 = vmatpush2.msra.mxu0 0.0
        %845 = vmatprep.subr.mxu0 0.0
        %846 = vmatpush2.msra.mxu0 0.0
        %847 = vmatprep.subr.mxu0 0.0
        %848 = vmatpush2.msra.mxu0 0.0
        %849 = vmatprep.subr.mxu0 0.0
        %850 = vmatpush2.msra.mxu0 0.0
        %851 = vmatprep.subr.mxu0 0.0
        %852 = vmatpush2.msra.mxu0 0.0
        %853 = vmatprep.subr.mxu0 0.0
        %854 = vmatpush2.msra.mxu0 0.0
        %855 = vmatprep.subr.mxu0 0.0
        %856 = vmatpush2.msra.mxu0 0.0
        %857 = vmatprep.mubr.f32.mxu0 0.0
        %858 = vmatmul.mubr.f32.gmra.mxu0 %v640
        %v859 = vpop.f32.mrf.mxu0
        %v860 = vadd.f32 %v781, %v859
        %v861 = vpop.f32.mrf.mxu0
        %v862 = vadd.f32 %v785, %v861
        %863 = vdwg.mxu0
        %864 = vmatprep.subr.mxu0 0.0
        %865 = vmatpush1.msra.mxu0 %v688
        %866 = vmatprep.subr.mxu0 0.0
        %867 = vmatpush1.msra.mxu0 %v685
        %868 = vmatprep.subr.mxu0 0.0
        %869 = vmatpush1.msra.mxu0 %v682
        %870 = vmatprep.subr.mxu0 0.0
        %871 = vmatpush1.msra.mxu0 %v679
        %872 = vmatprep.subr.mxu0 0.0
        %873 = vmatpush1.msra.mxu0 %v676
        %874 = vmatprep.subr.mxu0 0.0
        %875 = vmatpush1.msra.mxu0 %v673
        %876 = vmatprep.subr.mxu0 0.0
        %877 = vmatpush1.msra.mxu0 %v670
        %878 = vmatprep.subr.mxu0 0.0
        %879 = vmatpush1.msra.mxu0 %v667
        %880 = vmatprep.subr.mxu0 0.0
        %881 = vmatpush1.msra.mxu0 %v664
        %882 = vmatprep.subr.mxu0 0.0
        %883 = vmatpush1.msra.mxu0 %v661
        %884 = vmatprep.subr.mxu0 0.0
        %885 = vmatpush1.msra.mxu0 %v658
        %886 = vmatprep.subr.mxu0 0.0
        %887 = vmatpush1.msra.mxu0 %v655
        %888 = vmatprep.subr.mxu0 0.0
        %889 = vmatpush1.msra.mxu0 %v652
        %890 = vmatprep.subr.mxu0 0.0
        %891 = vmatpush1.msra.mxu0 %v649
        %892 = vmatprep.subr.mxu0 0.0
        %893 = vmatpush1.msra.mxu0 %v646
        %894 = vmatprep.subr.mxu0 0.0
        %895 = vmatpush1.msra.mxu0 %v643
        %896 = vmatprep.subr.mxu0 0.0
        %897 = vmatpush2.msra.mxu0 0.0
        %898 = vmatprep.subr.mxu0 0.0
        %899 = vmatpush2.msra.mxu0 0.0
        %900 = vmatprep.subr.mxu0 0.0
        %901 = vmatpush2.msra.mxu0 0.0
        %902 = vmatprep.subr.mxu0 0.0
        %903 = vmatpush2.msra.mxu0 0.0
        %904 = vmatprep.subr.mxu0 0.0
        %905 = vmatpush2.msra.mxu0 0.0
        %906 = vmatprep.subr.mxu0 0.0
        %907 = vmatpush2.msra.mxu0 0.0
        %908 = vmatprep.subr.mxu0 0.0
        %909 = vmatpush2.msra.mxu0 0.0
        %910 = vmatprep.subr.mxu0 0.0
        %911 = vmatpush2.msra.mxu0 0.0
        %912 = vmatprep.subr.mxu0 0.0
        %913 = vmatpush2.msra.mxu0 0.0
        %914 = vmatprep.subr.mxu0 0.0
        %915 = vmatpush2.msra.mxu0 0.0
        %916 = vmatprep.subr.mxu0 0.0
        %917 = vmatpush2.msra.mxu0 0.0
        %918 = vmatprep.subr.mxu0 0.0
        %919 = vmatpush2.msra.mxu0 0.0
        %920 = vmatprep.subr.mxu0 0.0
        %921 = vmatpush2.msra.mxu0 0.0
        %922 = vmatprep.subr.mxu0 0.0
        %923 = vmatpush2.msra.mxu0 0.0
        %924 = vmatprep.subr.mxu0 0.0
        %925 = vmatpush2.msra.mxu0 0.0
        %926 = vmatprep.subr.mxu0 0.0
        %927 = vmatpush2.msra.mxu0 0.0
        %928 = vmatprep.mubr.f32.mxu0 0.0
        %929 = vmatmul.mubr.f32.gmra.mxu0 %v640
        %v930 = vpop.f32.mrf.mxu0
        %v931 = vadd.f32 %v789, %v930
        %v932 = vpop.f32.mrf.mxu0
        %933 = vdwg.mxu0
        %vm934 = vcmask 261120
        %v936 = vsel %vm934, %v860, 0
        %v939 = vsel %vm934, %v862, 0
        %941 = vmatprep.subr.mxu0 0.0
        %942 = vmatpush1.xpose.msra.mxu0 0.0
        %943 = vmatprep.subr.mxu0 0.0
        %944 = vmatpush1.xpose.msra.mxu0 0.0
        %945 = vmatprep.subr.mxu0 0.0
        %946 = vmatpush1.xpose.msra.mxu0 0.0
        %947 = vmatprep.subr.mxu0 0.0
        %948 = vmatpush1.xpose.msra.mxu0 0.0
        %949 = vmatprep.subr.mxu0 0.0
        %950 = vmatpush1.xpose.msra.mxu0 0.0
        %951 = vmatprep.subr.mxu0 0.0
        %952 = vmatpush1.xpose.msra.mxu0 0.0
        %953 = vmatprep.subr.mxu0 0.0
        %954 = vmatpush1.xpose.msra.mxu0 0.0
        %955 = vmatprep.subr.mxu0 0.0
        %956 = vmatpush1.xpose.msra.mxu0 0.0
        %957 = vmatprep.subr.mxu0 0.0
        %958 = vmatpush1.xpose.msra.mxu0 0.0
        %959 = vmatprep.subr.mxu0 0.0
        %960 = vmatpush1.xpose.msra.mxu0 0.0
        %961 = vmatprep.subr.mxu0 0.0
        %962 = vmatpush1.xpose.msra.mxu0 0.0
        %963 = vmatprep.subr.mxu0 0.0
        %964 = vmatpush1.xpose.msra.mxu0 0.0
        %965 = vmatprep.subr.mxu0 0.0
        %966 = vmatpush1.xpose.msra.mxu0 0.0
        %967 = vmatprep.subr.mxu0 0.0
        %968 = vmatpush1.xpose.msra.mxu0 0.0
        %969 = vmatprep.subr.mxu0 0.0
        %970 = vmatpush1.xpose.msra.mxu0 0.0
        %971 = vmatprep.subr.mxu0 0.0
        %972 = vmatpush1.xpose.msra.mxu0 %v939
        %973 = vmatprep.subr.mxu0 0.0
        %974 = vmatpush2.xpose.msra.mxu0 0.0
        %975 = vmatprep.subr.mxu0 0.0
        %976 = vmatpush2.xpose.msra.mxu0 0.0
        %977 = vmatprep.subr.mxu0 0.0
        %978 = vmatpush2.xpose.msra.mxu0 0.0
        %979 = vmatprep.subr.mxu0 0.0
        %980 = vmatpush2.xpose.msra.mxu0 0.0
        %981 = vmatprep.subr.mxu0 0.0
        %982 = vmatpush2.xpose.msra.mxu0 0.0
        %983 = vmatprep.subr.mxu0 0.0
        %984 = vmatpush2.xpose.msra.mxu0 0.0
        %985 = vmatprep.subr.mxu0 0.0
        %986 = vmatpush2.xpose.msra.mxu0 0.0
        %987 = vmatprep.subr.mxu0 0.0
        %988 = vmatpush2.xpose.msra.mxu0 0.0
        %989 = vmatprep.subr.mxu0 0.0
        %990 = vmatpush2.xpose.msra.mxu0 0.0
        %991 = vmatprep.subr.mxu0 0.0
        %992 = vmatpush2.xpose.msra.mxu0 0.0
        %993 = vmatprep.subr.mxu0 0.0
        %994 = vmatpush2.xpose.msra.mxu0 0.0
        %995 = vmatprep.subr.mxu0 0.0
        %996 = vmatpush2.xpose.msra.mxu0 0.0
        %997 = vmatprep.subr.mxu0 0.0
        %998 = vmatpush2.xpose.msra.mxu0 0.0
        %999 = vmatprep.subr.mxu0 0.0
        %1000 = vmatpush2.xpose.msra.mxu0 0.0
        %1001 = vmatprep.subr.mxu0 0.0
        %1002 = vmatpush2.xpose.msra.mxu0 0.0
        %1003 = vmatprep.subr.mxu0 0.0
        %1004 = vmatpush2.xpose.msra.mxu0 0.0
        %1005 = vmatprep.mubr.f32.mxu0 0.0
        %1006 = vmatmul.mubr.f32.gmra.mxu0 %v936
        %v1007 = vpop.f32.mrf.mxu0
        %v1008 = vadd.f32 0.0, %v1007
        %v1009 = vpop.f32.mrf.mxu0
        %1010 = vdwg.mxu0
        %v1011 = vmul.f32 %v1008, 0.17677669
        %vm1012 = vcmask 64512
        %v1013 = vsel %vm1012, %v1011, -inf
        %1014 = vmax.xlane.f32.xlu0 %v1013
        %v1015 = vpop.xlane.xlu0 %1014
        %v1016 = vsub.f32 %v1011, %v1015
        %v1017 = vmul.f32 %v1016, 1.442695
        %v1018 = vpow.pop %v1017
        %v1019 = vsel %vm1012, %v1018, 0.0
        %1020 = vadd.xlane.f32.xlu0 %v1019
        %v1021 = vpop.xlane.xlu0 %1020
        %v1022 = vrcp.pop %v1021
        %v1023 = vmul.f32 %v1018, %v1022
        %v1025 = vsel %vm1012, %v1023, 0
        %1027 = vmatprep.subr.mxu0 0.0
        %1028 = vmatpush1.msra.mxu0 0.0
        %1029 = vmatprep.subr.mxu0 0.0
        %1030 = vmatpush1.msra.mxu0 0.0
        %1031 = vmatprep.subr.mxu0 0.0
        %1032 = vmatpush1.msra.mxu0 0.0
        %1033 = vmatprep.subr.mxu0 0.0
        %1034 = vmatpush1.msra.mxu0 0.0
        %1035 = vmatprep.subr.mxu0 0.0
        %1036 = vmatpush1.msra.mxu0 0.0
        %1037 = vmatprep.subr.mxu0 0.0
        %1038 = vmatpush1.msra.mxu0 0.0
        %1039 = vmatprep.subr.mxu0 0.0
        %1040 = vmatpush1.msra.mxu0 0.0
        %1041 = vmatprep.subr.mxu0 0.0
        %1042 = vmatpush1.msra.mxu0 0.0
        %1043 = vmatprep.subr.mxu0 0.0
        %1044 = vmatpush1.msra.mxu0 0.0
        %1045 = vmatprep.subr.mxu0 0.0
        %1046 = vmatpush1.msra.mxu0 0.0
        %1047 = vmatprep.subr.mxu0 0.0
        %1048 = vmatpush1.msra.mxu0 0.0
        %1049 = vmatprep.subr.mxu0 0.0
        %1050 = vmatpush1.msra.mxu0 0.0
        %1051 = vmatprep.subr.mxu0 0.0
        %1052 = vmatpush1.msra.mxu0 0.0
        %1053 = vmatprep.subr.mxu0 0.0
        %1054 = vmatpush1.msra.mxu0 0.0
        %1055 = vmatprep.subr.mxu0 0.0
        %1056 = vmatpush1.msra.mxu0 0.0
        %1057 = vmatprep.subr.mxu0 0.0
        %1058 = vmatpush1.msra.mxu0 %v931
        %1059 = vmatprep.subr.mxu0 0.0
        %1060 = vmatpush2.msra.mxu0 0.0
        %1061 = vmatprep.subr.mxu0 0.0
        %1062 = vmatpush2.msra.mxu0 0.0
        %1063 = vmatprep.subr.mxu0 0.0
        %1064 = vmatpush2.msra.mxu0 0.0
        %1065 = vmatprep.subr.mxu0 0.0
        %1066 = vmatpush2.msra.mxu0 0.0
        %1067 = vmatprep.subr.mxu0 0.0
        %1068 = vmatpush2.msra.mxu0 0.0
        %1069 = vmatprep.subr.mxu0 0.0
        %1070 = vmatpush2.msra.mxu0 0.0
        %1071 = vmatprep.subr.mxu0 0.0
        %1072 = vmatpush2.msra.mxu0 0.0
        %1073 = vmatprep.subr.mxu0 0.0
        %1074 = vmatpush2.msra.mxu0 0.0
        %1075 = vmatprep.subr.mxu0 0.0
        %1076 = vmatpush2.msra.mxu0 0.0
        %1077 = vmatprep.subr.mxu0 0.0
        %1078 = vmatpush2.msra.mxu0 0.0
        %1079 = vmatprep.subr.mxu0 0.0
        %1080 = vmatpush2.msra.mxu0 0.0
        %1081 = vmatprep.subr.mxu0 0.0
        %1082 = vmatpush2.msra.mxu0 0.0
        %1083 = vmatprep.subr.mxu0 0.0
        %1084 = vmatpush2.msra.mxu0 0.0
        %1085 = vmatprep.subr.mxu0 0.0
        %1086 = vmatpush2.msra.mxu0 0.0
        %1087 = vmatprep.subr.mxu0 0.0
        %1088 = vmatpush2.msra.mxu0 0.0
        %1089 = vmatprep.subr.mxu0 0.0
        %1090 = vmatpush2.msra.mxu0 0.0
        %1091 = vmatprep.mubr.f32.mxu0 0.0
        %1092 = vmatmul.mubr.f32.gmra.mxu0 %v1025
        %v1093 = vpop.f32.mrf.mxu0
        %v1094 = vadd.f32 0.0, %v1093
        %v1095 = vpop.f32.mrf.mxu0
        %1096 = vdwg.mxu0
        %1097 = vrot.lane.b32.xlu0 %v860, 96
        %v1098 = vpop.permute.xlu0 %1097
        %1099 = vrot.lane.b32.xlu0 %v862, 96
        %v1100 = vpop.permute.xlu0 %1099
        %v1101 = vsel %vm934, %v1098, 0
        %v1103 = vsel %vm934, %v1100, 0
        %1105 = vmatprep.subr.mxu0 0.0
        %1106 = vmatpush1.xpose.msra.mxu0 0.0
        %1107 = vmatprep.subr.mxu0 0.0
        %1108 = vmatpush1.xpose.msra.mxu0 0.0
        %1109 = vmatprep.subr.mxu0 0.0
        %1110 = vmatpush1.xpose.msra.mxu0 0.0
        %1111 = vmatprep.subr.mxu0 0.0
        %1112 = vmatpush1.xpose.msra.mxu0 0.0
        %1113 = vmatprep.subr.mxu0 0.0
        %1114 = vmatpush1.xpose.msra.mxu0 0.0
        %1115 = vmatprep.subr.mxu0 0.0
        %1116 = vmatpush1.xpose.msra.mxu0 0.0
        %1117 = vmatprep.subr.mxu0 0.0
        %1118 = vmatpush1.xpose.msra.mxu0 0.0
        %1119 = vmatprep.subr.mxu0 0.0
        %1120 = vmatpush1.xpose.msra.mxu0 0.0
        %1121 = vmatprep.subr.mxu0 0.0
        %1122 = vmatpush1.xpose.msra.mxu0 0.0
        %1123 = vmatprep.subr.mxu0 0.0
        %1124 = vmatpush1.xpose.msra.mxu0 0.0
        %1125 = vmatprep.subr.mxu0 0.0
        %1126 = vmatpush1.xpose.msra.mxu0 0.0
        %1127 = vmatprep.subr.mxu0 0.0
        %1128 = vmatpush1.xpose.msra.mxu0 0.0
        %1129 = vmatprep.subr.mxu0 0.0
        %1130 = vmatpush1.xpose.msra.mxu0 0.0
        %1131 = vmatprep.subr.mxu0 0.0
        %1132 = vmatpush1.xpose.msra.mxu0 0.0
        %1133 = vmatprep.subr.mxu0 0.0
        %1134 = vmatpush1.xpose.msra.mxu0 0.0
        %1135 = vmatprep.subr.mxu0 0.0
        %1136 = vmatpush1.xpose.msra.mxu0 %v1103
        %1137 = vmatprep.subr.mxu0 0.0
        %1138 = vmatpush2.xpose.msra.mxu0 0.0
        %1139 = vmatprep.subr.mxu0 0.0
        %1140 = vmatpush2.xpose.msra.mxu0 0.0
        %1141 = vmatprep.subr.mxu0 0.0
        %1142 = vmatpush2.xpose.msra.mxu0 0.0
        %1143 = vmatprep.subr.mxu0 0.0
        %1144 = vmatpush2.xpose.msra.mxu0 0.0
        %1145 = vmatprep.subr.mxu0 0.0
        %1146 = vmatpush2.xpose.msra.mxu0 0.0
        %1147 = vmatprep.subr.mxu0 0.0
        %1148 = vmatpush2.xpose.msra.mxu0 0.0
        %1149 = vmatprep.subr.mxu0 0.0
        %1150 = vmatpush2.xpose.msra.mxu0 0.0
        %1151 = vmatprep.subr.mxu0 0.0
        %1152 = vmatpush2.xpose.msra.mxu0 0.0
        %1153 = vmatprep.subr.mxu0 0.0
        %1154 = vmatpush2.xpose.msra.mxu0 0.0
        %1155 = vmatprep.subr.mxu0 0.0
        %1156 = vmatpush2.xpose.msra.mxu0 0.0
        %1157 = vmatprep.subr.mxu0 0.0
        %1158 = vmatpush2.xpose.msra.mxu0 0.0
        %1159 = vmatprep.subr.mxu0 0.0
        %1160 = vmatpush2.xpose.msra.mxu0 0.0
        %1161 = vmatprep.subr.mxu0 0.0
        %1162 = vmatpush2.xpose.msra.mxu0 0.0
        %1163 = vmatprep.subr.mxu0 0.0
        %1164 = vmatpush2.xpose.msra.mxu0 0.0
        %1165 = vmatprep.subr.mxu0 0.0
        %1166 = vmatpush2.xpose.msra.mxu0 0.0
        %1167 = vmatprep.subr.mxu0 0.0
        %1168 = vmatpush2.xpose.msra.mxu0 0.0
        %1169 = vmatprep.mubr.f32.mxu0 0.0
        %1170 = vmatmul.mubr.f32.gmra.mxu0 %v1101
        %v1171 = vpop.f32.mrf.mxu0
        %v1172 = vadd.f32 0.0, %v1171
        %v1173 = vpop.f32.mrf.mxu0
        %1174 = vdwg.mxu0
        %v1175 = vmul.f32 %v1172, 0.17677669
        %v1176 = vsel %vm1012, %v1175, -inf
        %1177 = vmax.xlane.f32.xlu0 %v1176
        %v1178 = vpop.xlane.xlu0 %1177
        %v1179 = vsub.f32 %v1175, %v1178
        %v1180 = vmul.f32 %v1179, 1.442695
        %v1181 = vpow.pop %v1180
        %v1182 = vsel %vm1012, %v1181, 0.0
        %1183 = vadd.xlane.f32.xlu0 %v1182
        %v1184 = vpop.xlane.xlu0 %1183
        %v1185 = vrcp.pop %v1184
        %v1186 = vmul.f32 %v1181, %v1185
        %1188 = vrot.lane.b32.xlu0 %v931, 96
        %v1189 = vpop.permute.xlu0 %1188
        %v1192 = vsel %vm1012, %v1186, 0
        %1194 = vmatprep.subr.mxu0 0.0
        %1195 = vmatpush1.msra.mxu0 0.0
        %1196 = vmatprep.subr.mxu0 0.0
        %1197 = vmatpush1.msra.mxu0 0.0
        %1198 = vmatprep.subr.mxu0 0.0
        %1199 = vmatpush1.msra.mxu0 0.0
        %1200 = vmatprep.subr.mxu0 0.0
        %1201 = vmatpush1.msra.mxu0 0.0
        %1202 = vmatprep.subr.mxu0 0.0
        %1203 = vmatpush1.msra.mxu0 0.0
        %1204 = vmatprep.subr.mxu0 0.0
        %1205 = vmatpush1.msra.mxu0 0.0
        %1206 = vmatprep.subr.mxu0 0.0
        %1207 = vmatpush1.msra.mxu0 0.0
        %1208 = vmatprep.subr.mxu0 0.0
        %1209 = vmatpush1.msra.mxu0 0.0
        %1210 = vmatprep.subr.mxu0 0.0
        %1211 = vmatpush1.msra.mxu0 0.0
        %1212 = vmatprep.subr.mxu0 0.0
        %1213 = vmatpush1.msra.mxu0 0.0
        %1214 = vmatprep.subr.mxu0 0.0
        %1215 = vmatpush1.msra.mxu0 0.0
        %1216 = vmatprep.subr.mxu0 0.0
        %1217 = vmatpush1.msra.mxu0 0.0
        %1218 = vmatprep.subr.mxu0 0.0
        %1219 = vmatpush1.msra.mxu0 0.0
        %1220 = vmatprep.subr.mxu0 0.0
        %1221 = vmatpush1.msra.mxu0 0.0
        %1222 = vmatprep.subr.mxu0 0.0
        %1223 = vmatpush1.msra.mxu0 0.0
        %1224 = vmatprep.subr.mxu0 0.0
        %1225 = vmatpush1.msra.mxu0 %v1189
        %1226 = vmatprep.subr.mxu0 0.0
        %1227 = vmatpush2.msra.mxu0 0.0
        %1228 = vmatprep.subr.mxu0 0.0
        %1229 = vmatpush2.msra.mxu0 0.0
        %1230 = vmatprep.subr.mxu0 0.0
        %1231 = vmatpush2.msra.mxu0 0.0
        %1232 = vmatprep.subr.mxu0 0.0
        %1233 = vmatpush2.msra.mxu0 0.0
        %1234 = vmatprep.subr.mxu0 0.0
        %1235 = vmatpush2.msra.mxu0 0.0
        %1236 = vmatprep.subr.mxu0 0.0
        %1237 = vmatpush2.msra.mxu0 0.0
        %1238 = vmatprep.subr.mxu0 0.0
        %1239 = vmatpush2.msra.mxu0 0.0
        %1240 = vmatprep.subr.mxu0 0.0
        %1241 = vmatpush2.msra.mxu0 0.0
        %1242 = vmatprep.subr.mxu0 0.0
        %1243 = vmatpush2.msra.mxu0 0.0
        %1244 = vmatprep.subr.mxu0 0.0
        %1245 = vmatpush2.msra.mxu0 0.0
        %1246 = vmatprep.subr.mxu0 0.0
        %1247 = vmatpush2.msra.mxu0 0.0
        %1248 = vmatprep.subr.mxu0 0.0
        %1249 = vmatpush2.msra.mxu0 0.0
        %1250 = vmatprep.subr.mxu0 0.0
        %1251 = vmatpush2.msra.mxu0 0.0
        %1252 = vmatprep.subr.mxu0 0.0
        %1253 = vmatpush2.msra.mxu0 0.0
        %1254 = vmatprep.subr.mxu0 0.0
        %1255 = vmatpush2.msra.mxu0 0.0
        %1256 = vmatprep.subr.mxu0 0.0
        %1257 = vmatpush2.msra.mxu0 0.0
        %1258 = vmatprep.mubr.f32.mxu0 0.0
        %1259 = vmatmul.mubr.f32.gmra.mxu0 %v1192
        %v1260 = vpop.f32.mrf.mxu0
        %v1261 = vadd.f32 0.0, %v1260
        %v1262 = vpop.f32.mrf.mxu0
        %1263 = vdwg.mxu0
        %v1265 = vsel %vm934, %v1261, 0
        %1267 = vmatprep.subr.mxu0 0.0
        %1268 = vmatpush1.msra.mxu0 0.0
        %1269 = vmatprep.subr.mxu0 0.0
        %1270 = vmatpush1.msra.mxu0 0.0
        %1271 = vmatprep.subr.mxu0 0.0
        %1272 = vmatpush1.msra.mxu0 0.0
        %1273 = vmatprep.subr.mxu0 0.0
        %1274 = vmatpush1.msra.mxu0 0.0
        %1275 = vmatprep.subr.mxu0 0.0
        %1276 = vmatpush1.msra.mxu0 0.0
        %1277 = vmatprep.subr.mxu0 0.0
        %1278 = vmatpush1.msra.mxu0 0.0
        %1279 = vmatprep.subr.mxu0 0.0
        %1280 = vmatpush1.msra.mxu0 0.0
        %1281 = vmatprep.subr.mxu0 0.0
        %1282 = vmatpush1.msra.mxu0 0.0
        %1283 = vmatprep.subr.mxu0 0.0
        %1284 = vmatpush1.msra.mxu0 0.0
        %1285 = vmatprep.subr.mxu0 0.0
        %1286 = vmatpush1.msra.mxu0 0.0
        %1287 = vmatprep.subr.mxu0 0.0
        %1288 = vmatpush1.msra.mxu0 0.0
        %1289 = vmatprep.subr.mxu0 0.0
        %1290 = vmatpush1.msra.mxu0 0.0
        %1291 = vmatprep.subr.mxu0 0.0
        %1292 = vmatpush1.msra.mxu0 %v697
        %1293 = vmatprep.subr.mxu0 0.0
        %1294 = vmatpush1.msra.mxu0 %v696
        %1295 = vmatprep.subr.mxu0 0.0
        %1296 = vmatpush1.msra.mxu0 %v695
        %1297 = vmatprep.subr.mxu0 0.0
        %1298 = vmatpush1.msra.mxu0 %v694
        %1299 = vmatprep.subr.mxu0 0.0
        %1300 = vmatpush2.msra.mxu0 0.0
        %1301 = vmatprep.subr.mxu0 0.0
        %1302 = vmatpush2.msra.mxu0 0.0
        %1303 = vmatprep.subr.mxu0 0.0
        %1304 = vmatpush2.msra.mxu0 0.0
        %1305 = vmatprep.subr.mxu0 0.0
        %1306 = vmatpush2.msra.mxu0 0.0
        %1307 = vmatprep.subr.mxu0 0.0
        %1308 = vmatpush2.msra.mxu0 0.0
        %1309 = vmatprep.subr.mxu0 0.0
        %1310 = vmatpush2.msra.mxu0 0.0
        %1311 = vmatprep.subr.mxu0 0.0
        %1312 = vmatpush2.msra.mxu0 0.0
        %1313 = vmatprep.subr.mxu0 0.0
        %1314 = vmatpush2.msra.mxu0 0.0
        %1315 = vmatprep.subr.mxu0 0.0
        %1316 = vmatpush2.msra.mxu0 0.0
        %1317 = vmatprep.subr.mxu0 0.0
        %1318 = vmatpush2.msra.mxu0 0.0
        %1319 = vmatprep.subr.mxu0 0.0
        %1320 = vmatpush2.msra.mxu0 0.0
        %1321 = vmatprep.subr.mxu0 0.0
        %1322 = vmatpush2.msra.mxu0 0.0
        %1323 = vmatprep.subr.mxu0 0.0
        %1324 = vmatpush2.msra.mxu0 0.0
        %1325 = vmatprep.subr.mxu0 0.0
        %1326 = vmatpush2.msra.mxu0 0.0
        %1327 = vmatprep.subr.mxu0 0.0
        %1328 = vmatpush2.msra.mxu0 0.0
        %1329 = vmatprep.subr.mxu0 0.0
        %1330 = vmatpush2.msra.mxu0 0.0
        %1331 = vmatprep.mubr.f32.mxu0 0.0
        %1332 = vmatmul.mubr.f32.gmra.mxu0 %v1265
        %v1333 = vpop.f32.mrf.mxu0
        %v1334 = vadd.f32 0.0, %v1333
        %v1335 = vpop.f32.mrf.mxu0
        %1336 = vdwg.mxu0
        %v1338 = vsel %vm934, %v1094, 0
        %1340 = vmatprep.subr.mxu0 0.0
        %1341 = vmatpush1.msra.mxu0 0.0
        %1342 = vmatprep.subr.mxu0 0.0
        %1343 = vmatpush1.msra.mxu0 0.0
        %1344 = vmatprep.subr.mxu0 0.0
        %1345 = vmatpush1.msra.mxu0 0.0
        %1346 = vmatprep.subr.mxu0 0.0
        %1347 = vmatpush1.msra.mxu0 0.0
        %1348 = vmatprep.subr.mxu0 0.0
        %1349 = vmatpush1.msra.mxu0 0.0
        %1350 = vmatprep.subr.mxu0 0.0
        %1351 = vmatpush1.msra.mxu0 0.0
        %1352 = vmatprep.subr.mxu0 0.0
        %1353 = vmatpush1.msra.mxu0 0.0
        %1354 = vmatprep.subr.mxu0 0.0
        %1355 = vmatpush1.msra.mxu0 0.0
        %1356 = vmatprep.subr.mxu0 0.0
        %1357 = vmatpush1.msra.mxu0 0.0
        %1358 = vmatprep.subr.mxu0 0.0
        %1359 = vmatpush1.msra.mxu0 0.0
        %1360 = vmatprep.subr.mxu0 0.0
        %1361 = vmatpush1.msra.mxu0 0.0
        %1362 = vmatprep.subr.mxu0 0.0
        %1363 = vmatpush1.msra.mxu0 0.0
        %1364 = vmatprep.subr.mxu0 0.0
        %1365 = vmatpush1.msra.mxu0 %v693
        %1366 = vmatprep.subr.mxu0 0.0
        %1367 = vmatpush1.msra.mxu0 %v692
        %1368 = vmatprep.subr.mxu0 0.0
        %1369 = vmatpush1.msra.mxu0 %v691
        %1370 = vmatprep.subr.mxu0 0.0
        %1371 = vmatpush1.msra.mxu0 %v690
        %1372 = vmatprep.subr.mxu0 0.0
        %1373 = vmatpush2.msra.mxu0 0.0
        %1374 = vmatprep.subr.mxu0 0.0
        %1375 = vmatpush2.msra.mxu0 0.0
        %1376 = vmatprep.subr.mxu0 0.0
        %1377 = vmatpush2.msra.mxu0 0.0
        %1378 = vmatprep.subr.mxu0 0.0
        %1379 = vmatpush2.msra.mxu0 0.0
        %1380 = vmatprep.subr.mxu0 0.0
        %1381 = vmatpush2.msra.mxu0 0.0
        %1382 = vmatprep.subr.mxu0 0.0
        %1383 = vmatpush2.msra.mxu0 0.0
        %1384 = vmatprep.subr.mxu0 0.0
        %1385 = vmatpush2.msra.mxu0 0.0
        %1386 = vmatprep.subr.mxu0 0.0
        %1387 = vmatpush2.msra.mxu0 0.0
        %1388 = vmatprep.subr.mxu0 0.0
        %1389 = vmatpush2.msra.mxu0 0.0
        %1390 = vmatprep.subr.mxu0 0.0
        %1391 = vmatpush2.msra.mxu0 0.0
        %1392 = vmatprep.subr.mxu0 0.0
        %1393 = vmatpush2.msra.mxu0 0.0
        %1394 = vmatprep.subr.mxu0 0.0
        %1395 = vmatpush2.msra.mxu0 0.0
        %1396 = vmatprep.subr.mxu0 0.0
        %1397 = vmatpush2.msra.mxu0 0.0
        %1398 = vmatprep.subr.mxu0 0.0
        %1399 = vmatpush2.msra.mxu0 0.0
        %1400 = vmatprep.subr.mxu0 0.0
        %1401 = vmatpush2.msra.mxu0 0.0
        %1402 = vmatprep.subr.mxu0 0.0
        %1403 = vmatpush2.msra.mxu0 0.0
        %1404 = vmatprep.mubr.f32.mxu0 0.0
        %1405 = vmatmul.mubr.f32.gmra.mxu0 %v1338
        %v1406 = vpop.f32.mrf.mxu0
        %v1407 = vadd.f32 %v1334, %v1406
        %v1408 = vpop.f32.mrf.mxu0
        %1409 = vdwg.mxu0
        %1410 = vrot.lane.b32.xlu0 %v860, 64
        %v1411 = vpop.permute.xlu0 %1410
        %1412 = vrot.lane.b32.xlu0 %v862, 64
        %v1413 = vpop.permute.xlu0 %1412
        %v1414 = vsel %vm934, %v1411, 0
        %v1416 = vsel %vm934, %v1413, 0
        %1418 = vmatprep.subr.mxu0 0.0
        %1419 = vmatpush1.xpose.msra.mxu0 0.0
        %1420 = vmatprep.subr.mxu0 0.0
        %1421 = vmatpush1.xpose.msra.mxu0 0.0
        %1422 = vmatprep.subr.mxu0 0.0
        %1423 = vmatpush1.xpose.msra.mxu0 0.0
        %1424 = vmatprep.subr.mxu0 0.0
        %1425 = vmatpush1.xpose.msra.mxu0 0.0
        %1426 = vmatprep.subr.mxu0 0.0
        %1427 = vmatpush1.xpose.msra.mxu0 0.0
        %1428 = vmatprep.subr.mxu0 0.0
        %1429 = vmatpush1.xpose.msra.mxu0 0.0
        %1430 = vmatprep.subr.mxu0 0.0
        %1431 = vmatpush1.xpose.msra.mxu0 0.0
        %1432 = vmatprep.subr.mxu0 0.0
        %1433 = vmatpush1.xpose.msra.mxu0 0.0
        %1434 = vmatprep.subr.mxu0 0.0
        %1435 = vmatpush1.xpose.msra.mxu0 0.0
        %1436 = vmatprep.subr.mxu0 0.0
        %1437 = vmatpush1.xpose.msra.mxu0 0.0
        %1438 = vmatprep.subr.mxu0 0.0
        %1439 = vmatpush1.xpose.msra.mxu0 0.0
        %1440 = vmatprep.subr.mxu0 0.0
        %1441 = vmatpush1.xpose.msra.mxu0 0.0
        %1442 = vmatprep.subr.mxu0 0.0
        %1443 = vmatpush1.xpose.msra.mxu0 0.0
        %1444 = vmatprep.subr.mxu0 0.0
        %1445 = vmatpush1.xpose.msra.mxu0 0.0
        %1446 = vmatprep.subr.mxu0 0.0
        %1447 = vmatpush1.xpose.msra.mxu0 0.0
        %1448 = vmatprep.subr.mxu0 0.0
        %1449 = vmatpush1.xpose.msra.mxu0 %v1416
        %1450 = vmatprep.subr.mxu0 0.0
        %1451 = vmatpush2.xpose.msra.mxu0 0.0
        %1452 = vmatprep.subr.mxu0 0.0
        %1453 = vmatpush2.xpose.msra.mxu0 0.0
        %1454 = vmatprep.subr.mxu0 0.0
        %1455 = vmatpush2.xpose.msra.mxu0 0.0
        %1456 = vmatprep.subr.mxu0 0.0
        %1457 = vmatpush2.xpose.msra.mxu0 0.0
        %1458 = vmatprep.subr.mxu0 0.0
        %1459 = vmatpush2.xpose.msra.mxu0 0.0
        %1460 = vmatprep.subr.mxu0 0.0
        %1461 = vmatpush2.xpose.msra.mxu0 0.0
        %1462 = vmatprep.subr.mxu0 0.0
        %1463 = vmatpush2.xpose.msra.mxu0 0.0
        %1464 = vmatprep.subr.mxu0 0.0
        %1465 = vmatpush2.xpose.msra.mxu0 0.0
        %1466 = vmatprep.subr.mxu0 0.0
        %1467 = vmatpush2.xpose.msra.mxu0 0.0
        %1468 = vmatprep.subr.mxu0 0.0
        %1469 = vmatpush2.xpose.msra.mxu0 0.0
        %1470 = vmatprep.subr.mxu0 0.0
        %1471 = vmatpush2.xpose.msra.mxu0 0.0
        %1472 = vmatprep.subr.mxu0 0.0
        %1473 = vmatpush2.xpose.msra.mxu0 0.0
        %1474 = vmatprep.subr.mxu0 0.0
        %1475 = vmatpush2.xpose.msra.mxu0 0.0
        %1476 = vmatprep.subr.mxu0 0.0
        %1477 = vmatpush2.xpose.msra.mxu0 0.0
        %1478 = vmatprep.subr.mxu0 0.0
        %1479 = vmatpush2.xpose.msra.mxu0 0.0
        %1480 = vmatprep.subr.mxu0 0.0
        %1481 = vmatpush2.xpose.msra.mxu0 0.0
        %1482 = vmatprep.mubr.f32.mxu0 0.0
        %1483 = vmatmul.mubr.f32.gmra.mxu0 %v1414
        %v1484 = vpop.f32.mrf.mxu0
        %v1485 = vadd.f32 0.0, %v1484
        %v1486 = vpop.f32.mrf.mxu0
        %1487 = vdwg.mxu0
        %v1488 = vmul.f32 %v1485, 0.17677669
        %v1489 = vsel %vm1012, %v1488, -inf
        %1490 = vmax.xlane.f32.xlu0 %v1489
        %v1491 = vpop.xlane.xlu0 %1490
        %v1492 = vsub.f32 %v1488, %v1491
        %v1493 = vmul.f32 %v1492, 1.442695
        %v1494 = vpow.pop %v1493
        %v1495 = vsel %vm1012, %v1494, 0.0
        %1496 = vadd.xlane.f32.xlu0 %v1495
        %v1497 = vpop.xlane.xlu0 %1496
        %v1498 = vrcp.pop %v1497
        %v1499 = vmul.f32 %v1494, %v1498
        %1500 = vrot.lane.b32.xlu0 %v931, 64
        %v1501 = vpop.permute.xlu0 %1500
        %v1504 = vsel %vm1012, %v1499, 0
        %1506 = vmatprep.subr.mxu0 0.0
        %1507 = vmatpush1.msra.mxu0 0.0
        %1508 = vmatprep.subr.mxu0 0.0
        %1509 = vmatpush1.msra.mxu0 0.0
        %1510 = vmatprep.subr.mxu0 0.0
        %1511 = vmatpush1.msra.mxu0 0.0
        %1512 = vmatprep.subr.mxu0 0.0
        %1513 = vmatpush1.msra.mxu0 0.0
        %1514 = vmatprep.subr.mxu0 0.0
        %1515 = vmatpush1.msra.mxu0 0.0
        %1516 = vmatprep.subr.mxu0 0.0
        %1517 = vmatpush1.msra.mxu0 0.0
        %1518 = vmatprep.subr.mxu0 0.0
        %1519 = vmatpush1.msra.mxu0 0.0
        %1520 = vmatprep.subr.mxu0 0.0
        %1521 = vmatpush1.msra.mxu0 0.0
        %1522 = vmatprep.subr.mxu0 0.0
        %1523 = vmatpush1.msra.mxu0 0.0
        %1524 = vmatprep.subr.mxu0 0.0
        %1525 = vmatpush1.msra.mxu0 0.0
        %1526 = vmatprep.subr.mxu0 0.0
        %1527 = vmatpush1.msra.mxu0 0.0
        %1528 = vmatprep.subr.mxu0 0.0
        %1529 = vmatpush1.msra.mxu0 0.0
        %1530 = vmatprep.subr.mxu0 0.0
        %1531 = vmatpush1.msra.mxu0 0.0
        %1532 = vmatprep.subr.mxu0 0.0
        %1533 = vmatpush1.msra.mxu0 0.0
        %1534 = vmatprep.subr.mxu0 0.0
        %1535 = vmatpush1.msra.mxu0 0.0
        %1536 = vmatprep.subr.mxu0 0.0
        %1537 = vmatpush1.msra.mxu0 %v1501
        %1538 = vmatprep.subr.mxu0 0.0
        %1539 = vmatpush2.msra.mxu0 0.0
        %1540 = vmatprep.subr.mxu0 0.0
        %1541 = vmatpush2.msra.mxu0 0.0
        %1542 = vmatprep.subr.mxu0 0.0
        %1543 = vmatpush2.msra.mxu0 0.0
        %1544 = vmatprep.subr.mxu0 0.0
        %1545 = vmatpush2.msra.mxu0 0.0
        %1546 = vmatprep.subr.mxu0 0.0
        %1547 = vmatpush2.msra.mxu0 0.0
        %1548 = vmatprep.subr.mxu0 0.0
        %1549 = vmatpush2.msra.mxu0 0.0
        %1550 = vmatprep.subr.mxu0 0.0
        %1551 = vmatpush2.msra.mxu0 0.0
        %1552 = vmatprep.subr.mxu0 0.0
        %1553 = vmatpush2.msra.mxu0 0.0
        %1554 = vmatprep.subr.mxu0 0.0
        %1555 = vmatpush2.msra.mxu0 0.0
        %1556 = vmatprep.subr.mxu0 0.0
        %1557 = vmatpush2.msra.mxu0 0.0
        %1558 = vmatprep.subr.mxu0 0.0
        %1559 = vmatpush2.msra.mxu0 0.0
        %1560 = vmatprep.subr.mxu0 0.0
        %1561 = vmatpush2.msra.mxu0 0.0
        %1562 = vmatprep.subr.mxu0 0.0
        %1563 = vmatpush2.msra.mxu0 0.0
        %1564 = vmatprep.subr.mxu0 0.0
        %1565 = vmatpush2.msra.mxu0 0.0
        %1566 = vmatprep.subr.mxu0 0.0
        %1567 = vmatpush2.msra.mxu0 0.0
        %1568 = vmatprep.subr.mxu0 0.0
        %1569 = vmatpush2.msra.mxu0 0.0
        %1570 = vmatprep.mubr.f32.mxu0 0.0
        %1571 = vmatmul.mubr.f32.gmra.mxu0 %v1504
        %v1572 = vpop.f32.mrf.mxu0
        %v1573 = vadd.f32 0.0, %v1572
        %v1574 = vpop.f32.mrf.mxu0
        %1575 = vdwg.mxu0
        %v1577 = vsel %vm934, %v1573, 0
        %1579 = vmatprep.subr.mxu0 0.0
        %1580 = vmatpush1.msra.mxu0 0.0
        %1581 = vmatprep.subr.mxu0 0.0
        %1582 = vmatpush1.msra.mxu0 0.0
        %1583 = vmatprep.subr.mxu0 0.0
        %1584 = vmatpush1.msra.mxu0 0.0
        %1585 = vmatprep.subr.mxu0 0.0
        %1586 = vmatpush1.msra.mxu0 0.0
        %1587 = vmatprep.subr.mxu0 0.0
        %1588 = vmatpush1.msra.mxu0 0.0
        %1589 = vmatprep.subr.mxu0 0.0
        %1590 = vmatpush1.msra.mxu0 0.0
        %1591 = vmatprep.subr.mxu0 0.0
        %1592 = vmatpush1.msra.mxu0 0.0
        %1593 = vmatprep.subr.mxu0 0.0
        %1594 = vmatpush1.msra.mxu0 0.0
        %1595 = vmatprep.subr.mxu0 0.0
        %1596 = vmatpush1.msra.mxu0 0.0
        %1597 = vmatprep.subr.mxu0 0.0
        %1598 = vmatpush1.msra.mxu0 0.0
        %1599 = vmatprep.subr.mxu0 0.0
        %1600 = vmatpush1.msra.mxu0 0.0
        %1601 = vmatprep.subr.mxu0 0.0
        %1602 = vmatpush1.msra.mxu0 0.0
        %1603 = vmatprep.subr.mxu0 0.0
        %1604 = vmatpush1.msra.mxu0 %v701
        %1605 = vmatprep.subr.mxu0 0.0
        %1606 = vmatpush1.msra.mxu0 %v700
        %1607 = vmatprep.subr.mxu0 0.0
        %1608 = vmatpush1.msra.mxu0 %v699
        %1609 = vmatprep.subr.mxu0 0.0
        %1610 = vmatpush1.msra.mxu0 %v698
        %1611 = vmatprep.subr.mxu0 0.0
        %1612 = vmatpush2.msra.mxu0 0.0
        %1613 = vmatprep.subr.mxu0 0.0
        %1614 = vmatpush2.msra.mxu0 0.0
        %1615 = vmatprep.subr.mxu0 0.0
        %1616 = vmatpush2.msra.mxu0 0.0
        %1617 = vmatprep.subr.mxu0 0.0
        %1618 = vmatpush2.msra.mxu0 0.0
        %1619 = vmatprep.subr.mxu0 0.0
        %1620 = vmatpush2.msra.mxu0 0.0
        %1621 = vmatprep.subr.mxu0 0.0
        %1622 = vmatpush2.msra.mxu0 0.0
        %1623 = vmatprep.subr.mxu0 0.0
        %1624 = vmatpush2.msra.mxu0 0.0
        %1625 = vmatprep.subr.mxu0 0.0
        %1626 = vmatpush2.msra.mxu0 0.0
        %1627 = vmatprep.subr.mxu0 0.0
        %1628 = vmatpush2.msra.mxu0 0.0
        %1629 = vmatprep.subr.mxu0 0.0
        %1630 = vmatpush2.msra.mxu0 0.0
        %1631 = vmatprep.subr.mxu0 0.0
        %1632 = vmatpush2.msra.mxu0 0.0
        %1633 = vmatprep.subr.mxu0 0.0
        %1634 = vmatpush2.msra.mxu0 0.0
        %1635 = vmatprep.subr.mxu0 0.0
        %1636 = vmatpush2.msra.mxu0 0.0
        %1637 = vmatprep.subr.mxu0 0.0
        %1638 = vmatpush2.msra.mxu0 0.0
        %1639 = vmatprep.subr.mxu0 0.0
        %1640 = vmatpush2.msra.mxu0 0.0
        %1641 = vmatprep.subr.mxu0 0.0
        %1642 = vmatpush2.msra.mxu0 0.0
        %1643 = vmatprep.mubr.f32.mxu0 0.0
        %1644 = vmatmul.mubr.f32.gmra.mxu0 %v1577
        %v1645 = vpop.f32.mrf.mxu0
        %v1646 = vadd.f32 0.0, %v1645
        %v1647 = vpop.f32.mrf.mxu0
        %1648 = vdwg.mxu0
        %v1649 = vadd.f32 %v1407, %v1646
        %1650 = vrot.lane.b32.xlu0 %v860, 32
        %v1651 = vpop.permute.xlu0 %1650
        %1652 = vrot.lane.b32.xlu0 %v862, 32
        %v1653 = vpop.permute.xlu0 %1652
        %v1654 = vsel %vm934, %v1651, 0
        %v1656 = vsel %vm934, %v1653, 0
        %1658 = vmatprep.subr.mxu0 0.0
        %1659 = vmatpush1.xpose.msra.mxu0 0.0
        %1660 = vmatprep.subr.mxu0 0.0
        %1661 = vmatpush1.xpose.msra.mxu0 0.0
        %1662 = vmatprep.subr.mxu0 0.0
        %1663 = vmatpush1.xpose.msra.mxu0 0.0
        %1664 = vmatprep.subr.mxu0 0.0
        %1665 = vmatpush1.xpose.msra.mxu0 0.0
        %1666 = vmatprep.subr.mxu0 0.0
        %1667 = vmatpush1.xpose.msra.mxu0 0.0
        %1668 = vmatprep.subr.mxu0 0.0
        %1669 = vmatpush1.xpose.msra.mxu0 0.0
        %1670 = vmatprep.subr.mxu0 0.0
        %1671 = vmatpush1.xpose.msra.mxu0 0.0
        %1672 = vmatprep.subr.mxu0 0.0
        %1673 = vmatpush1.xpose.msra.mxu0 0.0
        %1674 = vmatprep.subr.mxu0 0.0
        %1675 = vmatpush1.xpose.msra.mxu0 0.0
        %1676 = vmatprep.subr.mxu0 0.0
        %1677 = vmatpush1.xpose.msra.mxu0 0.0
        %1678 = vmatprep.subr.mxu0 0.0
        %1679 = vmatpush1.xpose.msra.mxu0 0.0
        %1680 = vmatprep.subr.mxu0 0.0
        %1681 = vmatpush1.xpose.msra.mxu0 0.0
        %1682 = vmatprep.subr.mxu0 0.0
        %1683 = vmatpush1.xpose.msra.mxu0 0.0
        %1684 = vmatprep.subr.mxu0 0.0
        %1685 = vmatpush1.xpose.msra.mxu0 0.0
        %1686 = vmatprep.subr.mxu0 0.0
        %1687 = vmatpush1.xpose.msra.mxu0 0.0
        %1688 = vmatprep.subr.mxu0 0.0
        %1689 = vmatpush1.xpose.msra.mxu0 %v1656
        %1690 = vmatprep.subr.mxu0 0.0
        %1691 = vmatpush2.xpose.msra.mxu0 0.0
        %1692 = vmatprep.subr.mxu0 0.0
        %1693 = vmatpush2.xpose.msra.mxu0 0.0
        %1694 = vmatprep.subr.mxu0 0.0
        %1695 = vmatpush2.xpose.msra.mxu0 0.0
        %1696 = vmatprep.subr.mxu0 0.0
        %1697 = vmatpush2.xpose.msra.mxu0 0.0
        %1698 = vmatprep.subr.mxu0 0.0
        %1699 = vmatpush2.xpose.msra.mxu0 0.0
        %1700 = vmatprep.subr.mxu0 0.0
        %1701 = vmatpush2.xpose.msra.mxu0 0.0
        %1702 = vmatprep.subr.mxu0 0.0
        %1703 = vmatpush2.xpose.msra.mxu0 0.0
        %1704 = vmatprep.subr.mxu0 0.0
        %1705 = vmatpush2.xpose.msra.mxu0 0.0
        %1706 = vmatprep.subr.mxu0 0.0
        %1707 = vmatpush2.xpose.msra.mxu0 0.0
        %1708 = vmatprep.subr.mxu0 0.0
        %1709 = vmatpush2.xpose.msra.mxu0 0.0
        %1710 = vmatprep.subr.mxu0 0.0
        %1711 = vmatpush2.xpose.msra.mxu0 0.0
        %1712 = vmatprep.subr.mxu0 0.0
        %1713 = vmatpush2.xpose.msra.mxu0 0.0
        %1714 = vmatprep.subr.mxu0 0.0
        %1715 = vmatpush2.xpose.msra.mxu0 0.0
        %1716 = vmatprep.subr.mxu0 0.0
        %1717 = vmatpush2.xpose.msra.mxu0 0.0
        %1718 = vmatprep.subr.mxu0 0.0
        %1719 = vmatpush2.xpose.msra.mxu0 0.0
        %1720 = vmatprep.subr.mxu0 0.0
        %1721 = vmatpush2.xpose.msra.mxu0 0.0
        %1722 = vmatprep.mubr.f32.mxu0 0.0
        %1723 = vmatmul.mubr.f32.gmra.mxu0 %v1654
        %v1724 = vpop.f32.mrf.mxu0
        %v1725 = vadd.f32 0.0, %v1724
        %v1726 = vpop.f32.mrf.mxu0
        %1727 = vdwg.mxu0
        %v1728 = vmul.f32 %v1725, 0.17677669
        %v1729 = vsel %vm1012, %v1728, -inf
        %1730 = vmax.xlane.f32.xlu0 %v1729
        %v1731 = vpop.xlane.xlu0 %1730
        %v1732 = vsub.f32 %v1728, %v1731
        %v1733 = vmul.f32 %v1732, 1.442695
        %v1734 = vpow.pop %v1733
        %v1735 = vsel %vm1012, %v1734, 0.0
        %1736 = vadd.xlane.f32.xlu0 %v1735
        %v1737 = vpop.xlane.xlu0 %1736
        %v1738 = vrcp.pop %v1737
        %v1739 = vmul.f32 %v1734, %v1738
        %1740 = vrot.lane.b32.xlu0 %v931, 32
        %v1741 = vpop.permute.xlu0 %1740
        %v1744 = vsel %vm1012, %v1739, 0
        %1746 = vmatprep.subr.mxu0 0.0
        %1747 = vmatpush1.msra.mxu0 0.0
        %1748 = vmatprep.subr.mxu0 0.0
        %1749 = vmatpush1.msra.mxu0 0.0
        %1750 = vmatprep.subr.mxu0 0.0
        %1751 = vmatpush1.msra.mxu0 0.0
        %1752 = vmatprep.subr.mxu0 0.0
        %1753 = vmatpush1.msra.mxu0 0.0
        %1754 = vmatprep.subr.mxu0 0.0
        %1755 = vmatpush1.msra.mxu0 0.0
        %1756 = vmatprep.subr.mxu0 0.0
        %1757 = vmatpush1.msra.mxu0 0.0
        %1758 = vmatprep.subr.mxu0 0.0
        %1759 = vmatpush1.msra.mxu0 0.0
        %1760 = vmatprep.subr.mxu0 0.0
        %1761 = vmatpush1.msra.mxu0 0.0
        %1762 = vmatprep.subr.mxu0 0.0
        %1763 = vmatpush1.msra.mxu0 0.0
        %1764 = vmatprep.subr.mxu0 0.0
        %1765 = vmatpush1.msra.mxu0 0.0
        %1766 = vmatprep.subr.mxu0 0.0
        %1767 = vmatpush1.msra.mxu0 0.0
        %1768 = vmatprep.subr.mxu0 0.0
        %1769 = vmatpush1.msra.mxu0 0.0
        %1770 = vmatprep.subr.mxu0 0.0
        %1771 = vmatpush1.msra.mxu0 0.0
        %1772 = vmatprep.subr.mxu0 0.0
        %1773 = vmatpush1.msra.mxu0 0.0
        %1774 = vmatprep.subr.mxu0 0.0
        %1775 = vmatpush1.msra.mxu0 0.0
        %1776 = vmatprep.subr.mxu0 0.0
        %1777 = vmatpush1.msra.mxu0 %v1741
        %1778 = vmatprep.subr.mxu0 0.0
        %1779 = vmatpush2.msra.mxu0 0.0
        %1780 = vmatprep.subr.mxu0 0.0
        %1781 = vmatpush2.msra.mxu0 0.0
        %1782 = vmatprep.subr.mxu0 0.0
        %1783 = vmatpush2.msra.mxu0 0.0
        %1784 = vmatprep.subr.mxu0 0.0
        %1785 = vmatpush2.msra.mxu0 0.0
        %1786 = vmatprep.subr.mxu0 0.0
        %1787 = vmatpush2.msra.mxu0 0.0
        %1788 = vmatprep.subr.mxu0 0.0
        %1789 = vmatpush2.msra.mxu0 0.0
        %1790 = vmatprep.subr.mxu0 0.0
        %1791 = vmatpush2.msra.mxu0 0.0
        %1792 = vmatprep.subr.mxu0 0.0
        %1793 = vmatpush2.msra.mxu0 0.0
        %1794 = vmatprep.subr.mxu0 0.0
        %1795 = vmatpush2.msra.mxu0 0.0
        %1796 = vmatprep.subr.mxu0 0.0
        %1797 = vmatpush2.msra.mxu0 0.0
        %1798 = vmatprep.subr.mxu0 0.0
        %1799 = vmatpush2.msra.mxu0 0.0
        %1800 = vmatprep.subr.mxu0 0.0
        %1801 = vmatpush2.msra.mxu0 0.0
        %1802 = vmatprep.subr.mxu0 0.0
        %1803 = vmatpush2.msra.mxu0 0.0
        %1804 = vmatprep.subr.mxu0 0.0
        %1805 = vmatpush2.msra.mxu0 0.0
        %1806 = vmatprep.subr.mxu0 0.0
        %1807 = vmatpush2.msra.mxu0 0.0
        %1808 = vmatprep.subr.mxu0 0.0
        %1809 = vmatpush2.msra.mxu0 0.0
        %1810 = vmatprep.mubr.f32.mxu0 0.0
        %1811 = vmatmul.mubr.f32.gmra.mxu0 %v1744
        %v1812 = vpop.f32.mrf.mxu0
        %v1813 = vadd.f32 0.0, %v1812
        %v1814 = vpop.f32.mrf.mxu0
        %1815 = vdwg.mxu0
        %v1817 = vsel %vm934, %v1813, 0
        %1819 = vmatprep.subr.mxu0 0.0
        %1820 = vmatpush1.msra.mxu0 0.0
        %1821 = vmatprep.subr.mxu0 0.0
        %1822 = vmatpush1.msra.mxu0 0.0
        %1823 = vmatprep.subr.mxu0 0.0
        %1824 = vmatpush1.msra.mxu0 0.0
        %1825 = vmatprep.subr.mxu0 0.0
        %1826 = vmatpush1.msra.mxu0 0.0
        %1827 = vmatprep.subr.mxu0 0.0
        %1828 = vmatpush1.msra.mxu0 0.0
        %1829 = vmatprep.subr.mxu0 0.0
        %1830 = vmatpush1.msra.mxu0 0.0
        %1831 = vmatprep.subr.mxu0 0.0
        %1832 = vmatpush1.msra.mxu0 0.0
        %1833 = vmatprep.subr.mxu0 0.0
        %1834 = vmatpush1.msra.mxu0 0.0
        %1835 = vmatprep.subr.mxu0 0.0
        %1836 = vmatpush1.msra.mxu0 0.0
        %1837 = vmatprep.subr.mxu0 0.0
        %1838 = vmatpush1.msra.mxu0 0.0
        %1839 = vmatprep.subr.mxu0 0.0
        %1840 = vmatpush1.msra.mxu0 0.0
        %1841 = vmatprep.subr.mxu0 0.0
        %1842 = vmatpush1.msra.mxu0 0.0
        %1843 = vmatprep.subr.mxu0 0.0
        %1844 = vmatpush1.msra.mxu0 %v705
        %1845 = vmatprep.subr.mxu0 0.0
        %1846 = vmatpush1.msra.mxu0 %v704
        %1847 = vmatprep.subr.mxu0 0.0
        %1848 = vmatpush1.msra.mxu0 %v703
        %1849 = vmatprep.subr.mxu0 0.0
        %1850 = vmatpush1.msra.mxu0 %v702
        %1851 = vmatprep.subr.mxu0 0.0
        %1852 = vmatpush2.msra.mxu0 0.0
        %1853 = vmatprep.subr.mxu0 0.0
        %1854 = vmatpush2.msra.mxu0 0.0
        %1855 = vmatprep.subr.mxu0 0.0
        %1856 = vmatpush2.msra.mxu0 0.0
        %1857 = vmatprep.subr.mxu0 0.0
        %1858 = vmatpush2.msra.mxu0 0.0
        %1859 = vmatprep.subr.mxu0 0.0
        %1860 = vmatpush2.msra.mxu0 0.0
        %1861 = vmatprep.subr.mxu0 0.0
        %1862 = vmatpush2.msra.mxu0 0.0
        %1863 = vmatprep.subr.mxu0 0.0
        %1864 = vmatpush2.msra.mxu0 0.0
        %1865 = vmatprep.subr.mxu0 0.0
        %1866 = vmatpush2.msra.mxu0 0.0
        %1867 = vmatprep.subr.mxu0 0.0
        %1868 = vmatpush2.msra.mxu0 0.0
        %1869 = vmatprep.subr.mxu0 0.0
        %1870 = vmatpush2.msra.mxu0 0.0
        %1871 = vmatprep.subr.mxu0 0.0
        %1872 = vmatpush2.msra.mxu0 0.0
        %1873 = vmatprep.subr.mxu0 0.0
        %1874 = vmatpush2.msra.mxu0 0.0
        %1875 = vmatprep.subr.mxu0 0.0
        %1876 = vmatpush2.msra.mxu0 0.0
        %1877 = vmatprep.subr.mxu0 0.0
        %1878 = vmatpush2.msra.mxu0 0.0
        %1879 = vmatprep.subr.mxu0 0.0
        %1880 = vmatpush2.msra.mxu0 0.0
        %1881 = vmatprep.subr.mxu0 0.0
        %1882 = vmatpush2.msra.mxu0 0.0
        %1883 = vmatprep.mubr.f32.mxu0 0.0
        %1884 = vmatmul.mubr.f32.gmra.mxu0 %v1817
        %v1885 = vpop.f32.mrf.mxu0
        %v1886 = vadd.f32 0.0, %v1885
        %v1887 = vpop.f32.mrf.mxu0
        %1888 = vdwg.mxu0
        %v1889 = vadd.f32 %v1649, %v1886
        %v1891 = vlaneseq
        %v1892 = vshrl.u32 %v1891, 7
        %v1893 = vsub.s32 0, %v1892
        %v1894 = vrot.slane %v706, %v1893
        %v1896 = vadd.f32 %v1889, %v1894
        %v1897 = vadd.f32 %v640, %v1896
        %1898 = vadd.xlane.f32.xlu0 %v1897
        %v1899 = vpop.xlane.xlu0 %1898
        %v1900 = vrcp.pop 128.0
        %v1901 = vmul.f32 %v1899, %v1900
        %v1902 = vsub.f32 %v1897, %v1901
        %v1903 = vmul.f32 %v1902, %v1902
        %1904 = vadd.xlane.f32.xlu0 %v1903
        %v1905 = vpop.xlane.xlu0 %1904
        %v1906 = vmul.f32 %v1905, %v1900
        %v1907 = vadd.f32 %v1906, 1e-05
        %v1908 = vrsqrt.pop %v1907
        %v1909 = vmul.f32 %v1902, %v1908
        %v1911 = vlaneseq
        %v1912 = vshrl.u32 %v1911, 7
        %v1913 = vsub.s32 0, %v1912
        %v1914 = vrot.slane %v707, %v1913
        %v1916 = vmul.f32 %v1909, %v1914
        %v1918 = vlaneseq
        %v1919 = vshrl.u32 %v1918, 7
        %v1920 = vsub.s32 0, %v1919
        %v1921 = vrot.slane %v708, %v1920
        %v1923 = vadd.f32 %v1916, %v1921
        %v1925 = vlaneseq
        %v1926 = vshrl.u32 %v1925, 7
        %v1927 = vsub.s32 0, %v1926
        %v1928 = vrot.slane %v741, %v1927
        %v1929 = vlaneseq
        %v1930 = vshrl.u32 %v1929, 7
        %v1931 = vsub.s32 1, %v1930
        %v1932 = vrot.slane %v741, %v1931
        %1935 = vmatprep.subr.mxu0 %v740
        %1936 = vmatpush1.msra.mxu0 %v739
        %1937 = vmatprep.subr.mxu0 %v738
        %1938 = vmatpush1.msra.mxu0 %v737
        %1939 = vmatprep.subr.mxu0 %v736
        %1940 = vmatpush1.msra.mxu0 %v735
        %1941 = vmatprep.subr.mxu0 %v734
        %1942 = vmatpush1.msra.mxu0 %v733
        %1943 = vmatprep.subr.mxu0 %v732
        %1944 = vmatpush1.msra.mxu0 %v731
        %1945 = vmatprep.subr.mxu0 %v730
        %1946 = vmatpush1.msra.mxu0 %v729
        %1947 = vmatprep.subr.mxu0 %v728
        %1948 = vmatpush1.msra.mxu0 %v727
        %1949 = vmatprep.subr.mxu0 %v726
        %1950 = vmatpush1.msra.mxu0 %v725
        %1951 = vmatprep.subr.mxu0 %v724
        %1952 = vmatpush1.msra.mxu0 %v723
        %1953 = vmatprep.subr.mxu0 %v722
        %1954 = vmatpush1.msra.mxu0 %v721
        %1955 = vmatprep.subr.mxu0 %v720
        %1956 = vmatpush1.msra.mxu0 %v719
        %1957 = vmatprep.subr.mxu0 %v718
        %1958 = vmatpush1.msra.mxu0 %v717
        %1959 = vmatprep.subr.mxu0 %v716
        %1960 = vmatpush1.msra.mxu0 %v715
        %1961 = vmatprep.subr.mxu0 %v714
        %1962 = vmatpush1.msra.mxu0 %v713
        %1963 = vmatprep.subr.mxu0 %v712
        %1964 = vmatpush1.msra.mxu0 %v711
        %1965 = vmatprep.subr.mxu0 %v710
        %1966 = vmatpush1.msra.mxu0 %v709
        %1967 = vmatprep.subr.mxu0 0.0
        %1968 = vmatpush2.msra.mxu0 0.0
        %1969 = vmatprep.subr.mxu0 0.0
        %1970 = vmatpush2.msra.mxu0 0.0
        %1971 = vmatprep.subr.mxu0 0.0
        %1972 = vmatpush2.msra.mxu0 0.0
        %1973 = vmatprep.subr.mxu0 0.0
        %1974 = vmatpush2.msra.mxu0 0.0
        %1975 = vmatprep.subr.mxu0 0.0
        %1976 = vmatpush2.msra.mxu0 0.0
        %1977 = vmatprep.subr.mxu0 0.0
        %1978 = vmatpush2.msra.mxu0 0.0
        %1979 = vmatprep.subr.mxu0 0.0
        %1980 = vmatpush2.msra.mxu0 0.0
        %1981 = vmatprep.subr.mxu0 0.0
        %1982 = vmatpush2.msra.mxu0 0.0
        %1983 = vmatprep.subr.mxu0 0.0
        %1984 = vmatpush2.msra.mxu0 0.0
        %1985 = vmatprep.subr.mxu0 0.0
        %1986 = vmatpush2.msra.mxu0 0.0
        %1987 = vmatprep.subr.mxu0 0.0
        %1988 = vmatpush2.msra.mxu0 0.0
        %1989 = vmatprep.subr.mxu0 0.0
        %1990 = vmatpush2.msra.mxu0 0.0
        %1991 = vmatprep.subr.mxu0 0.0
        %1992 = vmatpush2.msra.mxu0 0.0
        %1993 = vmatprep.subr.mxu0 0.0
        %1994 = vmatpush2.msra.mxu0 0.0
        %1995 = vmatprep.subr.mxu0 0.0
        %1996 = vmatpush2.msra.mxu0 0.0
        %1997 = vmatprep.subr.mxu0 0.0
        %1998 = vmatpush2.msra.mxu0 0.0
        %1999 = vmatprep.mubr.f32.mxu0 0.0
        %2000 = vmatmul.mubr.f32.gmra.mxu0 %v1923
        %v2001 = vpop.f32.mrf.mxu0
        %v2002 = vadd.f32 %v1928, %v2001
        %v2003 = vpop.f32.mrf.mxu0
        %v2004 = vadd.f32 %v1932, %v2003
        %2005 = vdwg.mxu0
        %v2006 = vmax.f32 %v2002, 0.0
        %v2007 = vmax.f32 %v2004, 0.0
        %v2009 = vlaneseq
        %v2010 = vshrl.u32 %v2009, 7
        %v2011 = vsub.s32 0, %v2010
        %v2012 = vrot.slane %v774, %v2011
        %2014 = vmatprep.subr.mxu0 0.0
        %2015 = vmatpush1.msra.mxu0 %v757
        %2016 = vmatprep.subr.mxu0 0.0
        %2017 = vmatpush1.msra.mxu0 %v756
        %2018 = vmatprep.subr.mxu0 0.0
        %2019 = vmatpush1.msra.mxu0 %v755
        %2020 = vmatprep.subr.mxu0 0.0
        %2021 = vmatpush1.msra.mxu0 %v754
        %2022 = vmatprep.subr.mxu0 0.0
        %2023 = vmatpush1.msra.mxu0 %v753
        %2024 = vmatprep.subr.mxu0 0.0
        %2025 = vmatpush1.msra.mxu0 %v752
        %2026 = vmatprep.subr.mxu0 0.0
        %2027 = vmatpush1.msra.mxu0 %v751
        %2028 = vmatprep.subr.mxu0 0.0
        %2029 = vmatpush1.msra.mxu0 %v750
        %2030 = vmatprep.subr.mxu0 0.0
        %2031 = vmatpush1.msra.mxu0 %v749
        %2032 = vmatprep.subr.mxu0 0.0
        %2033 = vmatpush1.msra.mxu0 %v748
        %2034 = vmatprep.subr.mxu0 0.0
        %2035 = vmatpush1.msra.mxu0 %v747
        %2036 = vmatprep.subr.mxu0 0.0
        %2037 = vmatpush1.msra.mxu0 %v746
        %2038 = vmatprep.subr.mxu0 0.0
        %2039 = vmatpush1.msra.mxu0 %v745
        %2040 = vmatprep.subr.mxu0 0.0
        %2041 = vmatpush1.msra.mxu0 %v744
        %2042 = vmatprep.subr.mxu0 0.0
        %2043 = vmatpush1.msra.mxu0 %v743
        %2044 = vmatprep.subr.mxu0 0.0
        %2045 = vmatpush1.msra.mxu0 %v742
        %2046 = vmatprep.subr.mxu0 0.0
        %2047 = vmatpush2.msra.mxu0 %v773
        %2048 = vmatprep.subr.mxu0 0.0
        %2049 = vmatpush2.msra.mxu0 %v772
        %2050 = vmatprep.subr.mxu0 0.0
        %2051 = vmatpush2.msra.mxu0 %v771
        %2052 = vmatprep.subr.mxu0 0.0
        %2053 = vmatpush2.msra.mxu0 %v770
        %2054 = vmatprep.subr.mxu0 0.0
        %2055 = vmatpush2.msra.mxu0 %v769
        %2056 = vmatprep.subr.mxu0 0.0
        %2057 = vmatpush2.msra.mxu0 %v768
        %2058 = vmatprep.subr.mxu0 0.0
        %2059 = vmatpush2.msra.mxu0 %v767
        %2060 = vmatprep.subr.mxu0 0.0
        %2061 = vmatpush2.msra.mxu0 %v766
        %2062 = vmatprep.subr.mxu0 0.0
        %2063 = vmatpush2.msra.mxu0 %v765
        %2064 = vmatprep.subr.mxu0 0.0
        %2065 = vmatpush2.msra.mxu0 %v764
        %2066 = vmatprep.subr.mxu0 0.0
        %2067 = vmatpush2.msra.mxu0 %v763
        %2068 = vmatprep.subr.mxu0 0.0
        %2069 = vmatpush2.msra.mxu0 %v762
        %2070 = vmatprep.subr.mxu0 0.0
        %2071 = vmatpush2.msra.mxu0 %v761
        %2072 = vmatprep.subr.mxu0 0.0
        %2073 = vmatpush2.msra.mxu0 %v760
        %2074 = vmatprep.subr.mxu0 0.0
        %2075 = vmatpush2.msra.mxu0 %v759
        %2076 = vmatprep.subr.mxu0 0.0
        %2077 = vmatpush2.msra.mxu0 %v758
        %2078 = vmatprep.mubr.f32.mxu0 %v2007
        %2079 = vmatmul.mubr.f32.gmra.mxu0 %v2006
        %v2080 = vpop.f32.mrf.mxu0
        %v2081 = vadd.f32 %v2012, %v2080
        %v2082 = vpop.f32.mrf.mxu0
        %2083 = vdwg.mxu0
        %v2084 = vadd.f32 %v1923, %v2081
        %2085 = vadd.xlane.f32.xlu0 %v2084
        %v2086 = vpop.xlane.xlu0 %2085
        %v2087 = vmul.f32 %v2086, %v1900
        %v2088 = vsub.f32 %v2084, %v2087
        %v2089 = vmul.f32 %v2088, %v2088
        %2090 = vadd.xlane.f32.xlu0 %v2089
        %v2091 = vpop.xlane.xlu0 %2090
        %v2092 = vmul.f32 %v2091, %v1900
        %v2093 = vadd.f32 %v2092, 1e-05
        %v2094 = vrsqrt.pop %v2093
        %v2095 = vmul.f32 %v2088, %v2094
        %v2097 = vlaneseq
        %v2098 = vshrl.u32 %v2097, 7
        %v2099 = vsub.s32 0, %v2098
        %v2100 = vrot.slane %v775, %v2099
        %v2102 = vmul.f32 %v2095, %v2100
        %v2104 = vlaneseq
        %v2105 = vshrl.u32 %v2104, 7
        %v2106 = vsub.s32 0, %v2105
        %v2107 = vrot.slane %v776, %v2106
        %v2109 = vadd.f32 %v2102, %v2107
        %s2110 = scalar_lea.vmem [#allocation7], 384
        %v2111 = vld [vmem:[%s2110] sm:$0xff]
        %v2112 = vld [vmem:[%s2110 + $0x8] sm:$0xff]
        %v2113 = vld [vmem:[%s2110 + $0x10] sm:$0xff]
        %v2114 = vld [vmem:[%s2110 + $0x18] sm:$0xff]
        %v2115 = vld [vmem:[%s2110 + $0x20] sm:$0xff]
        %v2116 = vld [vmem:[%s2110 + $0x28] sm:$0xff]
        %v2117 = vld [vmem:[%s2110 + $0x30] sm:$0xff]
        %v2118 = vld [vmem:[%s2110 + $0x38] sm:$0xff]
        %v2119 = vld [vmem:[%s2110 + $0x40] sm:$0xff]
        %v2120 = vld [vmem:[%s2110 + $0x48] sm:$0xff]
        %v2121 = vld [vmem:[%s2110 + $0x50] sm:$0xff]
        %v2122 = vld [vmem:[%s2110 + $0x58] sm:$0xff]
        %v2123 = vld [vmem:[%s2110 + $0x60] sm:$0xff]
        %v2124 = vld [vmem:[%s2110 + $0x68] sm:$0xff]
        %v2125 = vld [vmem:[%s2110 + $0x70] sm:$0xff]
        %v2126 = vld [vmem:[%s2110 + $0x78] sm:$0xff]
        %v2127 = vld [vmem:[%s2110 + $0x80] sm:$0xff]
        %v2128 = vld [vmem:[%s2110 + $0x88] sm:$0xff]
        %v2129 = vld [vmem:[%s2110 + $0x90] sm:$0xff]
        %v2130 = vld [vmem:[%s2110 + $0x98] sm:$0xff]
        %v2131 = vld [vmem:[%s2110 + $0xa0] sm:$0xff]
        %v2132 = vld [vmem:[%s2110 + $0xa8] sm:$0xff]
        %v2133 = vld [vmem:[%s2110 + $0xb0] sm:$0xff]
        %v2134 = vld [vmem:[%s2110 + $0xb8] sm:$0xff]
        %v2135 = vld [vmem:[%s2110 + $0xc0] sm:$0xff]
        %v2136 = vld [vmem:[%s2110 + $0xc8] sm:$0xff]
        %v2137 = vld [vmem:[%s2110 + $0xd0] sm:$0xff]
        %v2138 = vld [vmem:[%s2110 + $0xd8] sm:$0xff]
        %v2139 = vld [vmem:[%s2110 + $0xe0] sm:$0xff]
        %v2140 = vld [vmem:[%s2110 + $0xe8] sm:$0xff]
        %v2141 = vld [vmem:[%s2110 + $0xf0] sm:$0xff]
        %v2142 = vld [vmem:[%s2110 + $0xf8] sm:$0xff]
        %v2143 = vld [vmem:[%s2110 + $0x100] sm:$0xff]
        %v2144 = vld [vmem:[%s2110 + $0x108] sm:$0xff]
        %v2145 = vld [vmem:[%s2110 + $0x110] sm:$0xff]
        %v2146 = vld [vmem:[%s2110 + $0x118] sm:$0xff]
        %v2147 = vld [vmem:[%s2110 + $0x120] sm:$0xff]
        %v2148 = vld [vmem:[%s2110 + $0x128] sm:$0xff]
        %v2149 = vld [vmem:[%s2110 + $0x130] sm:$0xff]
        %v2150 = vld [vmem:[%s2110 + $0x138] sm:$0xff]
        %v2151 = vld [vmem:[%s2110 + $0x140] sm:$0xff]
        %v2152 = vld [vmem:[%s2110 + $0x148] sm:$0xff]
        %v2153 = vld [vmem:[%s2110 + $0x150] sm:$0xff]
        %v2154 = vld [vmem:[%s2110 + $0x158] sm:$0xff]
        %v2155 = vld [vmem:[%s2110 + $0x160] sm:$0xff]
        %v2156 = vld [vmem:[%s2110 + $0x168] sm:$0xff]
        %v2157 = vld [vmem:[%s2110 + $0x170] sm:$0xff]
        %v2158 = vld [vmem:[%s2110 + $0x178] sm:$0xff]
        %s2159 = scalar_lea.vmem [#allocation8], 3
        %v2160 = vld [vmem:[%s2159] sm:$0x7]
        %s2161 = scalar_lea.vmem [#allocation10], 128
        %v2162 = vld [vmem:[%s2161] sm:$0xff]
        %v2163 = vld [vmem:[%s2161 + $0x8] sm:$0xff]
        %v2164 = vld [vmem:[%s2161 + $0x10] sm:$0xff]
        %v2165 = vld [vmem:[%s2161 + $0x18] sm:$0xff]
        %v2166 = vld [vmem:[%s2161 + $0x20] sm:$0xff]
        %v2167 = vld [vmem:[%s2161 + $0x28] sm:$0xff]
        %v2168 = vld [vmem:[%s2161 + $0x30] sm:$0xff]
        %v2169 = vld [vmem:[%s2161 + $0x38] sm:$0xff]
        %v2170 = vld [vmem:[%s2161 + $0x40] sm:$0xff]
        %v2171 = vld [vmem:[%s2161 + $0x48] sm:$0xff]
        %v2172 = vld [vmem:[%s2161 + $0x50] sm:$0xff]
        %v2173 = vld [vmem:[%s2161 + $0x58] sm:$0xff]
        %v2174 = vld [vmem:[%s2161 + $0x60] sm:$0xff]
        %v2175 = vld [vmem:[%s2161 + $0x68] sm:$0xff]
        %v2176 = vld [vmem:[%s2161 + $0x70] sm:$0xff]
        %v2177 = vld [vmem:[%s2161 + $0x78] sm:$0xff]
        %s2178 = scalar_lea.vmem %s5, 1
        %v2179 = vld [vmem:[%s2178] sm:$0x1]
        %s2180 = scalar_lea.vmem %s6, 1
        %v2181 = vld [vmem:[%s2180] sm:$0x1]
        %s2182 = scalar_lea.vmem %s7, 1
        %v2183 = vld [vmem:[%s2182] sm:$0x1]
        %s2184 = scalar_lea.vmem [#allocation11], 256
        %v2185 = vld [vmem:[%s2184] sm:$0xff]
        %v2186 = vld [vmem:[%s2184 + $0x8] sm:$0xff]
        %v2187 = vld [vmem:[%s2184 + $0x10] sm:$0xff]
        %v2188 = vld [vmem:[%s2184 + $0x18] sm:$0xff]
        %v2189 = vld [vmem:[%s2184 + $0x20] sm:$0xff]
        %v2190 = vld [vmem:[%s2184 + $0x28] sm:$0xff]
        %v2191 = vld [vmem:[%s2184 + $0x30] sm:$0xff]
        %v2192 = vld [vmem:[%s2184 + $0x38] sm:$0xff]
        %v2193 = vld [vmem:[%s2184 + $0x40] sm:$0xff]
        %v2194 = vld [vmem:[%s2184 + $0x48] sm:$0xff]
        %v2195 = vld [vmem:[%s2184 + $0x50] sm:$0xff]
        %v2196 = vld [vmem:[%s2184 + $0x58] sm:$0xff]
        %v2197 = vld [vmem:[%s2184 + $0x60] sm:$0xff]
        %v2198 = vld [vmem:[%s2184 + $0x68] sm:$0xff]
        %v2199 = vld [vmem:[%s2184 + $0x70] sm:$0xff]
        %v2200 = vld [vmem:[%s2184 + $0x78] sm:$0xff]
        %v2201 = vld [vmem:[%s2184 + $0x80] sm:$0xff]
        %v2202 = vld [vmem:[%s2184 + $0x88] sm:$0xff]
        %v2203 = vld [vmem:[%s2184 + $0x90] sm:$0xff]
        %v2204 = vld [vmem:[%s2184 + $0x98] sm:$0xff]
        %v2205 = vld [vmem:[%s2184 + $0xa0] sm:$0xff]
        %v2206 = vld [vmem:[%s2184 + $0xa8] sm:$0xff]
        %v2207 = vld [vmem:[%s2184 + $0xb0] sm:$0xff]
        %v2208 = vld [vmem:[%s2184 + $0xb8] sm:$0xff]
        %v2209 = vld [vmem:[%s2184 + $0xc0] sm:$0xff]
        %v2210 = vld [vmem:[%s2184 + $0xc8] sm:$0xff]
        %v2211 = vld [vmem:[%s2184 + $0xd0] sm:$0xff]
        %v2212 = vld [vmem:[%s2184 + $0xd8] sm:$0xff]
        %v2213 = vld [vmem:[%s2184 + $0xe0] sm:$0xff]
        %v2214 = vld [vmem:[%s2184 + $0xe8] sm:$0xff]
        %v2215 = vld [vmem:[%s2184 + $0xf0] sm:$0xff]
        %v2216 = vld [vmem:[%s2184 + $0xf8] sm:$0xff]
        %s2217 = scalar_lea.vmem %s9, 2
        %v2218 = vld [vmem:[%s2217] sm:$0x3]
        %s2219 = scalar_lea.vmem [#allocation13], 256
        %v2220 = vld [vmem:[%s2219] sm:$0xff]
        %v2221 = vld [vmem:[%s2219 + $0x8] sm:$0xff]
        %v2222 = vld [vmem:[%s2219 + $0x10] sm:$0xff]
        %v2223 = vld [vmem:[%s2219 + $0x18] sm:$0xff]
        %v2224 = vld [vmem:[%s2219 + $0x20] sm:$0xff]
        %v2225 = vld [vmem:[%s2219 + $0x28] sm:$0xff]
        %v2226 = vld [vmem:[%s2219 + $0x30] sm:$0xff]
        %v2227 = vld [vmem:[%s2219 + $0x38] sm:$0xff]
        %v2228 = vld [vmem:[%s2219 + $0x40] sm:$0xff]
        %v2229 = vld [vmem:[%s2219 + $0x48] sm:$0xff]
        %v2230 = vld [vmem:[%s2219 + $0x50] sm:$0xff]
        %v2231 = vld [vmem:[%s2219 + $0x58] sm:$0xff]
        %v2232 = vld [vmem:[%s2219 + $0x60] sm:$0xff]
        %v2233 = vld [vmem:[%s2219 + $0x68] sm:$0xff]
        %v2234 = vld [vmem:[%s2219 + $0x70] sm:$0xff]
        %v2235 = vld [vmem:[%s2219 + $0x78] sm:$0xff]
        %v2236 = vld [vmem:[%s2219 + $0x80] sm:$0xff]
        %v2237 = vld [vmem:[%s2219 + $0x88] sm:$0xff]
        %v2238 = vld [vmem:[%s2219 + $0x90] sm:$0xff]
        %v2239 = vld [vmem:[%s2219 + $0x98] sm:$0xff]
        %v2240 = vld [vmem:[%s2219 + $0xa0] sm:$0xff]
        %v2241 = vld [vmem:[%s2219 + $0xa8] sm:$0xff]
        %v2242 = vld [vmem:[%s2219 + $0xb0] sm:$0xff]
        %v2243 = vld [vmem:[%s2219 + $0xb8] sm:$0xff]
        %v2244 = vld [vmem:[%s2219 + $0xc0] sm:$0xff]
        %v2245 = vld [vmem:[%s2219 + $0xc8] sm:$0xff]
        %v2246 = vld [vmem:[%s2219 + $0xd0] sm:$0xff]
        %v2247 = vld [vmem:[%s2219 + $0xd8] sm:$0xff]
        %v2248 = vld [vmem:[%s2219 + $0xe0] sm:$0xff]
        %v2249 = vld [vmem:[%s2219 + $0xe8] sm:$0xff]
        %v2250 = vld [vmem:[%s2219 + $0xf0] sm:$0xff]
        %v2251 = vld [vmem:[%s2219 + $0xf8] sm:$0xff]
        %s2252 = scalar_lea.vmem %s11, 1
        %v2253 = vld [vmem:[%s2252] sm:$0x1]
        %s2254 = scalar_lea.vmem %s12, 1
        %v2255 = vld [vmem:[%s2254] sm:$0x1]
        %s2256 = scalar_lea.vmem %s13, 1
        %v2257 = vld [vmem:[%s2256] sm:$0x1]
        %v2259 = vlaneseq
        %v2260 = vshrl.u32 %v2259, 7
        %v2261 = vsub.s32 0, %v2260
        %v2262 = vrot.slane %v2160, %v2261
        %v2263 = vlaneseq
        %v2264 = vshrl.u32 %v2263, 7
        %v2265 = vsub.s32 1, %v2264
        %v2266 = vrot.slane %v2160, %v2265
        %v2267 = vlaneseq
        %v2268 = vshrl.u32 %v2267, 7
        %v2269 = vsub.s32 2, %v2268
        %v2270 = vrot.slane %v2160, %v2269
        %2274 = vmatprep.subr.mxu0 %v2157
        %2275 = vmatpush1.msra.mxu0 %v2156
        %2276 = vmatprep.subr.mxu0 %v2154
        %2277 = vmatpush1.msra.mxu0 %v2153
        %2278 = vmatprep.subr.mxu0 %v2151
        %2279 = vmatpush1.msra.mxu0 %v2150
        %2280 = vmatprep.subr.mxu0 %v2148
        %2281 = vmatpush1.msra.mxu0 %v2147
        %2282 = vmatprep.subr.mxu0 %v2145
        %2283 = vmatpush1.msra.mxu0 %v2144
        %2284 = vmatprep.subr.mxu0 %v2142
        %2285 = vmatpush1.msra.mxu0 %v2141
        %2286 = vmatprep.subr.mxu0 %v2139
        %2287 = vmatpush1.msra.mxu0 %v2138
        %2288 = vmatprep.subr.mxu0 %v2136
        %2289 = vmatpush1.msra.mxu0 %v2135
        %2290 = vmatprep.subr.mxu0 %v2133
        %2291 = vmatpush1.msra.mxu0 %v2132
        %2292 = vmatprep.subr.mxu0 %v2130
        %2293 = vmatpush1.msra.mxu0 %v2129
        %2294 = vmatprep.subr.mxu0 %v2127
        %2295 = vmatpush1.msra.mxu0 %v2126
        %2296 = vmatprep.subr.mxu0 %v2124
        %2297 = vmatpush1.msra.mxu0 %v2123
        %2298 = vmatprep.subr.mxu0 %v2121
        %2299 = vmatpush1.msra.mxu0 %v2120
        %2300 = vmatprep.subr.mxu0 %v2118
        %2301 = vmatpush1.msra.mxu0 %v2117
        %2302 = vmatprep.subr.mxu0 %v2115
        %2303 = vmatpush1.msra.mxu0 %v2114
        %2304 = vmatprep.subr.mxu0 %v2112
        %2305 = vmatpush1.msra.mxu0 %v2111
        %2306 = vmatprep.subr.mxu0 0.0
        %2307 = vmatpush2.msra.mxu0 0.0
        %2308 = vmatprep.subr.mxu0 0.0
        %2309 = vmatpush2.msra.mxu0 0.0
        %2310 = vmatprep.subr.mxu0 0.0
        %2311 = vmatpush2.msra.mxu0 0.0
        %2312 = vmatprep.subr.mxu0 0.0
        %2313 = vmatpush2.msra.mxu0 0.0
        %2314 = vmatprep.subr.mxu0 0.0
        %2315 = vmatpush2.msra.mxu0 0.0
        %2316 = vmatprep.subr.mxu0 0.0
        %2317 = vmatpush2.msra.mxu0 0.0
        %2318 = vmatprep.subr.mxu0 0.0
        %2319 = vmatpush2.msra.mxu0 0.0
        %2320 = vmatprep.subr.mxu0 0.0
        %2321 = vmatpush2.msra.mxu0 0.0
        %2322 = vmatprep.subr.mxu0 0.0
        %2323 = vmatpush2.msra.mxu0 0.0
        %2324 = vmatprep.subr.mxu0 0.0
        %2325 = vmatpush2.msra.mxu0 0.0
        %2326 = vmatprep.subr.mxu0 0.0
        %2327 = vmatpush2.msra.mxu0 0.0
        %2328 = vmatprep.subr.mxu0 0.0
        %2329 = vmatpush2.msra.mxu0 0.0
        %2330 = vmatprep.subr.mxu0 0.0
        %2331 = vmatpush2.msra.mxu0 0.0
        %2332 = vmatprep.subr.mxu0 0.0
        %2333 = vmatpush2.msra.mxu0 0.0
        %2334 = vmatprep.subr.mxu0 0.0
        %2335 = vmatpush2.msra.mxu0 0.0
        %2336 = vmatprep.subr.mxu0 0.0
        %2337 = vmatpush2.msra.mxu0 0.0
        %2338 = vmatprep.mubr.f32.mxu0 0.0
        %2339 = vmatmul.mubr.f32.gmra.mxu0 %v2109
        %v2340 = vpop.f32.mrf.mxu0
        %v2341 = vadd.f32 %v2262, %v2340
        %v2342 = vpop.f32.mrf.mxu0
        %v2343 = vadd.f32 %v2266, %v2342
        %2344 = vdwg.mxu0
        %2345 = vmatprep.subr.mxu0 0.0
        %2346 = vmatpush1.msra.mxu0 %v2158
        %2347 = vmatprep.subr.mxu0 0.0
        %2348 = vmatpush1.msra.mxu0 %v2155
        %2349 = vmatprep.subr.mxu0 0.0
        %2350 = vmatpush1.msra.mxu0 %v2152
        %2351 = vmatprep.subr.mxu0 0.0
        %2352 = vmatpush1.msra.mxu0 %v2149
        %2353 = vmatprep.subr.mxu0 0.0
        %2354 = vmatpush1.msra.mxu0 %v2146
        %2355 = vmatprep.subr.mxu0 0.0
        %2356 = vmatpush1.msra.mxu0 %v2143
        %2357 = vmatprep.subr.mxu0 0.0
        %2358 = vmatpush1.msra.mxu0 %v2140
        %2359 = vmatprep.subr.mxu0 0.0
        %2360 = vmatpush1.msra.mxu0 %v2137
        %2361 = vmatprep.subr.mxu0 0.0
        %2362 = vmatpush1.msra.mxu0 %v2134
        %2363 = vmatprep.subr.mxu0 0.0
        %2364 = vmatpush1.msra.mxu0 %v2131
        %2365 = vmatprep.subr.mxu0 0.0
        %2366 = vmatpush1.msra.mxu0 %v2128
        %2367 = vmatprep.subr.mxu0 0.0
        %2368 = vmatpush1.msra.mxu0 %v2125
        %2369 = vmatprep.subr.mxu0 0.0
        %2370 = vmatpush1.msra.mxu0 %v2122
        %2371 = vmatprep.subr.mxu0 0.0
        %2372 = vmatpush1.msra.mxu0 %v2119
        %2373 = vmatprep.subr.mxu0 0.0
        %2374 = vmatpush1.msra.mxu0 %v2116
        %2375 = vmatprep.subr.mxu0 0.0
        %2376 = vmatpush1.msra.mxu0 %v2113
        %2377 = vmatprep.subr.mxu0 0.0
        %2378 = vmatpush2.msra.mxu0 0.0
        %2379 = vmatprep.subr.mxu0 0.0
        %2380 = vmatpush2.msra.mxu0 0.0
        %2381 = vmatprep.subr.mxu0 0.0
        %2382 = vmatpush2.msra.mxu0 0.0
        %2383 = vmatprep.subr.mxu0 0.0
        %2384 = vmatpush2.msra.mxu0 0.0
        %2385 = vmatprep.subr.mxu0 0.0
        %2386 = vmatpush2.msra.mxu0 0.0
        %2387 = vmatprep.subr.mxu0 0.0
        %2388 = vmatpush2.msra.mxu0 0.0
        %2389 = vmatprep.subr.mxu0 0.0
        %2390 = vmatpush2.msra.mxu0 0.0
        %2391 = vmatprep.subr.mxu0 0.0
        %2392 = vmatpush2.msra.mxu0 0.0
        %2393 = vmatprep.subr.mxu0 0.0
        %2394 = vmatpush2.msra.mxu0 0.0
        %2395 = vmatprep.subr.mxu0 0.0
        %2396 = vmatpush2.msra.mxu0 0.0
        %2397 = vmatprep.subr.mxu0 0.0
        %2398 = vmatpush2.msra.mxu0 0.0
        %2399 = vmatprep.subr.mxu0 0.0
        %2400 = vmatpush2.msra.mxu0 0.0
        %2401 = vmatprep.subr.mxu0 0.0
        %2402 = vmatpush2.msra.mxu0 0.0
        %2403 = vmatprep.subr.mxu0 0.0
        %2404 = vmatpush2.msra.mxu0 0.0
        %2405 = vmatprep.subr.mxu0 0.0
        %2406 = vmatpush2.msra.mxu0 0.0
        %2407 = vmatprep.subr.mxu0 0.0
        %2408 = vmatpush2.msra.mxu0 0.0
        %2409 = vmatprep.mubr.f32.mxu0 0.0
        %2410 = vmatmul.mubr.f32.gmra.mxu0 %v2109
        %v2411 = vpop.f32.mrf.mxu0
        %v2412 = vadd.f32 %v2270, %v2411
        %v2413 = vpop.f32.mrf.mxu0
        %2414 = vdwg.mxu0
        %v2416 = vsel %vm934, %v2341, 0
        %v2419 = vsel %vm934, %v2343, 0
        %2421 = vmatprep.subr.mxu0 0.0
        %2422 = vmatpush1.xpose.msra.mxu0 0.0
        %2423 = vmatprep.subr.mxu0 0.0
        %2424 = vmatpush1.xpose.msra.mxu0 0.0
        %2425 = vmatprep.subr.mxu0 0.0
        %2426 = vmatpush1.xpose.msra.mxu0 0.0
        %2427 = vmatprep.subr.mxu0 0.0
        %2428 = vmatpush1.xpose.msra.mxu0 0.0
        %2429 = vmatprep.subr.mxu0 0.0
        %2430 = vmatpush1.xpose.msra.mxu0 0.0
        %2431 = vmatprep.subr.mxu0 0.0
        %2432 = vmatpush1.xpose.msra.mxu0 0.0
        %2433 = vmatprep.subr.mxu0 0.0
        %2434 = vmatpush1.xpose.msra.mxu0 0.0
        %2435 = vmatprep.subr.mxu0 0.0
        %2436 = vmatpush1.xpose.msra.mxu0 0.0
        %2437 = vmatprep.subr.mxu0 0.0
        %2438 = vmatpush1.xpose.msra.mxu0 0.0
        %2439 = vmatprep.subr.mxu0 0.0
        %2440 = vmatpush1.xpose.msra.mxu0 0.0
        %2441 = vmatprep.subr.mxu0 0.0
        %2442 = vmatpush1.xpose.msra.mxu0 0.0
        %2443 = vmatprep.subr.mxu0 0.0
        %2444 = vmatpush1.xpose.msra.mxu0 0.0
        %2445 = vmatprep.subr.mxu0 0.0
        %2446 = vmatpush1.xpose.msra.mxu0 0.0
        %2447 = vmatprep.subr.mxu0 0.0
        %2448 = vmatpush1.xpose.msra.mxu0 0.0
        %2449 = vmatprep.subr.mxu0 0.0
        %2450 = vmatpush1.xpose.msra.mxu0 0.0
        %2451 = vmatprep.subr.mxu0 0.0
        %2452 = vmatpush1.xpose.msra.mxu0 %v2419
        %2453 = vmatprep.subr.mxu0 0.0
        %2454 = vmatpush2.xpose.msra.mxu0 0.0
        %2455 = vmatprep.subr.mxu0 0.0
        %2456 = vmatpush2.xpose.msra.mxu0 0.0
        %2457 = vmatprep.subr.mxu0 0.0
        %2458 = vmatpush2.xpose.msra.mxu0 0.0
        %2459 = vmatprep.subr.mxu0 0.0
        %2460 = vmatpush2.xpose.msra.mxu0 0.0
        %2461 = vmatprep.subr.mxu0 0.0
        %2462 = vmatpush2.xpose.msra.mxu0 0.0
        %2463 = vmatprep.subr.mxu0 0.0
        %2464 = vmatpush2.xpose.msra.mxu0 0.0
        %2465 = vmatprep.subr.mxu0 0.0
        %2466 = vmatpush2.xpose.msra.mxu0 0.0
        %2467 = vmatprep.subr.mxu0 0.0
        %2468 = vmatpush2.xpose.msra.mxu0 0.0
        %2469 = vmatprep.subr.mxu0 0.0
        %2470 = vmatpush2.xpose.msra.mxu0 0.0
        %2471 = vmatprep.subr.mxu0 0.0
        %2472 = vmatpush2.xpose.msra.mxu0 0.0
        %2473 = vmatprep.subr.mxu0 0.0
        %2474 = vmatpush2.xpose.msra.mxu0 0.0
        %2475 = vmatprep.subr.mxu0 0.0
        %2476 = vmatpush2.xpose.msra.mxu0 0.0
        %2477 = vmatprep.subr.mxu0 0.0
        %2478 = vmatpush2.xpose.msra.mxu0 0.0
        %2479 = vmatprep.subr.mxu0 0.0
        %2480 = vmatpush2.xpose.msra.mxu0 0.0
        %2481 = vmatprep.subr.mxu0 0.0
        %2482 = vmatpush2.xpose.msra.mxu0 0.0
        %2483 = vmatprep.subr.mxu0 0.0
        %2484 = vmatpush2.xpose.msra.mxu0 0.0
        %2485 = vmatprep.mubr.f32.mxu0 0.0
        %2486 = vmatmul.mubr.f32.gmra.mxu0 %v2416
        %v2487 = vpop.f32.mrf.mxu0
        %v2488 = vadd.f32 0.0, %v2487
        %v2489 = vpop.f32.mrf.mxu0
        %2490 = vdwg.mxu0
        %v2491 = vmul.f32 %v2488, 0.17677669
        %v2492 = vsel %vm1012, %v2491, -inf
        %2493 = vmax.xlane.f32.xlu0 %v2492
        %v2494 = vpop.xlane.xlu0 %2493
        %v2495 = vsub.f32 %v2491, %v2494
        %v2496 = vmul.f32 %v2495, 1.442695
        %v2497 = vpow.pop %v2496
        %v2498 = vsel %vm1012, %v2497, 0.0
        %2499 = vadd.xlane.f32.xlu0 %v2498
        %v2500 = vpop.xlane.xlu0 %2499
        %v2501 = vrcp.pop %v2500
        %v2502 = vmul.f32 %v2497, %v2501
        %v2504 = vsel %vm1012, %v2502, 0
        %2506 = vmatprep.subr.mxu0 0.0
        %2507 = vmatpush1.msra.mxu0 0.0
        %2508 = vmatprep.subr.mxu0 0.0
        %2509 = vmatpush1.msra.mxu0 0.0
        %2510 = vmatprep.subr.mxu0 0.0
        %2511 = vmatpush1.msra.mxu0 0.0
        %2512 = vmatprep.subr.mxu0 0.0
        %2513 = vmatpush1.msra.mxu0 0.0
        %2514 = vmatprep.subr.mxu0 0.0
        %2515 = vmatpush1.msra.mxu0 0.0
        %2516 = vmatprep.subr.mxu0 0.0
        %2517 = vmatpush1.msra.mxu0 0.0
        %2518 = vmatprep.subr.mxu0 0.0
        %2519 = vmatpush1.msra.mxu0 0.0
        %2520 = vmatprep.subr.mxu0 0.0
        %2521 = vmatpush1.msra.mxu0 0.0
        %2522 = vmatprep.subr.mxu0 0.0
        %2523 = vmatpush1.msra.mxu0 0.0
        %2524 = vmatprep.subr.mxu0 0.0
        %2525 = vmatpush1.msra.mxu0 0.0
        %2526 = vmatprep.subr.mxu0 0.0
        %2527 = vmatpush1.msra.mxu0 0.0
        %2528 = vmatprep.subr.mxu0 0.0
        %2529 = vmatpush1.msra.mxu0 0.0
        %2530 = vmatprep.subr.mxu0 0.0
        %2531 = vmatpush1.msra.mxu0 0.0
        %2532 = vmatprep.subr.mxu0 0.0
        %2533 = vmatpush1.msra.mxu0 0.0
        %2534 = vmatprep.subr.mxu0 0.0
        %2535 = vmatpush1.msra.mxu0 0.0
        %2536 = vmatprep.subr.mxu0 0.0
        %2537 = vmatpush1.msra.mxu0 %v2412
        %2538 = vmatprep.subr.mxu0 0.0
        %2539 = vmatpush2.msra.mxu0 0.0
        %2540 = vmatprep.subr.mxu0 0.0
        %2541 = vmatpush2.msra.mxu0 0.0
        %2542 = vmatprep.subr.mxu0 0.0
        %2543 = vmatpush2.msra.mxu0 0.0
        %2544 = vmatprep.subr.mxu0 0.0
        %2545 = vmatpush2.msra.mxu0 0.0
        %2546 = vmatprep.subr.mxu0 0.0
        %2547 = vmatpush2.msra.mxu0 0.0
        %2548 = vmatprep.subr.mxu0 0.0
        %2549 = vmatpush2.msra.mxu0 0.0
        %2550 = vmatprep.subr.mxu0 0.0
        %2551 = vmatpush2.msra.mxu0 0.0
        %2552 = vmatprep.subr.mxu0 0.0
        %2553 = vmatpush2.msra.mxu0 0.0
        %2554 = vmatprep.subr.mxu0 0.0
        %2555 = vmatpush2.msra.mxu0 0.0
        %2556 = vmatprep.subr.mxu0 0.0
        %2557 = vmatpush2.msra.mxu0 0.0
        %2558 = vmatprep.subr.mxu0 0.0
        %2559 = vmatpush2.msra.mxu0 0.0
        %2560 = vmatprep.subr.mxu0 0.0
        %2561 = vmatpush2.msra.mxu0 0.0
        %2562 = vmatprep.subr.mxu0 0.0
        %2563 = vmatpush2.msra.mxu0 0.0
        %2564 = vmatprep.subr.mxu0 0.0
        %2565 = vmatpush2.msra.mxu0 0.0
        %2566 = vmatprep.subr.mxu0 0.0
        %2567 = vmatpush2.msra.mxu0 0.0
        %2568 = vmatprep.subr.mxu0 0.0
        %2569 = vmatpush2.msra.mxu0 0.0
        %2570 = vmatprep.mubr.f32.mxu0 0.0
        %2571 = vmatmul.mubr.f32.gmra.mxu0 %v2504
        %v2572 = vpop.f32.mrf.mxu0
        %v2573 = vadd.f32 0.0, %v2572
        %v2574 = vpop.f32.mrf.mxu0
        %2575 = vdwg.mxu0
        %2576 = vrot.lane.b32.xlu0 %v2341, 96
        %v2577 = vpop.permute.xlu0 %2576
        %2578 = vrot.lane.b32.xlu0 %v2343, 96
        %v2579 = vpop.permute.xlu0 %2578
        %v2580 = vsel %vm934, %v2577, 0
        %v2582 = vsel %vm934, %v2579, 0
        %2584 = vmatprep.subr.mxu0 0.0
        %2585 = vmatpush1.xpose.msra.mxu0 0.0
        %2586 = vmatprep.subr.mxu0 0.0
        %2587 = vmatpush1.xpose.msra.mxu0 0.0
        %2588 = vmatprep.subr.mxu0 0.0
        %2589 = vmatpush1.xpose.msra.mxu0 0.0
        %2590 = vmatprep.subr.mxu0 0.0
        %2591 = vmatpush1.xpose.msra.mxu0 0.0
        %2592 = vmatprep.subr.mxu0 0.0
        %2593 = vmatpush1.xpose.msra.mxu0 0.0
        %2594 = vmatprep.subr.mxu0 0.0
        %2595 = vmatpush1.xpose.msra.mxu0 0.0
        %2596 = vmatprep.subr.mxu0 0.0
        %2597 = vmatpush1.xpose.msra.mxu0 0.0
        %2598 = vmatprep.subr.mxu0 0.0
        %2599 = vmatpush1.xpose.msra.mxu0 0.0
        %2600 = vmatprep.subr.mxu0 0.0
        %2601 = vmatpush1.xpose.msra.mxu0 0.0
        %2602 = vmatprep.subr.mxu0 0.0
        %2603 = vmatpush1.xpose.msra.mxu0 0.0
        %2604 = vmatprep.subr.mxu0 0.0
        %2605 = vmatpush1.xpose.msra.mxu0 0.0
        %2606 = vmatprep.subr.mxu0 0.0
        %2607 = vmatpush1.xpose.msra.mxu0 0.0
        %2608 = vmatprep.subr.mxu0 0.0
        %2609 = vmatpush1.xpose.msra.mxu0 0.0
        %2610 = vmatprep.subr.mxu0 0.0
        %2611 = vmatpush1.xpose.msra.mxu0 0.0
        %2612 = vmatprep.subr.mxu0 0.0
        %2613 = vmatpush1.xpose.msra.mxu0 0.0
        %2614 = vmatprep.subr.mxu0 0.0
        %2615 = vmatpush1.xpose.msra.mxu0 %v2582
        %2616 = vmatprep.subr.mxu0 0.0
        %2617 = vmatpush2.xpose.msra.mxu0 0.0
        %2618 = vmatprep.subr.mxu0 0.0
        %2619 = vmatpush2.xpose.msra.mxu0 0.0
        %2620 = vmatprep.subr.mxu0 0.0
        %2621 = vmatpush2.xpose.msra.mxu0 0.0
        %2622 = vmatprep.subr.mxu0 0.0
        %2623 = vmatpush2.xpose.msra.mxu0 0.0
        %2624 = vmatprep.subr.mxu0 0.0
        %2625 = vmatpush2.xpose.msra.mxu0 0.0
        %2626 = vmatprep.subr.mxu0 0.0
        %2627 = vmatpush2.xpose.msra.mxu0 0.0
        %2628 = vmatprep.subr.mxu0 0.0
        %2629 = vmatpush2.xpose.msra.mxu0 0.0
        %2630 = vmatprep.subr.mxu0 0.0
        %2631 = vmatpush2.xpose.msra.mxu0 0.0
        %2632 = vmatprep.subr.mxu0 0.0
        %2633 = vmatpush2.xpose.msra.mxu0 0.0
        %2634 = vmatprep.subr.mxu0 0.0
        %2635 = vmatpush2.xpose.msra.mxu0 0.0
        %2636 = vmatprep.subr.mxu0 0.0
        %2637 = vmatpush2.xpose.msra.mxu0 0.0
        %2638 = vmatprep.subr.mxu0 0.0
        %2639 = vmatpush2.xpose.msra.mxu0 0.0
        %2640 = vmatprep.subr.mxu0 0.0
        %2641 = vmatpush2.xpose.msra.mxu0 0.0
        %2642 = vmatprep.subr.mxu0 0.0
        %2643 = vmatpush2.xpose.msra.mxu0 0.0
        %2644 = vmatprep.subr.mxu0 0.0
        %2645 = vmatpush2.xpose.msra.mxu0 0.0
        %2646 = vmatprep.subr.mxu0 0.0
        %2647 = vmatpush2.xpose.msra.mxu0 0.0
        %2648 = vmatprep.mubr.f32.mxu0 0.0
        %2649 = vmatmul.mubr.f32.gmra.mxu0 %v2580
        %v2650 = vpop.f32.mrf.mxu0
        %v2651 = vadd.f32 0.0, %v2650
        %v2652 = vpop.f32.mrf.mxu0
        %2653 = vdwg.mxu0
        %v2654 = vmul.f32 %v2651, 0.17677669
        %v2655 = vsel %vm1012, %v2654, -inf
        %2656 = vmax.xlane.f32.xlu0 %v2655
        %v2657 = vpop.xlane.xlu0 %2656
        %v2658 = vsub.f32 %v2654, %v2657
        %v2659 = vmul.f32 %v2658, 1.442695
        %v2660 = vpow.pop %v2659
        %v2661 = vsel %vm1012, %v2660, 0.0
        %2662 = vadd.xlane.f32.xlu0 %v2661
        %v2663 = vpop.xlane.xlu0 %2662
        %v2664 = vrcp.pop %v2663
        %v2665 = vmul.f32 %v2660, %v2664
        %2667 = vrot.lane.b32.xlu0 %v2412, 96
        %v2668 = vpop.permute.xlu0 %2667
        %v2671 = vsel %vm1012, %v2665, 0
        %2673 = vmatprep.subr.mxu0 0.0
        %2674 = vmatpush1.msra.mxu0 0.0
        %2675 = vmatprep.subr.mxu0 0.0
        %2676 = vmatpush1.msra.mxu0 0.0
        %2677 = vmatprep.subr.mxu0 0.0
        %2678 = vmatpush1.msra.mxu0 0.0
        %2679 = vmatprep.subr.mxu0 0.0
        %2680 = vmatpush1.msra.mxu0 0.0
        %2681 = vmatprep.subr.mxu0 0.0
        %2682 = vmatpush1.msra.mxu0 0.0
        %2683 = vmatprep.subr.mxu0 0.0
        %2684 = vmatpush1.msra.mxu0 0.0
        %2685 = vmatprep.subr.mxu0 0.0
        %2686 = vmatpush1.msra.mxu0 0.0
        %2687 = vmatprep.subr.mxu0 0.0
        %2688 = vmatpush1.msra.mxu0 0.0
        %2689 = vmatprep.subr.mxu0 0.0
        %2690 = vmatpush1.msra.mxu0 0.0
        %2691 = vmatprep.subr.mxu0 0.0
        %2692 = vmatpush1.msra.mxu0 0.0
        %2693 = vmatprep.subr.mxu0 0.0
        %2694 = vmatpush1.msra.mxu0 0.0
        %2695 = vmatprep.subr.mxu0 0.0
        %2696 = vmatpush1.msra.mxu0 0.0
        %2697 = vmatprep.subr.mxu0 0.0
        %2698 = vmatpush1.msra.mxu0 0.0
        %2699 = vmatprep.subr.mxu0 0.0
        %2700 = vmatpush1.msra.mxu0 0.0
        %2701 = vmatprep.subr.mxu0 0.0
        %2702 = vmatpush1.msra.mxu0 0.0
        %2703 = vmatprep.subr.mxu0 0.0
        %2704 = vmatpush1.msra.mxu0 %v2668
        %2705 = vmatprep.subr.mxu0 0.0
        %2706 = vmatpush2.msra.mxu0 0.0
        %2707 = vmatprep.subr.mxu0 0.0
        %2708 = vmatpush2.msra.mxu0 0.0
        %2709 = vmatprep.subr.mxu0 0.0
        %2710 = vmatpush2.msra.mxu0 0.0
        %2711 = vmatprep.subr.mxu0 0.0
        %2712 = vmatpush2.msra.mxu0 0.0
        %2713 = vmatprep.subr.mxu0 0.0
        %2714 = vmatpush2.msra.mxu0 0.0
        %2715 = vmatprep.subr.mxu0 0.0
        %2716 = vmatpush2.msra.mxu0 0.0
        %2717 = vmatprep.subr.mxu0 0.0
        %2718 = vmatpush2.msra.mxu0 0.0
        %2719 = vmatprep.subr.mxu0 0.0
        %2720 = vmatpush2.msra.mxu0 0.0
        %2721 = vmatprep.subr.mxu0 0.0
        %2722 = vmatpush2.msra.mxu0 0.0
        %2723 = vmatprep.subr.mxu0 0.0
        %2724 = vmatpush2.msra.mxu0 0.0
        %2725 = vmatprep.subr.mxu0 0.0
        %2726 = vmatpush2.msra.mxu0 0.0
        %2727 = vmatprep.subr.mxu0 0.0
        %2728 = vmatpush2.msra.mxu0 0.0
        %2729 = vmatprep.subr.mxu0 0.0
        %2730 = vmatpush2.msra.mxu0 0.0
        %2731 = vmatprep.subr.mxu0 0.0
        %2732 = vmatpush2.msra.mxu0 0.0
        %2733 = vmatprep.subr.mxu0 0.0
        %2734 = vmatpush2.msra.mxu0 0.0
        %2735 = vmatprep.subr.mxu0 0.0
        %2736 = vmatpush2.msra.mxu0 0.0
        %2737 = vmatprep.mubr.f32.mxu0 0.0
        %2738 = vmatmul.mubr.f32.gmra.mxu0 %v2671
        %v2739 = vpop.f32.mrf.mxu0
        %v2740 = vadd.f32 0.0, %v2739
        %v2741 = vpop.f32.mrf.mxu0
        %2742 = vdwg.mxu0
        %v2744 = vsel %vm934, %v2740, 0
        %2746 = vmatprep.subr.mxu0 0.0
        %2747 = vmatpush1.msra.mxu0 0.0
        %2748 = vmatprep.subr.mxu0 0.0
        %2749 = vmatpush1.msra.mxu0 0.0
        %2750 = vmatprep.subr.mxu0 0.0
        %2751 = vmatpush1.msra.mxu0 0.0
        %2752 = vmatprep.subr.mxu0 0.0
        %2753 = vmatpush1.msra.mxu0 0.0
        %2754 = vmatprep.subr.mxu0 0.0
        %2755 = vmatpush1.msra.mxu0 0.0
        %2756 = vmatprep.subr.mxu0 0.0
        %2757 = vmatpush1.msra.mxu0 0.0
        %2758 = vmatprep.subr.mxu0 0.0
        %2759 = vmatpush1.msra.mxu0 0.0
        %2760 = vmatprep.subr.mxu0 0.0
        %2761 = vmatpush1.msra.mxu0 0.0
        %2762 = vmatprep.subr.mxu0 0.0
        %2763 = vmatpush1.msra.mxu0 0.0
        %2764 = vmatprep.subr.mxu0 0.0
        %2765 = vmatpush1.msra.mxu0 0.0
        %2766 = vmatprep.subr.mxu0 0.0
        %2767 = vmatpush1.msra.mxu0 0.0
        %2768 = vmatprep.subr.mxu0 0.0
        %2769 = vmatpush1.msra.mxu0 0.0
        %2770 = vmatprep.subr.mxu0 0.0
        %2771 = vmatpush1.msra.mxu0 %v2169
        %2772 = vmatprep.subr.mxu0 0.0
        %2773 = vmatpush1.msra.mxu0 %v2168
        %2774 = vmatprep.subr.mxu0 0.0
        %2775 = vmatpush1.msra.mxu0 %v2167
        %2776 = vmatprep.subr.mxu0 0.0
        %2777 = vmatpush1.msra.mxu0 %v2166
        %2778 = vmatprep.subr.mxu0 0.0
        %2779 = vmatpush2.msra.mxu0 0.0
        %2780 = vmatprep.subr.mxu0 0.0
        %2781 = vmatpush2.msra.mxu0 0.0
        %2782 = vmatprep.subr.mxu0 0.0
        %2783 = vmatpush2.msra.mxu0 0.0
        %2784 = vmatprep.subr.mxu0 0.0
        %2785 = vmatpush2.msra.mxu0 0.0
        %2786 = vmatprep.subr.mxu0 0.0
        %2787 = vmatpush2.msra.mxu0 0.0
        %2788 = vmatprep.subr.mxu0 0.0
        %2789 = vmatpush2.msra.mxu0 0.0
        %2790 = vmatprep.subr.mxu0 0.0
        %2791 = vmatpush2.msra.mxu0 0.0
        %2792 = vmatprep.subr.mxu0 0.0
        %2793 = vmatpush2.msra.mxu0 0.0
        %2794 = vmatprep.subr.mxu0 0.0
        %2795 = vmatpush2.msra.mxu0 0.0
        %2796 = vmatprep.subr.mxu0 0.0
        %2797 = vmatpush2.msra.mxu0 0.0
        %2798 = vmatprep.subr.mxu0 0.0
        %2799 = vmatpush2.msra.mxu0 0.0
        %2800 = vmatprep.subr.mxu0 0.0
        %2801 = vmatpush2.msra.mxu0 0.0
        %2802 = vmatprep.subr.mxu0 0.0
        %2803 = vmatpush2.msra.mxu0 0.0
        %2804 = vmatprep.subr.mxu0 0.0
        %2805 = vmatpush2.msra.mxu0 0.0
        %2806 = vmatprep.subr.mxu0 0.0
        %2807 = vmatpush2.msra.mxu0 0.0
        %2808 = vmatprep.subr.mxu0 0.0
        %2809 = vmatpush2.msra.mxu0 0.0
        %2810 = vmatprep.mubr.f32.mxu0 0.0
        %2811 = vmatmul.mubr.f32.gmra.mxu0 %v2744
        %v2812 = vpop.f32.mrf.mxu0
        %v2813 = vadd.f32 0.0, %v2812
        %v2814 = vpop.f32.mrf.mxu0
        %2815 = vdwg.mxu0
        %v2817 = vsel %vm934, %v2573, 0
        %2819 = vmatprep.subr.mxu0 0.0
        %2820 = vmatpush1.msra.mxu0 0.0
        %2821 = vmatprep.subr.mxu0 0.0
        %2822 = vmatpush1.msra.mxu0 0.0
        %2823 = vmatprep.subr.mxu0 0.0
        %2824 = vmatpush1.msra.mxu0 0.0
        %2825 = vmatprep.subr.mxu0 0.0
        %2826 = vmatpush1.msra.mxu0 0.0
        %2827 = vmatprep.subr.mxu0 0.0
        %2828 = vmatpush1.msra.mxu0 0.0
        %2829 = vmatprep.subr.mxu0 0.0
        %2830 = vmatpush1.msra.mxu0 0.0
        %2831 = vmatprep.subr.mxu0 0.0
        %2832 = vmatpush1.msra.mxu0 0.0
        %2833 = vmatprep.subr.mxu0 0.0
        %2834 = vmatpush1.msra.mxu0 0.0
        %2835 = vmatprep.subr.mxu0 0.0
        %2836 = vmatpush1.msra.mxu0 0.0
        %2837 = vmatprep.subr.mxu0 0.0
        %2838 = vmatpush1.msra.mxu0 0.0
        %2839 = vmatprep.subr.mxu0 0.0
        %2840 = vmatpush1.msra.mxu0 0.0
        %2841 = vmatprep.subr.mxu0 0.0
        %2842 = vmatpush1.msra.mxu0 0.0
        %2843 = vmatprep.subr.mxu0 0.0
        %2844 = vmatpush1.msra.mxu0 %v2165
        %2845 = vmatprep.subr.mxu0 0.0
        %2846 = vmatpush1.msra.mxu0 %v2164
        %2847 = vmatprep.subr.mxu0 0.0
        %2848 = vmatpush1.msra.mxu0 %v2163
        %2849 = vmatprep.subr.mxu0 0.0
        %2850 = vmatpush1.msra.mxu0 %v2162
        %2851 = vmatprep.subr.mxu0 0.0
        %2852 = vmatpush2.msra.mxu0 0.0
        %2853 = vmatprep.subr.mxu0 0.0
        %2854 = vmatpush2.msra.mxu0 0.0
        %2855 = vmatprep.subr.mxu0 0.0
        %2856 = vmatpush2.msra.mxu0 0.0
        %2857 = vmatprep.subr.mxu0 0.0
        %2858 = vmatpush2.msra.mxu0 0.0
        %2859 = vmatprep.subr.mxu0 0.0
        %2860 = vmatpush2.msra.mxu0 0.0
        %2861 = vmatprep.subr.mxu0 0.0
        %2862 = vmatpush2.msra.mxu0 0.0
        %2863 = vmatprep.subr.mxu0 0.0
        %2864 = vmatpush2.msra.mxu0 0.0
        %2865 = vmatprep.subr.mxu0 0.0
        %2866 = vmatpush2.msra.mxu0 0.0
        %2867 = vmatprep.subr.mxu0 0.0
        %2868 = vmatpush2.msra.mxu0 0.0
        %2869 = vmatprep.subr.mxu0 0.0
        %2870 = vmatpush2.msra.mxu0 0.0
        %2871 = vmatprep.subr.mxu0 0.0
        %2872 = vmatpush2.msra.mxu0 0.0
        %2873 = vmatprep.subr.mxu0 0.0
        %2874 = vmatpush2.msra.mxu0 0.0
        %2875 = vmatprep.subr.mxu0 0.0
        %2876 = vmatpush2.msra.mxu0 0.0
        %2877 = vmatprep.subr.mxu0 0.0
        %2878 = vmatpush2.msra.mxu0 0.0
        %2879 = vmatprep.subr.mxu0 0.0
        %2880 = vmatpush2.msra.mxu0 0.0
        %2881 = vmatprep.subr.mxu0 0.0
        %2882 = vmatpush2.msra.mxu0 0.0
        %2883 = vmatprep.mubr.f32.mxu0 0.0
        %2884 = vmatmul.mubr.f32.gmra.mxu0 %v2817
        %v2885 = vpop.f32.mrf.mxu0
        %v2886 = vadd.f32 %v2813, %v2885
        %v2887 = vpop.f32.mrf.mxu0
        %2888 = vdwg.mxu0
        %2889 = vrot.lane.b32.xlu0 %v2341, 64
        %v2890 = vpop.permute.xlu0 %2889
        %2891 = vrot.lane.b32.xlu0 %v2343, 64
        %v2892 = vpop.permute.xlu0 %2891
        %v2893 = vsel %vm934, %v2890, 0
        %v2895 = vsel %vm934, %v2892, 0
        %2897 = vmatprep.subr.mxu0 0.0
        %2898 = vmatpush1.xpose.msra.mxu0 0.0
        %2899 = vmatprep.subr.mxu0 0.0
        %2900 = vmatpush1.xpose.msra.mxu0 0.0
        %2901 = vmatprep.subr.mxu0 0.0
        %2902 = vmatpush1.xpose.msra.mxu0 0.0
        %2903 = vmatprep.subr.mxu0 0.0
        %2904 = vmatpush1.xpose.msra.mxu0 0.0
        %2905 = vmatprep.subr.mxu0 0.0
        %2906 = vmatpush1.xpose.msra.mxu0 0.0
        %2907 = vmatprep.subr.mxu0 0.0
        %2908 = vmatpush1.xpose.msra.mxu0 0.0
        %2909 = vmatprep.subr.mxu0 0.0
        %2910 = vmatpush1.xpose.msra.mxu0 0.0
        %2911 = vmatprep.subr.mxu0 0.0
        %2912 = vmatpush1.xpose.msra.mxu0 0.0
        %2913 = vmatprep.subr.mxu0 0.0
        %2914 = vmatpush1.xpose.msra.mxu0 0.0
        %2915 = vmatprep.subr.mxu0 0.0
        %2916 = vmatpush1.xpose.msra.mxu0 0.0
        %2917 = vmatprep.subr.mxu0 0.0
        %2918 = vmatpush1.xpose.msra.mxu0 0.0
        %2919 = vmatprep.subr.mxu0 0.0
        %2920 = vmatpush1.xpose.msra.mxu0 0.0
        %2921 = vmatprep.subr.mxu0 0.0
        %2922 = vmatpush1.xpose.msra.mxu0 0.0
        %2923 = vmatprep.subr.mxu0 0.0
        %2924 = vmatpush1.xpose.msra.mxu0 0.0
        %2925 = vmatprep.subr.mxu0 0.0
        %2926 = vmatpush1.xpose.msra.mxu0 0.0
        %2927 = vmatprep.subr.mxu0 0.0
        %2928 = vmatpush1.xpose.msra.mxu0 %v2895
        %2929 = vmatprep.subr.mxu0 0.0
        %2930 = vmatpush2.xpose.msra.mxu0 0.0
        %2931 = vmatprep.subr.mxu0 0.0
        %2932 = vmatpush2.xpose.msra.mxu0 0.0
        %2933 = vmatprep.subr.mxu0 0.0
        %2934 = vmatpush2.xpose.msra.mxu0 0.0
        %2935 = vmatprep.subr.mxu0 0.0
        %2936 = vmatpush2.xpose.msra.mxu0 0.0
        %2937 = vmatprep.subr.mxu0 0.0
        %2938 = vmatpush2.xpose.msra.mxu0 0.0
        %2939 = vmatprep.subr.mxu0 0.0
        %2940 = vmatpush2.xpose.msra.mxu0 0.0
        %2941 = vmatprep.subr.mxu0 0.0
        %2942 = vmatpush2.xpose.msra.mxu0 0.0
        %2943 = vmatprep.subr.mxu0 0.0
        %2944 = vmatpush2.xpose.msra.mxu0 0.0
        %2945 = vmatprep.subr.mxu0 0.0
        %2946 = vmatpush2.xpose.msra.mxu0 0.0
        %2947 = vmatprep.subr.mxu0 0.0
        %2948 = vmatpush2.xpose.msra.mxu0 0.0
        %2949 = vmatprep.subr.mxu0 0.0
        %2950 = vmatpush2.xpose.msra.mxu0 0.0
        %2951 = vmatprep.subr.mxu0 0.0
        %2952 = vmatpush2.xpose.msra.mxu0 0.0
        %2953 = vmatprep.subr.mxu0 0.0
        %2954 = vmatpush2.xpose.msra.mxu0 0.0
        %2955 = vmatprep.subr.mxu0 0.0
        %2956 = vmatpush2.xpose.msra.mxu0 0.0
        %2957 = vmatprep.subr.mxu0 0.0
        %2958 = vmatpush2.xpose.msra.mxu0 0.0
        %2959 = vmatprep.subr.mxu0 0.0
        %2960 = vmatpush2.xpose.msra.mxu0 0.0
        %2961 = vmatprep.mubr.f32.mxu0 0.0
        %2962 = vmatmul.mubr.f32.gmra.mxu0 %v2893
        %v2963 = vpop.f32.mrf.mxu0
        %v2964 = vadd.f32 0.0, %v2963
        %v2965 = vpop.f32.mrf.mxu0
        %2966 = vdwg.mxu0
        %v2967 = vmul.f32 %v2964, 0.17677669
        %v2968 = vsel %vm1012, %v2967, -inf
        %2969 = vmax.xlane.f32.xlu0 %v2968
        %v2970 = vpop.xlane.xlu0 %2969
        %v2971 = vsub.f32 %v2967, %v2970
        %v2972 = vmul.f32 %v2971, 1.442695
        %v2973 = vpow.pop %v2972
        %v2974 = vsel %vm1012, %v2973, 0.0
        %2975 = vadd.xlane.f32.xlu0 %v2974
        %v2976 = vpop.xlane.xlu0 %2975
        %v2977 = vrcp.pop %v2976
        %v2978 = vmul.f32 %v2973, %v2977
        %2979 = vrot.lane.b32.xlu0 %v2412, 64
        %v2980 = vpop.permute.xlu0 %2979
        %v2983 = vsel %vm1012, %v2978, 0
        %2985 = vmatprep.subr.mxu0 0.0
        %2986 = vmatpush1.msra.mxu0 0.0
        %2987 = vmatprep.subr.mxu0 0.0
        %2988 = vmatpush1.msra.mxu0 0.0
        %2989 = vmatprep.subr.mxu0 0.0
        %2990 = vmatpush1.msra.mxu0 0.0
        %2991 = vmatprep.subr.mxu0 0.0
        %2992 = vmatpush1.msra.mxu0 0.0
        %2993 = vmatprep.subr.mxu0 0.0
        %2994 = vmatpush1.msra.mxu0 0.0
        %2995 = vmatprep.subr.mxu0 0.0
        %2996 = vmatpush1.msra.mxu0 0.0
        %2997 = vmatprep.subr.mxu0 0.0
        %2998 = vmatpush1.msra.mxu0 0.0
        %2999 = vmatprep.subr.mxu0 0.0
        %3000 = vmatpush1.msra.mxu0 0.0
        %3001 = vmatprep.subr.mxu0 0.0
        %3002 = vmatpush1.msra.mxu0 0.0
        %3003 = vmatprep.subr.mxu0 0.0
        %3004 = vmatpush1.msra.mxu0 0.0
        %3005 = vmatprep.subr.mxu0 0.0
        %3006 = vmatpush1.msra.mxu0 0.0
        %3007 = vmatprep.subr.mxu0 0.0
        %3008 = vmatpush1.msra.mxu0 0.0
        %3009 = vmatprep.subr.mxu0 0.0
        %3010 = vmatpush1.msra.mxu0 0.0
        %3011 = vmatprep.subr.mxu0 0.0
        %3012 = vmatpush1.msra.mxu0 0.0
        %3013 = vmatprep.subr.mxu0 0.0
        %3014 = vmatpush1.msra.mxu0 0.0
        %3015 = vmatprep.subr.mxu0 0.0
        %3016 = vmatpush1.msra.mxu0 %v2980
        %3017 = vmatprep.subr.mxu0 0.0
        %3018 = vmatpush2.msra.mxu0 0.0
        %3019 = vmatprep.subr.mxu0 0.0
        %3020 = vmatpush2.msra.mxu0 0.0
        %3021 = vmatprep.subr.mxu0 0.0
        %3022 = vmatpush2.msra.mxu0 0.0
        %3023 = vmatprep.subr.mxu0 0.0
        %3024 = vmatpush2.msra.mxu0 0.0
        %3025 = vmatprep.subr.mxu0 0.0
        %3026 = vmatpush2.msra.mxu0 0.0
        %3027 = vmatprep.subr.mxu0 0.0
        %3028 = vmatpush2.msra.mxu0 0.0
        %3029 = vmatprep.subr.mxu0 0.0
        %3030 = vmatpush2.msra.mxu0 0.0
        %3031 = vmatprep.subr.mxu0 0.0
        %3032 = vmatpush2.msra.mxu0 0.0
        %3033 = vmatprep.subr.mxu0 0.0
        %3034 = vmatpush2.msra.mxu0 0.0
        %3035 = vmatprep.subr.mxu0 0.0
        %3036 = vmatpush2.msra.mxu0 0.0
        %3037 = vmatprep.subr.mxu0 0.0
        %3038 = vmatpush2.msra.mxu0 0.0
        %3039 = vmatprep.subr.mxu0 0.0
        %3040 = vmatpush2.msra.mxu0 0.0
        %3041 = vmatprep.subr.mxu0 0.0
        %3042 = vmatpush2.msra.mxu0 0.0
        %3043 = vmatprep.subr.mxu0 0.0
        %3044 = vmatpush2.msra.mxu0 0.0
        %3045 = vmatprep.subr.mxu0 0.0
        %3046 = vmatpush2.msra.mxu0 0.0
        %3047 = vmatprep.subr.mxu0 0.0
        %3048 = vmatpush2.msra.mxu0 0.0
        %3049 = vmatprep.mubr.f32.mxu0 0.0
        %3050 = vmatmul.mubr.f32.gmra.mxu0 %v2983
        %v3051 = vpop.f32.mrf.mxu0
        %v3052 = vadd.f32 0.0, %v3051
        %v3053 = vpop.f32.mrf.mxu0
        %3054 = vdwg.mxu0
        %v3056 = vsel %vm934, %v3052, 0
        %3058 = vmatprep.subr.mxu0 0.0
        %3059 = vmatpush1.msra.mxu0 0.0
        %3060 = vmatprep.subr.mxu0 0.0
        %3061 = vmatpush1.msra.mxu0 0.0
        %3062 = vmatprep.subr.mxu0 0.0
        %3063 = vmatpush1.msra.mxu0 0.0
        %3064 = vmatprep.subr.mxu0 0.0
        %3065 = vmatpush1.msra.mxu0 0.0
        %3066 = vmatprep.subr.mxu0 0.0
        %3067 = vmatpush1.msra.mxu0 0.0
        %3068 = vmatprep.subr.mxu0 0.0
        %3069 = vmatpush1.msra.mxu0 0.0
        %3070 = vmatprep.subr.mxu0 0.0
        %3071 = vmatpush1.msra.mxu0 0.0
        %3072 = vmatprep.subr.mxu0 0.0
        %3073 = vmatpush1.msra.mxu0 0.0
        %3074 = vmatprep.subr.mxu0 0.0
        %3075 = vmatpush1.msra.mxu0 0.0
        %3076 = vmatprep.subr.mxu0 0.0
        %3077 = vmatpush1.msra.mxu0 0.0
        %3078 = vmatprep.subr.mxu0 0.0
        %3079 = vmatpush1.msra.mxu0 0.0
        %3080 = vmatprep.subr.mxu0 0.0
        %3081 = vmatpush1.msra.mxu0 0.0
        %3082 = vmatprep.subr.mxu0 0.0
        %3083 = vmatpush1.msra.mxu0 %v2173
        %3084 = vmatprep.subr.mxu0 0.0
        %3085 = vmatpush1.msra.mxu0 %v2172
        %3086 = vmatprep.subr.mxu0 0.0
        %3087 = vmatpush1.msra.mxu0 %v2171
        %3088 = vmatprep.subr.mxu0 0.0
        %3089 = vmatpush1.msra.mxu0 %v2170
        %3090 = vmatprep.subr.mxu0 0.0
        %3091 = vmatpush2.msra.mxu0 0.0
        %3092 = vmatprep.subr.mxu0 0.0
        %3093 = vmatpush2.msra.mxu0 0.0
        %3094 = vmatprep.subr.mxu0 0.0
        %3095 = vmatpush2.msra.mxu0 0.0
        %3096 = vmatprep.subr.mxu0 0.0
        %3097 = vmatpush2.msra.mxu0 0.0
        %3098 = vmatprep.subr.mxu0 0.0
        %3099 = vmatpush2.msra.mxu0 0.0
        %3100 = vmatprep.subr.mxu0 0.0
        %3101 = vmatpush2.msra.mxu0 0.0
        %3102 = vmatprep.subr.mxu0 0.0
        %3103 = vmatpush2.msra.mxu0 0.0
        %3104 = vmatprep.subr.mxu0 0.0
        %3105 = vmatpush2.msra.mxu0 0.0
        %3106 = vmatprep.subr.mxu0 0.0
        %3107 = vmatpush2.msra.mxu0 0.0
        %3108 = vmatprep.subr.mxu0 0.0
        %3109 = vmatpush2.msra.mxu0 0.0
        %3110 = vmatprep.subr.mxu0 0.0
        %3111 = vmatpush2.msra.mxu0 0.0
        %3112 = vmatprep.subr.mxu0 0.0
        %3113 = vmatpush2.msra.mxu0 0.0
        %3114 = vmatprep.subr.mxu0 0.0
        %3115 = vmatpush2.msra.mxu0 0.0
        %3116 = vmatprep.subr.mxu0 0.0
        %3117 = vmatpush2.msra.mxu0 0.0
        %3118 = vmatprep.subr.mxu0 0.0
        %3119 = vmatpush2.msra.mxu0 0.0
        %3120 = vmatprep.subr.mxu0 0.0
        %3121 = vmatpush2.msra.mxu0 0.0
        %3122 = vmatprep.mubr.f32.mxu0 0.0
        %3123 = vmatmul.mubr.f32.gmra.mxu0 %v3056
        %v3124 = vpop.f32.mrf.mxu0
        %v3125 = vadd.f32 0.0, %v3124
        %v3126 = vpop.f32.mrf.mxu0
        %3127 = vdwg.mxu0
        %v3128 = vadd.f32 %v2886, %v3125
        %3129 = vrot.lane.b32.xlu0 %v2341, 32
        %v3130 = vpop.permute.xlu0 %3129
        %3131 = vrot.lane.b32.xlu0 %v2343, 32
        %v3132 = vpop.permute.xlu0 %3131
        %v3133 = vsel %vm934, %v3130, 0
        %v3135 = vsel %vm934, %v3132, 0
        %3137 = vmatprep.subr.mxu0 0.0
        %3138 = vmatpush1.xpose.msra.mxu0 0.0
        %3139 = vmatprep.subr.mxu0 0.0
        %3140 = vmatpush1.xpose.msra.mxu0 0.0
        %3141 = vmatprep.subr.mxu0 0.0
        %3142 = vmatpush1.xpose.msra.mxu0 0.0
        %3143 = vmatprep.subr.mxu0 0.0
        %3144 = vmatpush1.xpose.msra.mxu0 0.0
        %3145 = vmatprep.subr.mxu0 0.0
        %3146 = vmatpush1.xpose.msra.mxu0 0.0
        %3147 = vmatprep.subr.mxu0 0.0
        %3148 = vmatpush1.xpose.msra.mxu0 0.0
        %3149 = vmatprep.subr.mxu0 0.0
        %3150 = vmatpush1.xpose.msra.mxu0 0.0
        %3151 = vmatprep.subr.mxu0 0.0
        %3152 = vmatpush1.xpose.msra.mxu0 0.0
        %3153 = vmatprep.subr.mxu0 0.0
        %3154 = vmatpush1.xpose.msra.mxu0 0.0
        %3155 = vmatprep.subr.mxu0 0.0
        %3156 = vmatpush1.xpose.msra.mxu0 0.0
        %3157 = vmatprep.subr.mxu0 0.0
        %3158 = vmatpush1.xpose.msra.mxu0 0.0
        %3159 = vmatprep.subr.mxu0 0.0
        %3160 = vmatpush1.xpose.msra.mxu0 0.0
        %3161 = vmatprep.subr.mxu0 0.0
        %3162 = vmatpush1.xpose.msra.mxu0 0.0
        %3163 = vmatprep.subr.mxu0 0.0
        %3164 = vmatpush1.xpose.msra.mxu0 0.0
        %3165 = vmatprep.subr.mxu0 0.0
        %3166 = vmatpush1.xpose.msra.mxu0 0.0
        %3167 = vmatprep.subr.mxu0 0.0
        %3168 = vmatpush1.xpose.msra.mxu0 %v3135
        %3169 = vmatprep.subr.mxu0 0.0
        %3170 = vmatpush2.xpose.msra.mxu0 0.0
        %3171 = vmatprep.subr.mxu0 0.0
        %3172 = vmatpush2.xpose.msra.mxu0 0.0
        %3173 = vmatprep.subr.mxu0 0.0
        %3174 = vmatpush2.xpose.msra.mxu0 0.0
        %3175 = vmatprep.subr.mxu0 0.0
        %3176 = vmatpush2.xpose.msra.mxu0 0.0
        %3177 = vmatprep.subr.mxu0 0.0
        %3178 = vmatpush2.xpose.msra.mxu0 0.0
        %3179 = vmatprep.subr.mxu0 0.0
        %3180 = vmatpush2.xpose.msra.mxu0 0.0
        %3181 = vmatprep.subr.mxu0 0.0
        %3182 = vmatpush2.xpose.msra.mxu0 0.0
        %3183 = vmatprep.subr.mxu0 0.0
        %3184 = vmatpush2.xpose.msra.mxu0 0.0
        %3185 = vmatprep.subr.mxu0 0.0
        %3186 = vmatpush2.xpose.msra.mxu0 0.0
        %3187 = vmatprep.subr.mxu0 0.0
        %3188 = vmatpush2.xpose.msra.mxu0 0.0
        %3189 = vmatprep.subr.mxu0 0.0
        %3190 = vmatpush2.xpose.msra.mxu0 0.0
        %3191 = vmatprep.subr.mxu0 0.0
        %3192 = vmatpush2.xpose.msra.mxu0 0.0
        %3193 = vmatprep.subr.mxu0 0.0
        %3194 = vmatpush2.xpose.msra.mxu0 0.0
        %3195 = vmatprep.subr.mxu0 0.0
        %3196 = vmatpush2.xpose.msra.mxu0 0.0
        %3197 = vmatprep.subr.mxu0 0.0
        %3198 = vmatpush2.xpose.msra.mxu0 0.0
        %3199 = vmatprep.subr.mxu0 0.0
        %3200 = vmatpush2.xpose.msra.mxu0 0.0
        %3201 = vmatprep.mubr.f32.mxu0 0.0
        %3202 = vmatmul.mubr.f32.gmra.mxu0 %v3133
        %v3203 = vpop.f32.mrf.mxu0
        %v3204 = vadd.f32 0.0, %v3203
        %v3205 = vpop.f32.mrf.mxu0
        %3206 = vdwg.mxu0
        %v3207 = vmul.f32 %v3204, 0.17677669
        %v3208 = vsel %vm1012, %v3207, -inf
        %3209 = vmax.xlane.f32.xlu0 %v3208
        %v3210 = vpop.xlane.xlu0 %3209
        %v3211 = vsub.f32 %v3207, %v3210
        %v3212 = vmul.f32 %v3211, 1.442695
        %v3213 = vpow.pop %v3212
        %v3214 = vsel %vm1012, %v3213, 0.0
        %3215 = vadd.xlane.f32.xlu0 %v3214
        %v3216 = vpop.xlane.xlu0 %3215
        %v3217 = vrcp.pop %v3216
        %v3218 = vmul.f32 %v3213, %v3217
        %3219 = vrot.lane.b32.xlu0 %v2412, 32
        %v3220 = vpop.permute.xlu0 %3219
        %v3223 = vsel %vm1012, %v3218, 0
        %3225 = vmatprep.subr.mxu0 0.0
        %3226 = vmatpush1.msra.mxu0 0.0
        %3227 = vmatprep.subr.mxu0 0.0
        %3228 = vmatpush1.msra.mxu0 0.0
        %3229 = vmatprep.subr.mxu0 0.0
        %3230 = vmatpush1.msra.mxu0 0.0
        %3231 = vmatprep.subr.mxu0 0.0
        %3232 = vmatpush1.msra.mxu0 0.0
        %3233 = vmatprep.subr.mxu0 0.0
        %3234 = vmatpush1.msra.mxu0 0.0
        %3235 = vmatprep.subr.mxu0 0.0
        %3236 = vmatpush1.msra.mxu0 0.0
        %3237 = vmatprep.subr.mxu0 0.0
        %3238 = vmatpush1.msra.mxu0 0.0
        %3239 = vmatprep.subr.mxu0 0.0
        %3240 = vmatpush1.msra.mxu0 0.0
        %3241 = vmatprep.subr.mxu0 0.0
        %3242 = vmatpush1.msra.mxu0 0.0
        %3243 = vmatprep.subr.mxu0 0.0
        %3244 = vmatpush1.msra.mxu0 0.0
        %3245 = vmatprep.subr.mxu0 0.0
        %3246 = vmatpush1.msra.mxu0 0.0
        %3247 = vmatprep.subr.mxu0 0.0
        %3248 = vmatpush1.msra.mxu0 0.0
        %3249 = vmatprep.subr.mxu0 0.0
        %3250 = vmatpush1.msra.mxu0 0.0
        %3251 = vmatprep.subr.mxu0 0.0
        %3252 = vmatpush1.msra.mxu0 0.0
        %3253 = vmatprep.subr.mxu0 0.0
        %3254 = vmatpush1.msra.mxu0 0.0
        %3255 = vmatprep.subr.mxu0 0.0
        %3256 = vmatpush1.msra.mxu0 %v3220
        %3257 = vmatprep.subr.mxu0 0.0
        %3258 = vmatpush2.msra.mxu0 0.0
        %3259 = vmatprep.subr.mxu0 0.0
        %3260 = vmatpush2.msra.mxu0 0.0
        %3261 = vmatprep.subr.mxu0 0.0
        %3262 = vmatpush2.msra.mxu0 0.0
        %3263 = vmatprep.subr.mxu0 0.0
        %3264 = vmatpush2.msra.mxu0 0.0
        %3265 = vmatprep.subr.mxu0 0.0
        %3266 = vmatpush2.msra.mxu0 0.0
        %3267 = vmatprep.subr.mxu0 0.0
        %3268 = vmatpush2.msra.mxu0 0.0
        %3269 = vmatprep.subr.mxu0 0.0
        %3270 = vmatpush2.msra.mxu0 0.0
        %3271 = vmatprep.subr.mxu0 0.0
        %3272 = vmatpush2.msra.mxu0 0.0
        %3273 = vmatprep.subr.mxu0 0.0
        %3274 = vmatpush2.msra.mxu0 0.0
        %3275 = vmatprep.subr.mxu0 0.0
        %3276 = vmatpush2.msra.mxu0 0.0
        %3277 = vmatprep.subr.mxu0 0.0
        %3278 = vmatpush2.msra.mxu0 0.0
        %3279 = vmatprep.subr.mxu0 0.0
        %3280 = vmatpush2.msra.mxu0 0.0
        %3281 = vmatprep.subr.mxu0 0.0
        %3282 = vmatpush2.msra.mxu0 0.0
        %3283 = vmatprep.subr.mxu0 0.0
        %3284 = vmatpush2.msra.mxu0 0.0
        %3285 = vmatprep.subr.mxu0 0.0
        %3286 = vmatpush2.msra.mxu0 0.0
        %3287 = vmatprep.subr.mxu0 0.0
        %3288 = vmatpush2.msra.mxu0 0.0
        %3289 = vmatprep.mubr.f32.mxu0 0.0
        %3290 = vmatmul.mubr.f32.gmra.mxu0 %v3223
        %v3291 = vpop.f32.mrf.mxu0
        %v3292 = vadd.f32 0.0, %v3291
        %v3293 = vpop.f32.mrf.mxu0
        %3294 = vdwg.mxu0
        %v3296 = vsel %vm934, %v3292, 0
        %3298 = vmatprep.subr.mxu0 0.0
        %3299 = vmatpush1.msra.mxu0 0.0
        %3300 = vmatprep.subr.mxu0 0.0
        %3301 = vmatpush1.msra.mxu0 0.0
        %3302 = vmatprep.subr.mxu0 0.0
        %3303 = vmatpush1.msra.mxu0 0.0
        %3304 = vmatprep.subr.mxu0 0.0
        %3305 = vmatpush1.msra.mxu0 0.0
        %3306 = vmatprep.subr.mxu0 0.0
        %3307 = vmatpush1.msra.mxu0 0.0
        %3308 = vmatprep.subr.mxu0 0.0
        %3309 = vmatpush1.msra.mxu0 0.0
        %3310 = vmatprep.subr.mxu0 0.0
        %3311 = vmatpush1.msra.mxu0 0.0
        %3312 = vmatprep.subr.mxu0 0.0
        %3313 = vmatpush1.msra.mxu0 0.0
        %3314 = vmatprep.subr.mxu0 0.0
        %3315 = vmatpush1.msra.mxu0 0.0
        %3316 = vmatprep.subr.mxu0 0.0
        %3317 = vmatpush1.msra.mxu0 0.0
        %3318 = vmatprep.subr.mxu0 0.0
        %3319 = vmatpush1.msra.mxu0 0.0
        %3320 = vmatprep.subr.mxu0 0.0
        %3321 = vmatpush1.msra.mxu0 0.0
        %3322 = vmatprep.subr.mxu0 0.0
        %3323 = vmatpush1.msra.mxu0 %v2177
        %3324 = vmatprep.subr.mxu0 0.0
        %3325 = vmatpush1.msra.mxu0 %v2176
        %3326 = vmatprep.subr.mxu0 0.0
        %3327 = vmatpush1.msra.mxu0 %v2175
        %3328 = vmatprep.subr.mxu0 0.0
        %3329 = vmatpush1.msra.mxu0 %v2174
        %3330 = vmatprep.subr.mxu0 0.0
        %3331 = vmatpush2.msra.mxu0 0.0
        %3332 = vmatprep.subr.mxu0 0.0
        %3333 = vmatpush2.msra.mxu0 0.0
        %3334 = vmatprep.subr.mxu0 0.0
        %3335 = vmatpush2.msra.mxu0 0.0
        %3336 = vmatprep.subr.mxu0 0.0
        %3337 = vmatpush2.msra.mxu0 0.0
        %3338 = vmatprep.subr.mxu0 0.0
        %3339 = vmatpush2.msra.mxu0 0.0
        %3340 = vmatprep.subr.mxu0 0.0
        %3341 = vmatpush2.msra.mxu0 0.0
        %3342 = vmatprep.subr.mxu0 0.0
        %3343 = vmatpush2.msra.mxu0 0.0
        %3344 = vmatprep.subr.mxu0 0.0
        %3345 = vmatpush2.msra.mxu0 0.0
        %3346 = vmatprep.subr.mxu0 0.0
        %3347 = vmatpush2.msra.mxu0 0.0
        %3348 = vmatprep.subr.mxu0 0.0
        %3349 = vmatpush2.msra.mxu0 0.0
        %3350 = vmatprep.subr.mxu0 0.0
        %3351 = vmatpush2.msra.mxu0 0.0
        %3352 = vmatprep.subr.mxu0 0.0
        %3353 = vmatpush2.msra.mxu0 0.0
        %3354 = vmatprep.subr.mxu0 0.0
        %3355 = vmatpush2.msra.mxu0 0.0
        %3356 = vmatprep.subr.mxu0 0.0
        %3357 = vmatpush2.msra.mxu0 0.0
        %3358 = vmatprep.subr.mxu0 0.0
        %3359 = vmatpush2.msra.mxu0 0.0
        %3360 = vmatprep.subr.mxu0 0.0
        %3361 = vmatpush2.msra.mxu0 0.0
        %3362 = vmatprep.mubr.f32.mxu0 0.0
        %3363 = vmatmul.mubr.f32.gmra.mxu0 %v3296
        %v3364 = vpop.f32.mrf.mxu0
        %v3365 = vadd.f32 0.0, %v3364
        %v3366 = vpop.f32.mrf.mxu0
        %3367 = vdwg.mxu0
        %v3368 = vadd.f32 %v3128, %v3365
        %v3370 = vlaneseq
        %v3371 = vshrl.u32 %v3370, 7
        %v3372 = vsub.s32 0, %v3371
        %v3373 = vrot.slane %v2179, %v3372
        %v3375 = vadd.f32 %v3368, %v3373
        %v3376 = vadd.f32 %v2109, %v3375
        %3377 = vadd.xlane.f32.xlu0 %v3376
        %v3378 = vpop.xlane.xlu0 %3377
        %v3379 = vmul.f32 %v3378, %v1900
        %v3380 = vsub.f32 %v3376, %v3379
        %v3381 = vmul.f32 %v3380, %v3380
        %3382 = vadd.xlane.f32.xlu0 %v3381
        %v3383 = vpop.xlane.xlu0 %3382
        %v3384 = vmul.f32 %v3383, %v1900
        %v3385 = vadd.f32 %v3384, 1e-05
        %v3386 = vrsqrt.pop %v3385
        %v3387 = vmul.f32 %v3380, %v3386
        %v3389 = vlaneseq
        %v3390 = vshrl.u32 %v3389, 7
        %v3391 = vsub.s32 0, %v3390
        %v3392 = vrot.slane %v2181, %v3391
        %v3394 = vmul.f32 %v3387, %v3392
        %v3396 = vlaneseq
        %v3397 = vshrl.u32 %v3396, 7
        %v3398 = vsub.s32 0, %v3397
        %v3399 = vrot.slane %v2183, %v3398
        %v3401 = vadd.f32 %v3394, %v3399
        %v3403 = vlaneseq
        %v3404 = vshrl.u32 %v3403, 7
        %v3405 = vsub.s32 0, %v3404
        %v3406 = vrot.slane %v2218, %v3405
        %v3407 = vlaneseq
        %v3408 = vshrl.u32 %v3407, 7
        %v3409 = vsub.s32 1, %v3408
        %v3410 = vrot.slane %v2218, %v3409
        %3413 = vmatprep.subr.mxu0 %v2216
        %3414 = vmatpush1.msra.mxu0 %v2215
        %3415 = vmatprep.subr.mxu0 %v2214
        %3416 = vmatpush1.msra.mxu0 %v2213
        %3417 = vmatprep.subr.mxu0 %v2212
        %3418 = vmatpush1.msra.mxu0 %v2211
        %3419 = vmatprep.subr.mxu0 %v2210
        %3420 = vmatpush1.msra.mxu0 %v2209
        %3421 = vmatprep.subr.mxu0 %v2208
        %3422 = vmatpush1.msra.mxu0 %v2207
        %3423 = vmatprep.subr.mxu0 %v2206
        %3424 = vmatpush1.msra.mxu0 %v2205
        %3425 = vmatprep.subr.mxu0 %v2204
        %3426 = vmatpush1.msra.mxu0 %v2203
        %3427 = vmatprep.subr.mxu0 %v2202
        %3428 = vmatpush1.msra.mxu0 %v2201
        %3429 = vmatprep.subr.mxu0 %v2200
        %3430 = vmatpush1.msra.mxu0 %v2199
        %3431 = vmatprep.subr.mxu0 %v2198
        %3432 = vmatpush1.msra.mxu0 %v2197
        %3433 = vmatprep.subr.mxu0 %v2196
        %3434 = vmatpush1.msra.mxu0 %v2195
        %3435 = vmatprep.subr.mxu0 %v2194
        %3436 = vmatpush1.msra.mxu0 %v2193
        %3437 = vmatprep.subr.mxu0 %v2192
        %3438 = vmatpush1.msra.mxu0 %v2191
        %3439 = vmatprep.subr.mxu0 %v2190
        %3440 = vmatpush1.msra.mxu0 %v2189
        %3441 = vmatprep.subr.mxu0 %v2188
        %3442 = vmatpush1.msra.mxu0 %v2187
        %3443 = vmatprep.subr.mxu0 %v2186
        %3444 = vmatpush1.msra.mxu0 %v2185
        %3445 = vmatprep.subr.mxu0 0.0
        %3446 = vmatpush2.msra.mxu0 0.0
        %3447 = vmatprep.subr.mxu0 0.0
        %3448 = vmatpush2.msra.mxu0 0.0
        %3449 = vmatprep.subr.mxu0 0.0
        %3450 = vmatpush2.msra.mxu0 0.0
        %3451 = vmatprep.subr.mxu0 0.0
        %3452 = vmatpush2.msra.mxu0 0.0
        %3453 = vmatprep.subr.mxu0 0.0
        %3454 = vmatpush2.msra.mxu0 0.0
        %3455 = vmatprep.subr.mxu0 0.0
        %3456 = vmatpush2.msra.mxu0 0.0
        %3457 = vmatprep.subr.mxu0 0.0
        %3458 = vmatpush2.msra.mxu0 0.0
        %3459 = vmatprep.subr.mxu0 0.0
        %3460 = vmatpush2.msra.mxu0 0.0
        %3461 = vmatprep.subr.mxu0 0.0
        %3462 = vmatpush2.msra.mxu0 0.0
        %3463 = vmatprep.subr.mxu0 0.0
        %3464 = vmatpush2.msra.mxu0 0.0
        %3465 = vmatprep.subr.mxu0 0.0
        %3466 = vmatpush2.msra.mxu0 0.0
        %3467 = vmatprep.subr.mxu0 0.0
        %3468 = vmatpush2.msra.mxu0 0.0
        %3469 = vmatprep.subr.mxu0 0.0
        %3470 = vmatpush2.msra.mxu0 0.0
        %3471 = vmatprep.subr.mxu0 0.0
        %3472 = vmatpush2.msra.mxu0 0.0
        %3473 = vmatprep.subr.mxu0 0.0
        %3474 = vmatpush2.msra.mxu0 0.0
        %3475 = vmatprep.subr.mxu0 0.0
        %3476 = vmatpush2.msra.mxu0 0.0
        %3477 = vmatprep.mubr.f32.mxu0 0.0
        %3478 = vmatmul.mubr.f32.gmra.mxu0 %v3401
        %v3479 = vpop.f32.mrf.mxu0
        %v3480 = vadd.f32 %v3406, %v3479
        %v3481 = vpop.f32.mrf.mxu0
        %v3482 = vadd.f32 %v3410, %v3481
        %3483 = vdwg.mxu0
        %v3484 = vmax.f32 %v3480, 0.0
        %v3485 = vmax.f32 %v3482, 0.0
        %v3487 = vlaneseq
        %v3488 = vshrl.u32 %v3487, 7
        %v3489 = vsub.s32 0, %v3488
        %v3490 = vrot.slane %v2253, %v3489
        %3492 = vmatprep.subr.mxu0 0.0
        %3493 = vmatpush1.msra.mxu0 %v2235
        %3494 = vmatprep.subr.mxu0 0.0
        %3495 = vmatpush1.msra.mxu0 %v2234
        %3496 = vmatprep.subr.mxu0 0.0
        %3497 = vmatpush1.msra.mxu0 %v2233
        %3498 = vmatprep.subr.mxu0 0.0
        %3499 = vmatpush1.msra.mxu0 %v2232
        %3500 = vmatprep.subr.mxu0 0.0
        %3501 = vmatpush1.msra.mxu0 %v2231
        %3502 = vmatprep.subr.mxu0 0.0
        %3503 = vmatpush1.msra.mxu0 %v2230
        %3504 = vmatprep.subr.mxu0 0.0
        %3505 = vmatpush1.msra.mxu0 %v2229
        %3506 = vmatprep.subr.mxu0 0.0
        %3507 = vmatpush1.msra.mxu0 %v2228
        %3508 = vmatprep.subr.mxu0 0.0
        %3509 = vmatpush1.msra.mxu0 %v2227
        %3510 = vmatprep.subr.mxu0 0.0
        %3511 = vmatpush1.msra.mxu0 %v2226
        %3512 = vmatprep.subr.mxu0 0.0
        %3513 = vmatpush1.msra.mxu0 %v2225
        %3514 = vmatprep.subr.mxu0 0.0
        %3515 = vmatpush1.msra.mxu0 %v2224
        %3516 = vmatprep.subr.mxu0 0.0
        %3517 = vmatpush1.msra.mxu0 %v2223
        %3518 = vmatprep.subr.mxu0 0.0
        %3519 = vmatpush1.msra.mxu0 %v2222
        %3520 = vmatprep.subr.mxu0 0.0
        %3521 = vmatpush1.msra.mxu0 %v2221
        %3522 = vmatprep.subr.mxu0 0.0
        %3523 = vmatpush1.msra.mxu0 %v2220
        %3524 = vmatprep.subr.mxu0 0.0
        %3525 = vmatpush2.msra.mxu0 %v2251
        %3526 = vmatprep.subr.mxu0 0.0
        %3527 = vmatpush2.msra.mxu0 %v2250
        %3528 = vmatprep.subr.mxu0 0.0
        %3529 = vmatpush2.msra.mxu0 %v2249
        %3530 = vmatprep.subr.mxu0 0.0
        %3531 = vmatpush2.msra.mxu0 %v2248
        %3532 = vmatprep.subr.mxu0 0.0
        %3533 = vmatpush2.msra.mxu0 %v2247
        %3534 = vmatprep.subr.mxu0 0.0
        %3535 = vmatpush2.msra.mxu0 %v2246
        %3536 = vmatprep.subr.mxu0 0.0
        %3537 = vmatpush2.msra.mxu0 %v2245
        %3538 = vmatprep.subr.mxu0 0.0
        %3539 = vmatpush2.msra.mxu0 %v2244
        %3540 = vmatprep.subr.mxu0 0.0
        %3541 = vmatpush2.msra.mxu0 %v2243
        %3542 = vmatprep.subr.mxu0 0.0
        %3543 = vmatpush2.msra.mxu0 %v2242
        %3544 = vmatprep.subr.mxu0 0.0
        %3545 = vmatpush2.msra.mxu0 %v2241
        %3546 = vmatprep.subr.mxu0 0.0
        %3547 = vmatpush2.msra.mxu0 %v2240
        %3548 = vmatprep.subr.mxu0 0.0
        %3549 = vmatpush2.msra.mxu0 %v2239
        %3550 = vmatprep.subr.mxu0 0.0
        %3551 = vmatpush2.msra.mxu0 %v2238
        %3552 = vmatprep.subr.mxu0 0.0
        %3553 = vmatpush2.msra.mxu0 %v2237
        %3554 = vmatprep.subr.mxu0 0.0
        %3555 = vmatpush2.msra.mxu0 %v2236
        %3556 = vmatprep.mubr.f32.mxu0 %v3485
        %3557 = vmatmul.mubr.f32.gmra.mxu0 %v3484
        %v3558 = vpop.f32.mrf.mxu0
        %v3559 = vadd.f32 %v3490, %v3558
        %v3560 = vpop.f32.mrf.mxu0
        %3561 = vdwg.mxu0
        %v3562 = vadd.f32 %v3401, %v3559
        %3563 = vadd.xlane.f32.xlu0 %v3562
        %v3564 = vpop.xlane.xlu0 %3563
        %v3565 = vmul.f32 %v3564, %v1900
        %v3566 = vsub.f32 %v3562, %v3565
        %v3567 = vmul.f32 %v3566, %v3566
        %3568 = vadd.xlane.f32.xlu0 %v3567
        %v3569 = vpop.xlane.xlu0 %3568
        %v3570 = vmul.f32 %v3569, %v1900
        %v3571 = vadd.f32 %v3570, 1e-05
        %v3572 = vrsqrt.pop %v3571
        %v3573 = vmul.f32 %v3566, %v3572
        %v3575 = vlaneseq
        %v3576 = vshrl.u32 %v3575, 7
        %v3577 = vsub.s32 0, %v3576
        %v3578 = vrot.slane %v2255, %v3577
        %v3580 = vmul.f32 %v3573, %v3578
        %v3582 = vlaneseq
        %v3583 = vshrl.u32 %v3582, 7
        %v3584 = vsub.s32 0, %v3583
        %v3585 = vrot.slane %v2257, %v3584
        %v3587 = vadd.f32 %v3580, %v3585
        %v3588 = vld [vmem:[#allocation14] sm:$0xff]
        %v3589 = vld [vmem:[#allocation14 + $0x8] sm:$0xff]
        %v3590 = vld [vmem:[#allocation14 + $0x10] sm:$0xff]
        %v3591 = vld [vmem:[#allocation14 + $0x18] sm:$0xff]
        %v3592 = vld [vmem:[#allocation14 + $0x20] sm:$0xff]
        %v3593 = vld [vmem:[#allocation14 + $0x28] sm:$0xff]
        %v3594 = vld [vmem:[#allocation14 + $0x30] sm:$0xff]
        %v3595 = vld [vmem:[#allocation14 + $0x38] sm:$0xff]
        %v3596 = vld [vmem:[#allocation14 + $0x40] sm:$0xff]
        %v3597 = vld [vmem:[#allocation14 + $0x48] sm:$0xff]
        %v3598 = vld [vmem:[#allocation14 + $0x50] sm:$0xff]
        %v3599 = vld [vmem:[#allocation14 + $0x58] sm:$0xff]
        %v3600 = vld [vmem:[#allocation14 + $0x60] sm:$0xff]
        %v3601 = vld [vmem:[#allocation14 + $0x68] sm:$0xff]
        %v3602 = vld [vmem:[#allocation14 + $0x70] sm:$0xff]
        %v3603 = vld [vmem:[#allocation14 + $0x78] sm:$0xff]
        %v3604 = vld [vmem:[%s15] sm:$0x1]
        %v3606 = vlaneseq
        %v3607 = vshrl.u32 %v3606, 7
        %v3608 = vsub.s32 0, %v3607
        %v3609 = vrot.slane %v3604, %v3608
        %3611 = vmatprep.subr.mxu0 0.0
        %3612 = vmatpush1.msra.mxu0 %v3603
        %3613 = vmatprep.subr.mxu0 0.0
        %3614 = vmatpush1.msra.mxu0 %v3602
        %3615 = vmatprep.subr.mxu0 0.0
        %3616 = vmatpush1.msra.mxu0 %v3601
        %3617 = vmatprep.subr.mxu0 0.0
        %3618 = vmatpush1.msra.mxu0 %v3600
        %3619 = vmatprep.subr.mxu0 0.0
        %3620 = vmatpush1.msra.mxu0 %v3599
        %3621 = vmatprep.subr.mxu0 0.0
        %3622 = vmatpush1.msra.mxu0 %v3598
        %3623 = vmatprep.subr.mxu0 0.0
        %3624 = vmatpush1.msra.mxu0 %v3597
        %3625 = vmatprep.subr.mxu0 0.0
        %3626 = vmatpush1.msra.mxu0 %v3596
        %3627 = vmatprep.subr.mxu0 0.0
        %3628 = vmatpush1.msra.mxu0 %v3595
        %3629 = vmatprep.subr.mxu0 0.0
        %3630 = vmatpush1.msra.mxu0 %v3594
        %3631 = vmatprep.subr.mxu0 0.0
        %3632 = vmatpush1.msra.mxu0 %v3593
        %3633 = vmatprep.subr.mxu0 0.0
        %3634 = vmatpush1.msra.mxu0 %v3592
        %3635 = vmatprep.subr.mxu0 0.0
        %3636 = vmatpush1.msra.mxu0 %v3591
        %3637 = vmatprep.subr.mxu0 0.0
        %3638 = vmatpush1.msra.mxu0 %v3590
        %3639 = vmatprep.subr.mxu0 0.0
        %3640 = vmatpush1.msra.mxu0 %v3589
        %3641 = vmatprep.subr.mxu0 0.0
        %3642 = vmatpush1.msra.mxu0 %v3588
        %3643 = vmatprep.subr.mxu0 0.0
        %3644 = vmatpush2.msra.mxu0 0.0
        %3645 = vmatprep.subr.mxu0 0.0
        %3646 = vmatpush2.msra.mxu0 0.0
        %3647 = vmatprep.subr.mxu0 0.0
        %3648 = vmatpush2.msra.mxu0 0.0
        %3649 = vmatprep.subr.mxu0 0.0
        %3650 = vmatpush2.msra.mxu0 0.0
        %3651 = vmatprep.subr.mxu0 0.0
        %3652 = vmatpush2.msra.mxu0 0.0
        %3653 = vmatprep.subr.mxu0 0.0
        %3654 = vmatpush2.msra.mxu0 0.0
        %3655 = vmatprep.subr.mxu0 0.0
        %3656 = vmatpush2.msra.mxu0 0.0
        %3657 = vmatprep.subr.mxu0 0.0
        %3658 = vmatpush2.msra.mxu0 0.0
        %3659 = vmatprep.subr.mxu0 0.0
        %3660 = vmatpush2.msra.mxu0 0.0
        %3661 = vmatprep.subr.mxu0 0.0
        %3662 = vmatpush2.msra.mxu0 0.0
        %3663 = vmatprep.subr.mxu0 0.0
        %3664 = vmatpush2.msra.mxu0 0.0
        %3665 = vmatprep.subr.mxu0 0.0
        %3666 = vmatpush2.msra.mxu0 0.0
        %3667 = vmatprep.subr.mxu0 0.0
        %3668 = vmatpush2.msra.mxu0 0.0
        %3669 = vmatprep.subr.mxu0 0.0
        %3670 = vmatpush2.msra.mxu0 0.0
        %3671 = vmatprep.subr.mxu0 0.0
        %3672 = vmatpush2.msra.mxu0 0.0
        %3673 = vmatprep.subr.mxu0 0.0
        %3674 = vmatpush2.msra.mxu0 0.0
        %3675 = vmatprep.mubr.f32.mxu0 0.0
        %3676 = vmatmul.mubr.f32.gmra.mxu0 %v3587
        %v3677 = vpop.f32.mrf.mxu0
        %v3678 = vadd.f32 %v3609, %v3677
        %v3679 = vpop.f32.mrf.mxu0
        %3680 = vdwg.mxu0
        %3681 = vst [vmem:[%s636] sm:$0xff] %v3678
        %s3682 = sand.u32 %s386, 1
        %s3683 = scalar_lea.sflag [#allocation4], %s3682
        %s3684 = sand.u32 %s386, 1
        %s3685 = smul.addr %s3684, 8
        %s3686 = scalar_lea.vmem [#allocation16], %s3685
        // Predicated region
        $region117: #{tpu_custom_call.1} parent=83 // pred_check
          %p3687 = pneg %p396
        $region118: #{tpu_custom_call.1} parent=83 // pred_check_branch
          %3689 = sbr.rel (%p3687) target = $region120
        $region119: #{tpu_custom_call.1} parent=83 // pred_region
          %s3691 = ssub.s32 128, 128
          %3692 = vsyncadd %s3683, %s3691
          %s3693 = smul.addr %s37, 128
          %s3694 = scalar_lea.hbm %s16, %s3693
          %s3696 = sshll.u32 %s3686, 4
          %s3697 = int_to_ptr.vmem [resolvable:$true] %s3696
          %3699 = dma.vmem_to_hbm [thread:$0]  %s3697, 128, %s3694, %s3683
        $region120: #{tpu_custom_call.1} parent=83 // pred_fallthru
          _
      $region84: #{tpu_custom_call.1} parent=5 // pred_fallthru
        _
      %p3700 = scmp.le.s32.totalorder 2, %s32
      // Predicated region
      $region121: #{tpu_custom_call.1} parent=5 // pred_check
        %p3701 = pneg %p3700
      $region122: #{tpu_custom_call.1} parent=5 // pred_check_branch
        %3703 = sbr.rel (%p3701) target = $region124
      $region123: #{tpu_custom_call.1} parent=5 // pred_region
        %s3704 = ssub.s32 %s32, 2
        // Predicated region
        $region125: #{tpu_custom_call.1} parent=123 // pred_check
          %p3705 = pneg %p402
        $region126: #{tpu_custom_call.1} parent=123 // pred_check_branch
          %3707 = sbr.rel (%p3705) target = $region128
        $region127: #{tpu_custom_call.1} parent=123 // pred_region
          %s3708 = sand.u32 %s387, 1
          %s3709 = scalar_lea.sflag [#allocation4], %s3708
          %s3710 = sand.u32 %s387, 1
          %s3711 = smul.addr %s3710, 8
          %s3712 = scalar_lea.vmem [#allocation16], %s3711
          %3713 = dma.done %s3709, 128
        $region128: #{tpu_custom_call.1} parent=123 // pred_fallthru
          _
      $region124: #{tpu_custom_call.1} parent=5 // pred_fallthru
        _
    $region6: #{tpu_custom_call.1} parent=1 // loop_footer
      %s36 = sadd.s32 1, %s32
    $region7: #{tpu_custom_call.1} parent=1 // loop_footer_branch
      %31 = sbr.rel target = $region3
    $region8: #{tpu_custom_call.1} parent=1 // loop_exit
      _
    %3714 = vsyncpa [#allocation3], 1
    %s3715 = scalar_lea.sflag [#allocation3], 1
    %3716 = vsyncpa %s3715, 1
    %3717 = vsyncpa [#allocation6], 1
    %3718 = vsyncpa [#allocation9], 1
    %3719 = vsyncpa [#allocation12], 1
    %3720 = vsyncpa [#allocation15], 1
    %3721 = vsyncpa [#allocation4], 1
    %s3722 = scalar_lea.sflag [#allocation4], 1
    %3723 = vsyncpa %s3722, 1

</llo_original>
